<compile_context>
chip_gen: v7x
topology: tpu7x:2x2x1
jax: 0.10.0
libtpu: 0.0.40
codegen_flags: <defaults>
</compile_context>

<pallas_src>
import math

import jax
import jax.numpy as jnp
from jax import lax
from jax.experimental import pallas as pl
from jax.experimental.pallas import tpu as pltpu

INPUT_SIZE = 7        # ModelConfig.INPUT_SIZE
HIDDEN = 128          # ModelConfig.HIDDEN_SIZE (module default; lane-aligned)
NUM_LAYERS = 3        # ModelConfig.NUM_LAYERS
SEQ = 8               # scaled-down sequence length (module default 60)
BATCH = 4
FC1 = HIDDEN // 2     # fc1 output
FC2 = 32              # fc2 output
SUBLANE = 8


def lstm_head_kernel(x_ref, w_ref, b_ref,
                     fc1w_ref, fc1b_ref, fc2w_ref, fc2b_ref,
                     decw_ref, decb_ref, out_ref):
    """Entire forward pass in one invocation:
    3-layer LSTM over all T timesteps (state carried in vregs) + FC head."""
    T, Bp, H = x_ref.shape          # static
    L = w_ref.shape[0]

    def step(t, carry):
        hs, cs = list(carry[0]), list(carry[1])
        inp = x_ref[t]                                    # (Bp, H)
        for l in range(L):                                # static unroll, L=3
            # Fused [x ; h] @ [W_ih^T ; W_hh^T]  (both operands lane-aligned).
            xh = jnp.concatenate([inp, hs[l]], axis=-1)   # (Bp, 2H)
            gates = (jnp.dot(xh, w_ref[l],
                             preferred_element_type=jnp.float32)
                     + b_ref[l])                          # (Bp, 4H); order i,f,g,o
            i = jax.nn.sigmoid(gates[:, 0:H])
            f = jax.nn.sigmoid(gates[:, H:2 * H])
            g = jnp.tanh(gates[:, 2 * H:3 * H])
            o = jax.nn.sigmoid(gates[:, 3 * H:4 * H])
            c_new = f * cs[l] + i * g
            h_new = o * jnp.tanh(c_new)
            hs[l], cs[l] = h_new, c_new
            inp = h_new
        return tuple(hs), tuple(cs)

    zeros = jnp.zeros((Bp, H), jnp.float32)
    carry0 = (tuple(zeros for _ in range(L)), tuple(zeros for _ in range(L)))
    hs, _ = lax.fori_loop(0, T, step, carry0, unroll=True)

    last = hs[L - 1]                                      # lstm_out[:, -1, :]
    y1 = jnp.maximum(
        jnp.dot(last, fc1w_ref[...], preferred_element_type=jnp.float32)
        + fc1b_ref[...], 0.0)                             # dropout1: identity (eval)
    y2 = jnp.maximum(
        jnp.dot(y1, fc2w_ref[...], preferred_element_type=jnp.float32)
        + fc2b_ref[...], 0.0)                             # dropout2: identity (eval)
    dec = jnp.tanh(
        jnp.dot(y2, decw_ref[...], preferred_element_type=jnp.float32)
        + decb_ref[...])                                  # (Bp, 1)
    out_ref[...] = dec


def improved_lstm_forward(x, params):
    """x: (batch, seq, input_size) float32 -> (batch,) float32."""
    B, T, IN = x.shape
    H = HIDDEN
    L = NUM_LAYERS
    Bp = ((B + SUBLANE - 1) // SUBLANE) * SUBLANE

    # Time-major; zero-pad features IN->H and batch B->Bp so every recurrent
    # tile is a dense (8, 128) vreg (padded rows/lanes are discarded at the end).
    x_tm = jnp.transpose(x, (1, 0, 2))                               # (T, B, IN)
    x_tm = jnp.pad(x_tm, ((0, 0), (0, Bp - B), (0, H - IN)))         # (T, Bp, H)

    # Fused per-layer weight: rows [0:H) act on the (padded) layer input,
    # rows [H:2H) act on h_prev.  Layer-0 W_ih is zero-padded along its input dim.
    w_cat = []
    for l in range(L):
        w_ih = params['w_ih'][l]                                     # (4H, in_l)
        if w_ih.shape[1] < H:
            w_ih = jnp.pad(w_ih, ((0, 0), (0, H - w_ih.shape[1])))   # (4H, H)
        w_cat.append(jnp.concatenate([w_ih, params['w_hh'][l]], axis=1).T)
    w_cat = jnp.stack(w_cat)                                         # (L, 2H, 4H)
    b = jnp.stack([(params['b_ih'][l] + params['b_hh'][l])[None, :]
                   for l in range(L)])                               # (L, 1, 4H)

    fc1w_t = params['fc1_w'].T                                       # (H, FC1)
    fc1b = params['fc1_b'][None, :]                                  # (1, FC1)
    fc2w_t = params['fc2_w'].T                                       # (FC1, FC2)
    fc2b = params['fc2_b'][None, :]                                  # (1, FC2)
    decw_t = params['dec_w'].T                                       # (FC2, 1)
    decb = params['dec_b'][None, :]                                  # (1, 1)

    vmem_spec = pl.BlockSpec(memory_space=pltpu.MemorySpace.VMEM)
    out = pl.pallas_call(
        lstm_head_kernel,
        out_shape=jax.ShapeDtypeStruct((Bp, 1), jnp.float32),
        in_specs=[vmem_spec] * 9,
        out_specs=vmem_spec,
    )(x_tm, w_cat, b, fc1w_t, fc1b, fc2w_t, fc2b, decw_t, decb)

    return out[:B, 0]   # drop batch padding; .squeeze() -> (batch,)


def ref_forward(x, params):
    """Pure-JAX reference mirroring torch.nn.LSTM + FC head (eval mode)."""
    B, T, _ = x.shape
    H = HIDDEN
    inp_seq = x
    for l in range(NUM_LAYERS):
        w_ih = params['w_ih'][l]
        w_hh = params['w_hh'][l]
        bias = params['b_ih'][l] + params['b_hh'][l]
        h = jnp.zeros((B, H), jnp.float32)
        c = jnp.zeros((B, H), jnp.float32)
        outs = []
        for t in range(T):
            xt = inp_seq[:, t, :]
            gates = xt @ w_ih.T + h @ w_hh.T + bias
            i = jax.nn.sigmoid(gates[:, :H])
            f = jax.nn.sigmoid(gates[:, H:2 * H])
            g = jnp.tanh(gates[:, 2 * H:3 * H])
            o = jax.nn.sigmoid(gates[:, 3 * H:])
            c = f * c + i * g
            h = o * jnp.tanh(c)
            outs.append(h)
        inp_seq = jnp.stack(outs, axis=1)
    last = inp_seq[:, -1, :]
    y1 = jax.nn.relu(last @ params['fc1_w'].T + params['fc1_b'])
    y2 = jax.nn.relu(y1 @ params['fc2_w'].T + params['fc2_b'])
    dec = jnp.tanh(y2 @ params['dec_w'].T + params['dec_b'])
    return dec[:, 0]


def init_params(key):
    """Deterministic init with PyTorch-style uniform(-1/sqrt(H), 1/sqrt(H))."""
    H = HIDDEN
    bound = 1.0 / math.sqrt(H)
    keys = iter(jax.random.split(key, 4 * NUM_LAYERS + 6))

    def u(shape, b):
        return jax.random.uniform(next(keys), shape, jnp.float32, -b, b)

    params = {'w_ih': [], 'w_hh': [], 'b_ih': [], 'b_hh': []}
    for l in range(NUM_LAYERS):
        in_l = INPUT_SIZE if l == 0 else H
        params['w_ih'].append(u((4 * H, in_l), bound))
        params['w_hh'].append(u((4 * H, H), bound))
        params['b_ih'].append(u((4 * H,), bound))
        params['b_hh'].append(u((4 * H,), bound))

    params['fc1_w'] = u((FC1, H), 1.0 / math.sqrt(H))
    params['fc1_b'] = u((FC1,), 1.0 / math.sqrt(H))
    params['fc2_w'] = u((FC2, FC1), 1.0 / math.sqrt(FC1))
    params['fc2_b'] = u((FC2,), 1.0 / math.sqrt(FC1))
    params['dec_w'] = u((1, FC2), 1.0 / math.sqrt(FC2))
    params['dec_b'] = u((1,), 1.0 / math.sqrt(FC2))
    return params


if __name__ == "__main__":
    key = jax.random.PRNGKey(0)
    k_x, k_p = jax.random.split(key)
    x = jax.random.normal(k_x, (BATCH, SEQ, INPUT_SIZE), jnp.float32)
    params = init_params(k_p)

    out = improved_lstm_forward(x, params)
    out = jax.block_until_ready(out)

    with jax.default_matmul_precision('highest'):
        ref = jax.block_until_ready(ref_forward(x, params))

    assert out.shape == (BATCH,), out.shape
    assert jnp.allclose(out, ref, atol=1e-4, rtol=1e-4), (out, ref)

    print("KERNEL_OK")
</pallas_src>

<mosaic_0001>
module attributes {stable_mosaic.version = 11 : i64} {
  func.func @lstm_head_kernel(%arg0: memref<8x8x128xf32, #tpu.memory_space<vmem>>, %arg1: memref<3x256x512xf32, #tpu.memory_space<vmem>>, %arg2: memref<3x1x512xf32, #tpu.memory_space<vmem>>, %arg3: memref<128x64xf32, #tpu.memory_space<vmem>>, %arg4: memref<1x64xf32, #tpu.memory_space<vmem>>, %arg5: memref<64x32xf32, #tpu.memory_space<vmem>>, %arg6: memref<1x32xf32, #tpu.memory_space<vmem>>, %arg7: memref<32x1xf32, #tpu.memory_space<vmem>>, %arg8: memref<1x1xf32, #tpu.memory_space<vmem>>, %arg9: memref<8x1xf32, #tpu.memory_space<vmem>>) attributes {dimension_semantics = [], scalar_prefetch = 0 : i64, scratch_operands = 0 : i64, tpu.core_type = #tpu.core_type<tc>} {
    %cst = arith.constant 0.000000e+00 : f32
    %0 = vector.broadcast %cst : f32 to vector<8x128xf32>
    %c0_i32 = arith.constant 0 : i32
    %1 = arith.index_cast %c0_i32 : i32 to index
    %c0 = arith.constant 0 : index
    %c0_0 = arith.constant 0 : index
    %2 = vector.load %arg0[%1, %c0, %c0_0] : memref<8x8x128xf32, #tpu.memory_space<vmem>>, vector<1x8x128xf32>
    %3 = vector.shape_cast %2 : vector<1x8x128xf32> to vector<8x128xf32>
    %4 = tpu.concatenate %3, %0 in 1 : vector<8x128xf32>, vector<8x128xf32> -> vector<8x256xf32>
    %c0_1 = arith.constant 0 : index
    %c0_2 = arith.constant 0 : index
    %c0_3 = arith.constant 0 : index
    %5 = vector.load %arg1[%c0_1, %c0_2, %c0_3] : memref<3x256x512xf32, #tpu.memory_space<vmem>>, vector<1x256x512xf32>
    %6 = vector.shape_cast %5 : vector<1x256x512xf32> to vector<256x512xf32>
    %cst_4 = arith.constant dense<0.000000e+00> : vector<8x512xf32>
    %7 = tpu.matmul %4, %6, %cst_4 {dimension_numbers = #tpu.dot_dimension_numbers<[1], [0], [0], [1], [0, 0, 1, 1], [], []>} : vector<8x256xf32>, vector<256x512xf32>, vector<8x512xf32> -> vector<8x512xf32>
    %c0_5 = arith.constant 0 : index
    %c0_6 = arith.constant 0 : index
    %c0_7 = arith.constant 0 : index
    %8 = vector.load %arg2[%c0_5, %c0_6, %c0_7] : memref<3x1x512xf32, #tpu.memory_space<vmem>>, vector<1x1x512xf32>
    %9 = vector.shape_cast %8 : vector<1x1x512xf32> to vector<1x512xf32>
    %10 = vector.broadcast %9 : vector<1x512xf32> to vector<8x512xf32>
    %11 = arith.addf %7, %10 : vector<8x512xf32>
    %12 = vector.extract_strided_slice %11 {offsets = [0, 0], sizes = [8, 128], strides = [1, 1]} : vector<8x512xf32> to vector<8x128xf32>
    %13 = arith.negf %12 : vector<8x128xf32>
    %14 = math.exp %13 : vector<8x128xf32>
    %cst_8 = arith.constant 1.000000e+00 : f32
    %15 = vector.broadcast %cst_8 : f32 to vector<8x128xf32>
    %16 = arith.addf %15, %14 : vector<8x128xf32>
    %17 = arith.divf %15, %16 : vector<8x128xf32>
    %18 = vector.extract_strided_slice %11 {offsets = [0, 128], sizes = [8, 128], strides = [1, 1]} : vector<8x512xf32> to vector<8x128xf32>
    %19 = arith.negf %18 : vector<8x128xf32>
    %20 = math.exp %19 : vector<8x128xf32>
    %cst_9 = arith.constant 1.000000e+00 : f32
    %21 = vector.broadcast %cst_9 : f32 to vector<8x128xf32>
    %22 = arith.addf %21, %20 : vector<8x128xf32>
    %23 = arith.divf %21, %22 : vector<8x128xf32>
    %24 = vector.extract_strided_slice %11 {offsets = [0, 256], sizes = [8, 128], strides = [1, 1]} : vector<8x512xf32> to vector<8x128xf32>
    %25 = math.tanh %24 : vector<8x128xf32>
    %26 = vector.extract_strided_slice %11 {offsets = [0, 384], sizes = [8, 128], strides = [1, 1]} : vector<8x512xf32> to vector<8x128xf32>
    %27 = arith.negf %26 : vector<8x128xf32>
    %28 = math.exp %27 : vector<8x128xf32>
    %cst_10 = arith.constant 1.000000e+00 : f32
    %29 = vector.broadcast %cst_10 : f32 to vector<8x128xf32>
    %30 = arith.addf %29, %28 : vector<8x128xf32>
    %31 = arith.divf %29, %30 : vector<8x128xf32>
    %32 = arith.mulf %23, %0 : vector<8x128xf32>
    %33 = arith.mulf %17, %25 : vector<8x128xf32>
    %34 = arith.addf %32, %33 : vector<8x128xf32>
    %35 = math.tanh %34 : vector<8x128xf32>
    %36 = arith.mulf %31, %35 : vector<8x128xf32>
    %37 = tpu.concatenate %36, %0 in 1 : vector<8x128xf32>, vector<8x128xf32> -> vector<8x256xf32>
    %c1 = arith.constant 1 : index
    %c0_11 = arith.constant 0 : index
    %c0_12 = arith.constant 0 : index
    %38 = vector.load %arg1[%c1, %c0_11, %c0_12] : memref<3x256x512xf32, #tpu.memory_space<vmem>>, vector<1x256x512xf32>
    %39 = vector.shape_cast %38 : vector<1x256x512xf32> to vector<256x512xf32>
    %cst_13 = arith.constant dense<0.000000e+00> : vector<8x512xf32>
    %40 = tpu.matmul %37, %39, %cst_13 {dimension_numbers = #tpu.dot_dimension_numbers<[1], [0], [0], [1], [0, 0, 1, 1], [], []>} : vector<8x256xf32>, vector<256x512xf32>, vector<8x512xf32> -> vector<8x512xf32>
    %c1_14 = arith.constant 1 : index
    %c0_15 = arith.constant 0 : index
    %c0_16 = arith.constant 0 : index
    %41 = vector.load %arg2[%c1_14, %c0_15, %c0_16] : memref<3x1x512xf32, #tpu.memory_space<vmem>>, vector<1x1x512xf32>
    %42 = vector.shape_cast %41 : vector<1x1x512xf32> to vector<1x512xf32>
    %43 = vector.broadcast %42 : vector<1x512xf32> to vector<8x512xf32>
    %44 = arith.addf %40, %43 : vector<8x512xf32>
    %45 = vector.extract_strided_slice %44 {offsets = [0, 0], sizes = [8, 128], strides = [1, 1]} : vector<8x512xf32> to vector<8x128xf32>
    %46 = arith.negf %45 : vector<8x128xf32>
    %47 = math.exp %46 : vector<8x128xf32>
    %cst_17 = arith.constant 1.000000e+00 : f32
    %48 = vector.broadcast %cst_17 : f32 to vector<8x128xf32>
    %49 = arith.addf %48, %47 : vector<8x128xf32>
    %50 = arith.divf %48, %49 : vector<8x128xf32>
    %51 = vector.extract_strided_slice %44 {offsets = [0, 128], sizes = [8, 128], strides = [1, 1]} : vector<8x512xf32> to vector<8x128xf32>
    %52 = arith.negf %51 : vector<8x128xf32>
    %53 = math.exp %52 : vector<8x128xf32>
    %cst_18 = arith.constant 1.000000e+00 : f32
    %54 = vector.broadcast %cst_18 : f32 to vector<8x128xf32>
    %55 = arith.addf %54, %53 : vector<8x128xf32>
    %56 = arith.divf %54, %55 : vector<8x128xf32>
    %57 = vector.extract_strided_slice %44 {offsets = [0, 256], sizes = [8, 128], strides = [1, 1]} : vector<8x512xf32> to vector<8x128xf32>
    %58 = math.tanh %57 : vector<8x128xf32>
    %59 = vector.extract_strided_slice %44 {offsets = [0, 384], sizes = [8, 128], strides = [1, 1]} : vector<8x512xf32> to vector<8x128xf32>
    %60 = arith.negf %59 : vector<8x128xf32>
    %61 = math.exp %60 : vector<8x128xf32>
    %cst_19 = arith.constant 1.000000e+00 : f32
    %62 = vector.broadcast %cst_19 : f32 to vector<8x128xf32>
    %63 = arith.addf %62, %61 : vector<8x128xf32>
    %64 = arith.divf %62, %63 : vector<8x128xf32>
    %65 = arith.mulf %56, %0 : vector<8x128xf32>
    %66 = arith.mulf %50, %58 : vector<8x128xf32>
    %67 = arith.addf %65, %66 : vector<8x128xf32>
    %68 = math.tanh %67 : vector<8x128xf32>
    %69 = arith.mulf %64, %68 : vector<8x128xf32>
    %70 = tpu.concatenate %69, %0 in 1 : vector<8x128xf32>, vector<8x128xf32> -> vector<8x256xf32>
    %c2 = arith.constant 2 : index
    %c0_20 = arith.constant 0 : index
    %c0_21 = arith.constant 0 : index
    %71 = vector.load %arg1[%c2, %c0_20, %c0_21] : memref<3x256x512xf32, #tpu.memory_space<vmem>>, vector<1x256x512xf32>
    %72 = vector.shape_cast %71 : vector<1x256x512xf32> to vector<256x512xf32>
    %cst_22 = arith.constant dense<0.000000e+00> : vector<8x512xf32>
    %73 = tpu.matmul %70, %72, %cst_22 {dimension_numbers = #tpu.dot_dimension_numbers<[1], [0], [0], [1], [0, 0, 1, 1], [], []>} : vector<8x256xf32>, vector<256x512xf32>, vector<8x512xf32> -> vector<8x512xf32>
    %c2_23 = arith.constant 2 : index
    %c0_24 = arith.constant 0 : index
    %c0_25 = arith.constant 0 : index
    %74 = vector.load %arg2[%c2_23, %c0_24, %c0_25] : memref<3x1x512xf32, #tpu.memory_space<vmem>>, vector<1x1x512xf32>
    %75 = vector.shape_cast %74 : vector<1x1x512xf32> to vector<1x512xf32>
    %76 = vector.broadcast %75 : vector<1x512xf32> to vector<8x512xf32>
    %77 = arith.addf %73, %76 : vector<8x512xf32>
    %78 = vector.extract_strided_slice %77 {offsets = [0, 0], sizes = [8, 128], strides = [1, 1]} : vector<8x512xf32> to vector<8x128xf32>
    %79 = arith.negf %78 : vector<8x128xf32>
    %80 = math.exp %79 : vector<8x128xf32>
    %cst_26 = arith.constant 1.000000e+00 : f32
    %81 = vector.broadcast %cst_26 : f32 to vector<8x128xf32>
    %82 = arith.addf %81, %80 : vector<8x128xf32>
    %83 = arith.divf %81, %82 : vector<8x128xf32>
    %84 = vector.extract_strided_slice %77 {offsets = [0, 128], sizes = [8, 128], strides = [1, 1]} : vector<8x512xf32> to vector<8x128xf32>
    %85 = arith.negf %84 : vector<8x128xf32>
    %86 = math.exp %85 : vector<8x128xf32>
    %cst_27 = arith.constant 1.000000e+00 : f32
    %87 = vector.broadcast %cst_27 : f32 to vector<8x128xf32>
    %88 = arith.addf %87, %86 : vector<8x128xf32>
    %89 = arith.divf %87, %88 : vector<8x128xf32>
    %90 = vector.extract_strided_slice %77 {offsets = [0, 256], sizes = [8, 128], strides = [1, 1]} : vector<8x512xf32> to vector<8x128xf32>
    %91 = math.tanh %90 : vector<8x128xf32>
    %92 = vector.extract_strided_slice %77 {offsets = [0, 384], sizes = [8, 128], strides = [1, 1]} : vector<8x512xf32> to vector<8x128xf32>
    %93 = arith.negf %92 : vector<8x128xf32>
    %94 = math.exp %93 : vector<8x128xf32>
    %cst_28 = arith.constant 1.000000e+00 : f32
    %95 = vector.broadcast %cst_28 : f32 to vector<8x128xf32>
    %96 = arith.addf %95, %94 : vector<8x128xf32>
    %97 = arith.divf %95, %96 : vector<8x128xf32>
    %98 = arith.mulf %89, %0 : vector<8x128xf32>
    %99 = arith.mulf %83, %91 : vector<8x128xf32>
    %100 = arith.addf %98, %99 : vector<8x128xf32>
    %101 = math.tanh %100 : vector<8x128xf32>
    %102 = arith.mulf %97, %101 : vector<8x128xf32>
    %c1_i32 = arith.constant 1 : i32
    %103 = arith.index_cast %c1_i32 : i32 to index
    %c0_29 = arith.constant 0 : index
    %c0_30 = arith.constant 0 : index
    %104 = vector.load %arg0[%103, %c0_29, %c0_30] : memref<8x8x128xf32, #tpu.memory_space<vmem>>, vector<1x8x128xf32>
    %105 = vector.shape_cast %104 : vector<1x8x128xf32> to vector<8x128xf32>
    %106 = tpu.concatenate %105, %36 in 1 : vector<8x128xf32>, vector<8x128xf32> -> vector<8x256xf32>
    %c0_31 = arith.constant 0 : index
    %c0_32 = arith.constant 0 : index
    %c0_33 = arith.constant 0 : index
    %107 = vector.load %arg1[%c0_31, %c0_32, %c0_33] : memref<3x256x512xf32, #tpu.memory_space<vmem>>, vector<1x256x512xf32>
    %108 = vector.shape_cast %107 : vector<1x256x512xf32> to vector<256x512xf32>
    %cst_34 = arith.constant dense<0.000000e+00> : vector<8x512xf32>
    %109 = tpu.matmul %106, %108, %cst_34 {dimension_numbers = #tpu.dot_dimension_numbers<[1], [0], [0], [1], [0, 0, 1, 1], [], []>} : vector<8x256xf32>, vector<256x512xf32>, vector<8x512xf32> -> vector<8x512xf32>
    %c0_35 = arith.constant 0 : index
    %c0_36 = arith.constant 0 : index
    %c0_37 = arith.constant 0 : index
    %110 = vector.load %arg2[%c0_35, %c0_36, %c0_37] : memref<3x1x512xf32, #tpu.memory_space<vmem>>, vector<1x1x512xf32>
    %111 = vector.shape_cast %110 : vector<1x1x512xf32> to vector<1x512xf32>
    %112 = vector.broadcast %111 : vector<1x512xf32> to vector<8x512xf32>
    %113 = arith.addf %109, %112 : vector<8x512xf32>
    %114 = vector.extract_strided_slice %113 {offsets = [0, 0], sizes = [8, 128], strides = [1, 1]} : vector<8x512xf32> to vector<8x128xf32>
    %115 = arith.negf %114 : vector<8x128xf32>
    %116 = math.exp %115 : vector<8x128xf32>
    %cst_38 = arith.constant 1.000000e+00 : f32
    %117 = vector.broadcast %cst_38 : f32 to vector<8x128xf32>
    %118 = arith.addf %117, %116 : vector<8x128xf32>
    %119 = arith.divf %117, %118 : vector<8x128xf32>
    %120 = vector.extract_strided_slice %113 {offsets = [0, 128], sizes = [8, 128], strides = [1, 1]} : vector<8x512xf32> to vector<8x128xf32>
    %121 = arith.negf %120 : vector<8x128xf32>
    %122 = math.exp %121 : vector<8x128xf32>
    %cst_39 = arith.constant 1.000000e+00 : f32
    %123 = vector.broadcast %cst_39 : f32 to vector<8x128xf32>
    %124 = arith.addf %123, %122 : vector<8x128xf32>
    %125 = arith.divf %123, %124 : vector<8x128xf32>
    %126 = vector.extract_strided_slice %113 {offsets = [0, 256], sizes = [8, 128], strides = [1, 1]} : vector<8x512xf32> to vector<8x128xf32>
    %127 = math.tanh %126 : vector<8x128xf32>
    %128 = vector.extract_strided_slice %113 {offsets = [0, 384], sizes = [8, 128], strides = [1, 1]} : vector<8x512xf32> to vector<8x128xf32>
    %129 = arith.negf %128 : vector<8x128xf32>
    %130 = math.exp %129 : vector<8x128xf32>
    %cst_40 = arith.constant 1.000000e+00 : f32
    %131 = vector.broadcast %cst_40 : f32 to vector<8x128xf32>
    %132 = arith.addf %131, %130 : vector<8x128xf32>
    %133 = arith.divf %131, %132 : vector<8x128xf32>
    %134 = arith.mulf %125, %34 : vector<8x128xf32>
    %135 = arith.mulf %119, %127 : vector<8x128xf32>
    %136 = arith.addf %134, %135 : vector<8x128xf32>
    %137 = math.tanh %136 : vector<8x128xf32>
    %138 = arith.mulf %133, %137 : vector<8x128xf32>
    %139 = tpu.concatenate %138, %69 in 1 : vector<8x128xf32>, vector<8x128xf32> -> vector<8x256xf32>
    %c1_41 = arith.constant 1 : index
    %c0_42 = arith.constant 0 : index
    %c0_43 = arith.constant 0 : index
    %140 = vector.load %arg1[%c1_41, %c0_42, %c0_43] : memref<3x256x512xf32, #tpu.memory_space<vmem>>, vector<1x256x512xf32>
    %141 = vector.shape_cast %140 : vector<1x256x512xf32> to vector<256x512xf32>
    %cst_44 = arith.constant dense<0.000000e+00> : vector<8x512xf32>
    %142 = tpu.matmul %139, %141, %cst_44 {dimension_numbers = #tpu.dot_dimension_numbers<[1], [0], [0], [1], [0, 0, 1, 1], [], []>} : vector<8x256xf32>, vector<256x512xf32>, vector<8x512xf32> -> vector<8x512xf32>
    %c1_45 = arith.constant 1 : index
    %c0_46 = arith.constant 0 : index
    %c0_47 = arith.constant 0 : index
    %143 = vector.load %arg2[%c1_45, %c0_46, %c0_47] : memref<3x1x512xf32, #tpu.memory_space<vmem>>, vector<1x1x512xf32>
    %144 = vector.shape_cast %143 : vector<1x1x512xf32> to vector<1x512xf32>
    %145 = vector.broadcast %144 : vector<1x512xf32> to vector<8x512xf32>
    %146 = arith.addf %142, %145 : vector<8x512xf32>
    %147 = vector.extract_strided_slice %146 {offsets = [0, 0], sizes = [8, 128], strides = [1, 1]} : vector<8x512xf32> to vector<8x128xf32>
    %148 = arith.negf %147 : vector<8x128xf32>
    %149 = math.exp %148 : vector<8x128xf32>
    %cst_48 = arith.constant 1.000000e+00 : f32
    %150 = vector.broadcast %cst_48 : f32 to vector<8x128xf32>
    %151 = arith.addf %150, %149 : vector<8x128xf32>
    %152 = arith.divf %150, %151 : vector<8x128xf32>
    %153 = vector.extract_strided_slice %146 {offsets = [0, 128], sizes = [8, 128], strides = [1, 1]} : vector<8x512xf32> to vector<8x128xf32>
    %154 = arith.negf %153 : vector<8x128xf32>
    %155 = math.exp %154 : vector<8x128xf32>
    %cst_49 = arith.constant 1.000000e+00 : f32
    %156 = vector.broadcast %cst_49 : f32 to vector<8x128xf32>
    %157 = arith.addf %156, %155 : vector<8x128xf32>
    %158 = arith.divf %156, %157 : vector<8x128xf32>
    %159 = vector.extract_strided_slice %146 {offsets = [0, 256], sizes = [8, 128], strides = [1, 1]} : vector<8x512xf32> to vector<8x128xf32>
    %160 = math.tanh %159 : vector<8x128xf32>
    %161 = vector.extract_strided_slice %146 {offsets = [0, 384], sizes = [8, 128], strides = [1, 1]} : vector<8x512xf32> to vector<8x128xf32>
    %162 = arith.negf %161 : vector<8x128xf32>
    %163 = math.exp %162 : vector<8x128xf32>
    %cst_50 = arith.constant 1.000000e+00 : f32
    %164 = vector.broadcast %cst_50 : f32 to vector<8x128xf32>
    %165 = arith.addf %164, %163 : vector<8x128xf32>
    %166 = arith.divf %164, %165 : vector<8x128xf32>
    %167 = arith.mulf %158, %67 : vector<8x128xf32>
    %168 = arith.mulf %152, %160 : vector<8x128xf32>
    %169 = arith.addf %167, %168 : vector<8x128xf32>
    %170 = math.tanh %169 : vector<8x128xf32>
    %171 = arith.mulf %166, %170 : vector<8x128xf32>
    %172 = tpu.concatenate %171, %102 in 1 : vector<8x128xf32>, vector<8x128xf32> -> vector<8x256xf32>
    %c2_51 = arith.constant 2 : index
    %c0_52 = arith.constant 0 : index
    %c0_53 = arith.constant 0 : index
    %173 = vector.load %arg1[%c2_51, %c0_52, %c0_53] : memref<3x256x512xf32, #tpu.memory_space<vmem>>, vector<1x256x512xf32>
    %174 = vector.shape_cast %173 : vector<1x256x512xf32> to vector<256x512xf32>
    %cst_54 = arith.constant dense<0.000000e+00> : vector<8x512xf32>
    %175 = tpu.matmul %172, %174, %cst_54 {dimension_numbers = #tpu.dot_dimension_numbers<[1], [0], [0], [1], [0, 0, 1, 1], [], []>} : vector<8x256xf32>, vector<256x512xf32>, vector<8x512xf32> -> vector<8x512xf32>
    %c2_55 = arith.constant 2 : index
    %c0_56 = arith.constant 0 : index
    %c0_57 = arith.constant 0 : index
    %176 = vector.load %arg2[%c2_55, %c0_56, %c0_57] : memref<3x1x512xf32, #tpu.memory_space<vmem>>, vector<1x1x512xf32>
    %177 = vector.shape_cast %176 : vector<1x1x512xf32> to vector<1x512xf32>
    %178 = vector.broadcast %177 : vector<1x512xf32> to vector<8x512xf32>
    %179 = arith.addf %175, %178 : vector<8x512xf32>
    %180 = vector.extract_strided_slice %179 {offsets = [0, 0], sizes = [8, 128], strides = [1, 1]} : vector<8x512xf32> to vector<8x128xf32>
    %181 = arith.negf %180 : vector<8x128xf32>
    %182 = math.exp %181 : vector<8x128xf32>
    %cst_58 = arith.constant 1.000000e+00 : f32
    %183 = vector.broadcast %cst_58 : f32 to vector<8x128xf32>
    %184 = arith.addf %183, %182 : vector<8x128xf32>
    %185 = arith.divf %183, %184 : vector<8x128xf32>
    %186 = vector.extract_strided_slice %179 {offsets = [0, 128], sizes = [8, 128], strides = [1, 1]} : vector<8x512xf32> to vector<8x128xf32>
    %187 = arith.negf %186 : vector<8x128xf32>
    %188 = math.exp %187 : vector<8x128xf32>
    %cst_59 = arith.constant 1.000000e+00 : f32
    %189 = vector.broadcast %cst_59 : f32 to vector<8x128xf32>
    %190 = arith.addf %189, %188 : vector<8x128xf32>
    %191 = arith.divf %189, %190 : vector<8x128xf32>
    %192 = vector.extract_strided_slice %179 {offsets = [0, 256], sizes = [8, 128], strides = [1, 1]} : vector<8x512xf32> to vector<8x128xf32>
    %193 = math.tanh %192 : vector<8x128xf32>
    %194 = vector.extract_strided_slice %179 {offsets = [0, 384], sizes = [8, 128], strides = [1, 1]} : vector<8x512xf32> to vector<8x128xf32>
    %195 = arith.negf %194 : vector<8x128xf32>
    %196 = math.exp %195 : vector<8x128xf32>
    %cst_60 = arith.constant 1.000000e+00 : f32
    %197 = vector.broadcast %cst_60 : f32 to vector<8x128xf32>
    %198 = arith.addf %197, %196 : vector<8x128xf32>
    %199 = arith.divf %197, %198 : vector<8x128xf32>
    %200 = arith.mulf %191, %100 : vector<8x128xf32>
    %201 = arith.mulf %185, %193 : vector<8x128xf32>
    %202 = arith.addf %200, %201 : vector<8x128xf32>
    %203 = math.tanh %202 : vector<8x128xf32>
    %204 = arith.mulf %199, %203 : vector<8x128xf32>
    %c2_i32 = arith.constant 2 : i32
    %205 = arith.index_cast %c2_i32 : i32 to index
    %c0_61 = arith.constant 0 : index
    %c0_62 = arith.constant 0 : index
    %206 = vector.load %arg0[%205, %c0_61, %c0_62] : memref<8x8x128xf32, #tpu.memory_space<vmem>>, vector<1x8x128xf32>
    %207 = vector.shape_cast %206 : vector<1x8x128xf32> to vector<8x128xf32>
    %208 = tpu.concatenate %207, %138 in 1 : vector<8x128xf32>, vector<8x128xf32> -> vector<8x256xf32>
    %c0_63 = arith.constant 0 : index
    %c0_64 = arith.constant 0 : index
    %c0_65 = arith.constant 0 : index
    %209 = vector.load %arg1[%c0_63, %c0_64, %c0_65] : memref<3x256x512xf32, #tpu.memory_space<vmem>>, vector<1x256x512xf32>
    %210 = vector.shape_cast %209 : vector<1x256x512xf32> to vector<256x512xf32>
    %cst_66 = arith.constant dense<0.000000e+00> : vector<8x512xf32>
    %211 = tpu.matmul %208, %210, %cst_66 {dimension_numbers = #tpu.dot_dimension_numbers<[1], [0], [0], [1], [0, 0, 1, 1], [], []>} : vector<8x256xf32>, vector<256x512xf32>, vector<8x512xf32> -> vector<8x512xf32>
    %c0_67 = arith.constant 0 : index
    %c0_68 = arith.constant 0 : index
    %c0_69 = arith.constant 0 : index
    %212 = vector.load %arg2[%c0_67, %c0_68, %c0_69] : memref<3x1x512xf32, #tpu.memory_space<vmem>>, vector<1x1x512xf32>
    %213 = vector.shape_cast %212 : vector<1x1x512xf32> to vector<1x512xf32>
    %214 = vector.broadcast %213 : vector<1x512xf32> to vector<8x512xf32>
    %215 = arith.addf %211, %214 : vector<8x512xf32>
    %216 = vector.extract_strided_slice %215 {offsets = [0, 0], sizes = [8, 128], strides = [1, 1]} : vector<8x512xf32> to vector<8x128xf32>
    %217 = arith.negf %216 : vector<8x128xf32>
    %218 = math.exp %217 : vector<8x128xf32>
    %cst_70 = arith.constant 1.000000e+00 : f32
    %219 = vector.broadcast %cst_70 : f32 to vector<8x128xf32>
    %220 = arith.addf %219, %218 : vector<8x128xf32>
    %221 = arith.divf %219, %220 : vector<8x128xf32>
    %222 = vector.extract_strided_slice %215 {offsets = [0, 128], sizes = [8, 128], strides = [1, 1]} : vector<8x512xf32> to vector<8x128xf32>
    %223 = arith.negf %222 : vector<8x128xf32>
    %224 = math.exp %223 : vector<8x128xf32>
    %cst_71 = arith.constant 1.000000e+00 : f32
    %225 = vector.broadcast %cst_71 : f32 to vector<8x128xf32>
    %226 = arith.addf %225, %224 : vector<8x128xf32>
    %227 = arith.divf %225, %226 : vector<8x128xf32>
    %228 = vector.extract_strided_slice %215 {offsets = [0, 256], sizes = [8, 128], strides = [1, 1]} : vector<8x512xf32> to vector<8x128xf32>
    %229 = math.tanh %228 : vector<8x128xf32>
    %230 = vector.extract_strided_slice %215 {offsets = [0, 384], sizes = [8, 128], strides = [1, 1]} : vector<8x512xf32> to vector<8x128xf32>
    %231 = arith.negf %230 : vector<8x128xf32>
    %232 = math.exp %231 : vector<8x128xf32>
    %cst_72 = arith.constant 1.000000e+00 : f32
    %233 = vector.broadcast %cst_72 : f32 to vector<8x128xf32>
    %234 = arith.addf %233, %232 : vector<8x128xf32>
    %235 = arith.divf %233, %234 : vector<8x128xf32>
    %236 = arith.mulf %227, %136 : vector<8x128xf32>
    %237 = arith.mulf %221, %229 : vector<8x128xf32>
    %238 = arith.addf %236, %237 : vector<8x128xf32>
    %239 = math.tanh %238 : vector<8x128xf32>
    %240 = arith.mulf %235, %239 : vector<8x128xf32>
    %241 = tpu.concatenate %240, %171 in 1 : vector<8x128xf32>, vector<8x128xf32> -> vector<8x256xf32>
    %c1_73 = arith.constant 1 : index
    %c0_74 = arith.constant 0 : index
    %c0_75 = arith.constant 0 : index
    %242 = vector.load %arg1[%c1_73, %c0_74, %c0_75] : memref<3x256x512xf32, #tpu.memory_space<vmem>>, vector<1x256x512xf32>
    %243 = vector.shape_cast %242 : vector<1x256x512xf32> to vector<256x512xf32>
    %cst_76 = arith.constant dense<0.000000e+00> : vector<8x512xf32>
    %244 = tpu.matmul %241, %243, %cst_76 {dimension_numbers = #tpu.dot_dimension_numbers<[1], [0], [0], [1], [0, 0, 1, 1], [], []>} : vector<8x256xf32>, vector<256x512xf32>, vector<8x512xf32> -> vector<8x512xf32>
    %c1_77 = arith.constant 1 : index
    %c0_78 = arith.constant 0 : index
    %c0_79 = arith.constant 0 : index
    %245 = vector.load %arg2[%c1_77, %c0_78, %c0_79] : memref<3x1x512xf32, #tpu.memory_space<vmem>>, vector<1x1x512xf32>
    %246 = vector.shape_cast %245 : vector<1x1x512xf32> to vector<1x512xf32>
    %247 = vector.broadcast %246 : vector<1x512xf32> to vector<8x512xf32>
    %248 = arith.addf %244, %247 : vector<8x512xf32>
    %249 = vector.extract_strided_slice %248 {offsets = [0, 0], sizes = [8, 128], strides = [1, 1]} : vector<8x512xf32> to vector<8x128xf32>
    %250 = arith.negf %249 : vector<8x128xf32>
    %251 = math.exp %250 : vector<8x128xf32>
    %cst_80 = arith.constant 1.000000e+00 : f32
    %252 = vector.broadcast %cst_80 : f32 to vector<8x128xf32>
    %253 = arith.addf %252, %251 : vector<8x128xf32>
    %254 = arith.divf %252, %253 : vector<8x128xf32>
    %255 = vector.extract_strided_slice %248 {offsets = [0, 128], sizes = [8, 128], strides = [1, 1]} : vector<8x512xf32> to vector<8x128xf32>
    %256 = arith.negf %255 : vector<8x128xf32>
    %257 = math.exp %256 : vector<8x128xf32>
    %cst_81 = arith.constant 1.000000e+00 : f32
    %258 = vector.broadcast %cst_81 : f32 to vector<8x128xf32>
    %259 = arith.addf %258, %257 : vector<8x128xf32>
    %260 = arith.divf %258, %259 : vector<8x128xf32>
    %261 = vector.extract_strided_slice %248 {offsets = [0, 256], sizes = [8, 128], strides = [1, 1]} : vector<8x512xf32> to vector<8x128xf32>
    %262 = math.tanh %261 : vector<8x128xf32>
    %263 = vector.extract_strided_slice %248 {offsets = [0, 384], sizes = [8, 128], strides = [1, 1]} : vector<8x512xf32> to vector<8x128xf32>
    %264 = arith.negf %263 : vector<8x128xf32>
    %265 = math.exp %264 : vector<8x128xf32>
    %cst_82 = arith.constant 1.000000e+00 : f32
    %266 = vector.broadcast %cst_82 : f32 to vector<8x128xf32>
    %267 = arith.addf %266, %265 : vector<8x128xf32>
    %268 = arith.divf %266, %267 : vector<8x128xf32>
    %269 = arith.mulf %260, %169 : vector<8x128xf32>
    %270 = arith.mulf %254, %262 : vector<8x128xf32>
    %271 = arith.addf %269, %270 : vector<8x128xf32>
    %272 = math.tanh %271 : vector<8x128xf32>
    %273 = arith.mulf %268, %272 : vector<8x128xf32>
    %274 = tpu.concatenate %273, %204 in 1 : vector<8x128xf32>, vector<8x128xf32> -> vector<8x256xf32>
    %c2_83 = arith.constant 2 : index
    %c0_84 = arith.constant 0 : index
    %c0_85 = arith.constant 0 : index
    %275 = vector.load %arg1[%c2_83, %c0_84, %c0_85] : memref<3x256x512xf32, #tpu.memory_space<vmem>>, vector<1x256x512xf32>
    %276 = vector.shape_cast %275 : vector<1x256x512xf32> to vector<256x512xf32>
    %cst_86 = arith.constant dense<0.000000e+00> : vector<8x512xf32>
    %277 = tpu.matmul %274, %276, %cst_86 {dimension_numbers = #tpu.dot_dimension_numbers<[1], [0], [0], [1], [0, 0, 1, 1], [], []>} : vector<8x256xf32>, vector<256x512xf32>, vector<8x512xf32> -> vector<8x512xf32>
    %c2_87 = arith.constant 2 : index
    %c0_88 = arith.constant 0 : index
    %c0_89 = arith.constant 0 : index
    %278 = vector.load %arg2[%c2_87, %c0_88, %c0_89] : memref<3x1x512xf32, #tpu.memory_space<vmem>>, vector<1x1x512xf32>
    %279 = vector.shape_cast %278 : vector<1x1x512xf32> to vector<1x512xf32>
    %280 = vector.broadcast %279 : vector<1x512xf32> to vector<8x512xf32>
    %281 = arith.addf %277, %280 : vector<8x512xf32>
    %282 = vector.extract_strided_slice %281 {offsets = [0, 0], sizes = [8, 128], strides = [1, 1]} : vector<8x512xf32> to vector<8x128xf32>
    %283 = arith.negf %282 : vector<8x128xf32>
    %284 = math.exp %283 : vector<8x128xf32>
    %cst_90 = arith.constant 1.000000e+00 : f32
    %285 = vector.broadcast %cst_90 : f32 to vector<8x128xf32>
    %286 = arith.addf %285, %284 : vector<8x128xf32>
    %287 = arith.divf %285, %286 : vector<8x128xf32>
    %288 = vector.extract_strided_slice %281 {offsets = [0, 128], sizes = [8, 128], strides = [1, 1]} : vector<8x512xf32> to vector<8x128xf32>
    %289 = arith.negf %288 : vector<8x128xf32>
    %290 = math.exp %289 : vector<8x128xf32>
    %cst_91 = arith.constant 1.000000e+00 : f32
    %291 = vector.broadcast %cst_91 : f32 to vector<8x128xf32>
    %292 = arith.addf %291, %290 : vector<8x128xf32>
    %293 = arith.divf %291, %292 : vector<8x128xf32>
    %294 = vector.extract_strided_slice %281 {offsets = [0, 256], sizes = [8, 128], strides = [1, 1]} : vector<8x512xf32> to vector<8x128xf32>
    %295 = math.tanh %294 : vector<8x128xf32>
    %296 = vector.extract_strided_slice %281 {offsets = [0, 384], sizes = [8, 128], strides = [1, 1]} : vector<8x512xf32> to vector<8x128xf32>
    %297 = arith.negf %296 : vector<8x128xf32>
    %298 = math.exp %297 : vector<8x128xf32>
    %cst_92 = arith.constant 1.000000e+00 : f32
    %299 = vector.broadcast %cst_92 : f32 to vector<8x128xf32>
    %300 = arith.addf %299, %298 : vector<8x128xf32>
    %301 = arith.divf %299, %300 : vector<8x128xf32>
    %302 = arith.mulf %293, %202 : vector<8x128xf32>
    %303 = arith.mulf %287, %295 : vector<8x128xf32>
    %304 = arith.addf %302, %303 : vector<8x128xf32>
    %305 = math.tanh %304 : vector<8x128xf32>
    %306 = arith.mulf %301, %305 : vector<8x128xf32>
    %c3_i32 = arith.constant 3 : i32
    %307 = arith.index_cast %c3_i32 : i32 to index
    %c0_93 = arith.constant 0 : index
    %c0_94 = arith.constant 0 : index
    %308 = vector.load %arg0[%307, %c0_93, %c0_94] : memref<8x8x128xf32, #tpu.memory_space<vmem>>, vector<1x8x128xf32>
    %309 = vector.shape_cast %308 : vector<1x8x128xf32> to vector<8x128xf32>
    %310 = tpu.concatenate %309, %240 in 1 : vector<8x128xf32>, vector<8x128xf32> -> vector<8x256xf32>
    %c0_95 = arith.constant 0 : index
    %c0_96 = arith.constant 0 : index
    %c0_97 = arith.constant 0 : index
    %311 = vector.load %arg1[%c0_95, %c0_96, %c0_97] : memref<3x256x512xf32, #tpu.memory_space<vmem>>, vector<1x256x512xf32>
    %312 = vector.shape_cast %311 : vector<1x256x512xf32> to vector<256x512xf32>
    %cst_98 = arith.constant dense<0.000000e+00> : vector<8x512xf32>
    %313 = tpu.matmul %310, %312, %cst_98 {dimension_numbers = #tpu.dot_dimension_numbers<[1], [0], [0], [1], [0, 0, 1, 1], [], []>} : vector<8x256xf32>, vector<256x512xf32>, vector<8x512xf32> -> vector<8x512xf32>
    %c0_99 = arith.constant 0 : index
    %c0_100 = arith.constant 0 : index
    %c0_101 = arith.constant 0 : index
    %314 = vector.load %arg2[%c0_99, %c0_100, %c0_101] : memref<3x1x512xf32, #tpu.memory_space<vmem>>, vector<1x1x512xf32>
    %315 = vector.shape_cast %314 : vector<1x1x512xf32> to vector<1x512xf32>
    %316 = vector.broadcast %315 : vector<1x512xf32> to vector<8x512xf32>
    %317 = arith.addf %313, %316 : vector<8x512xf32>
    %318 = vector.extract_strided_slice %317 {offsets = [0, 0], sizes = [8, 128], strides = [1, 1]} : vector<8x512xf32> to vector<8x128xf32>
    %319 = arith.negf %318 : vector<8x128xf32>
    %320 = math.exp %319 : vector<8x128xf32>
    %cst_102 = arith.constant 1.000000e+00 : f32
    %321 = vector.broadcast %cst_102 : f32 to vector<8x128xf32>
    %322 = arith.addf %321, %320 : vector<8x128xf32>
    %323 = arith.divf %321, %322 : vector<8x128xf32>
    %324 = vector.extract_strided_slice %317 {offsets = [0, 128], sizes = [8, 128], strides = [1, 1]} : vector<8x512xf32> to vector<8x128xf32>
    %325 = arith.negf %324 : vector<8x128xf32>
    %326 = math.exp %325 : vector<8x128xf32>
    %cst_103 = arith.constant 1.000000e+00 : f32
    %327 = vector.broadcast %cst_103 : f32 to vector<8x128xf32>
    %328 = arith.addf %327, %326 : vector<8x128xf32>
    %329 = arith.divf %327, %328 : vector<8x128xf32>
    %330 = vector.extract_strided_slice %317 {offsets = [0, 256], sizes = [8, 128], strides = [1, 1]} : vector<8x512xf32> to vector<8x128xf32>
    %331 = math.tanh %330 : vector<8x128xf32>
    %332 = vector.extract_strided_slice %317 {offsets = [0, 384], sizes = [8, 128], strides = [1, 1]} : vector<8x512xf32> to vector<8x128xf32>
    %333 = arith.negf %332 : vector<8x128xf32>
    %334 = math.exp %333 : vector<8x128xf32>
    %cst_104 = arith.constant 1.000000e+00 : f32
    %335 = vector.broadcast %cst_104 : f32 to vector<8x128xf32>
    %336 = arith.addf %335, %334 : vector<8x128xf32>
    %337 = arith.divf %335, %336 : vector<8x128xf32>
    %338 = arith.mulf %329, %238 : vector<8x128xf32>
    %339 = arith.mulf %323, %331 : vector<8x128xf32>
    %340 = arith.addf %338, %339 : vector<8x128xf32>
    %341 = math.tanh %340 : vector<8x128xf32>
    %342 = arith.mulf %337, %341 : vector<8x128xf32>
    %343 = tpu.concatenate %342, %273 in 1 : vector<8x128xf32>, vector<8x128xf32> -> vector<8x256xf32>
    %c1_105 = arith.constant 1 : index
    %c0_106 = arith.constant 0 : index
    %c0_107 = arith.constant 0 : index
    %344 = vector.load %arg1[%c1_105, %c0_106, %c0_107] : memref<3x256x512xf32, #tpu.memory_space<vmem>>, vector<1x256x512xf32>
    %345 = vector.shape_cast %344 : vector<1x256x512xf32> to vector<256x512xf32>
    %cst_108 = arith.constant dense<0.000000e+00> : vector<8x512xf32>
    %346 = tpu.matmul %343, %345, %cst_108 {dimension_numbers = #tpu.dot_dimension_numbers<[1], [0], [0], [1], [0, 0, 1, 1], [], []>} : vector<8x256xf32>, vector<256x512xf32>, vector<8x512xf32> -> vector<8x512xf32>
    %c1_109 = arith.constant 1 : index
    %c0_110 = arith.constant 0 : index
    %c0_111 = arith.constant 0 : index
    %347 = vector.load %arg2[%c1_109, %c0_110, %c0_111] : memref<3x1x512xf32, #tpu.memory_space<vmem>>, vector<1x1x512xf32>
    %348 = vector.shape_cast %347 : vector<1x1x512xf32> to vector<1x512xf32>
    %349 = vector.broadcast %348 : vector<1x512xf32> to vector<8x512xf32>
    %350 = arith.addf %346, %349 : vector<8x512xf32>
    %351 = vector.extract_strided_slice %350 {offsets = [0, 0], sizes = [8, 128], strides = [1, 1]} : vector<8x512xf32> to vector<8x128xf32>
    %352 = arith.negf %351 : vector<8x128xf32>
    %353 = math.exp %352 : vector<8x128xf32>
    %cst_112 = arith.constant 1.000000e+00 : f32
    %354 = vector.broadcast %cst_112 : f32 to vector<8x128xf32>
    %355 = arith.addf %354, %353 : vector<8x128xf32>
    %356 = arith.divf %354, %355 : vector<8x128xf32>
    %357 = vector.extract_strided_slice %350 {offsets = [0, 128], sizes = [8, 128], strides = [1, 1]} : vector<8x512xf32> to vector<8x128xf32>
    %358 = arith.negf %357 : vector<8x128xf32>
    %359 = math.exp %358 : vector<8x128xf32>
    %cst_113 = arith.constant 1.000000e+00 : f32
    %360 = vector.broadcast %cst_113 : f32 to vector<8x128xf32>
    %361 = arith.addf %360, %359 : vector<8x128xf32>
    %362 = arith.divf %360, %361 : vector<8x128xf32>
    %363 = vector.extract_strided_slice %350 {offsets = [0, 256], sizes = [8, 128], strides = [1, 1]} : vector<8x512xf32> to vector<8x128xf32>
    %364 = math.tanh %363 : vector<8x128xf32>
    %365 = vector.extract_strided_slice %350 {offsets = [0, 384], sizes = [8, 128], strides = [1, 1]} : vector<8x512xf32> to vector<8x128xf32>
    %366 = arith.negf %365 : vector<8x128xf32>
    %367 = math.exp %366 : vector<8x128xf32>
    %cst_114 = arith.constant 1.000000e+00 : f32
    %368 = vector.broadcast %cst_114 : f32 to vector<8x128xf32>
    %369 = arith.addf %368, %367 : vector<8x128xf32>
    %370 = arith.divf %368, %369 : vector<8x128xf32>
    %371 = arith.mulf %362, %271 : vector<8x128xf32>
    %372 = arith.mulf %356, %364 : vector<8x128xf32>
    %373 = arith.addf %371, %372 : vector<8x128xf32>
    %374 = math.tanh %373 : vector<8x128xf32>
    %375 = arith.mulf %370, %374 : vector<8x128xf32>
    %376 = tpu.concatenate %375, %306 in 1 : vector<8x128xf32>, vector<8x128xf32> -> vector<8x256xf32>
    %c2_115 = arith.constant 2 : index
    %c0_116 = arith.constant 0 : index
    %c0_117 = arith.constant 0 : index
    %377 = vector.load %arg1[%c2_115, %c0_116, %c0_117] : memref<3x256x512xf32, #tpu.memory_space<vmem>>, vector<1x256x512xf32>
    %378 = vector.shape_cast %377 : vector<1x256x512xf32> to vector<256x512xf32>
    %cst_118 = arith.constant dense<0.000000e+00> : vector<8x512xf32>
    %379 = tpu.matmul %376, %378, %cst_118 {dimension_numbers = #tpu.dot_dimension_numbers<[1], [0], [0], [1], [0, 0, 1, 1], [], []>} : vector<8x256xf32>, vector<256x512xf32>, vector<8x512xf32> -> vector<8x512xf32>
    %c2_119 = arith.constant 2 : index
    %c0_120 = arith.constant 0 : index
    %c0_121 = arith.constant 0 : index
    %380 = vector.load %arg2[%c2_119, %c0_120, %c0_121] : memref<3x1x512xf32, #tpu.memory_space<vmem>>, vector<1x1x512xf32>
    %381 = vector.shape_cast %380 : vector<1x1x512xf32> to vector<1x512xf32>
    %382 = vector.broadcast %381 : vector<1x512xf32> to vector<8x512xf32>
    %383 = arith.addf %379, %382 : vector<8x512xf32>
    %384 = vector.extract_strided_slice %383 {offsets = [0, 0], sizes = [8, 128], strides = [1, 1]} : vector<8x512xf32> to vector<8x128xf32>
    %385 = arith.negf %384 : vector<8x128xf32>
    %386 = math.exp %385 : vector<8x128xf32>
    %cst_122 = arith.constant 1.000000e+00 : f32
    %387 = vector.broadcast %cst_122 : f32 to vector<8x128xf32>
    %388 = arith.addf %387, %386 : vector<8x128xf32>
    %389 = arith.divf %387, %388 : vector<8x128xf32>
    %390 = vector.extract_strided_slice %383 {offsets = [0, 128], sizes = [8, 128], strides = [1, 1]} : vector<8x512xf32> to vector<8x128xf32>
    %391 = arith.negf %390 : vector<8x128xf32>
    %392 = math.exp %391 : vector<8x128xf32>
    %cst_123 = arith.constant 1.000000e+00 : f32
    %393 = vector.broadcast %cst_123 : f32 to vector<8x128xf32>
    %394 = arith.addf %393, %392 : vector<8x128xf32>
    %395 = arith.divf %393, %394 : vector<8x128xf32>
    %396 = vector.extract_strided_slice %383 {offsets = [0, 256], sizes = [8, 128], strides = [1, 1]} : vector<8x512xf32> to vector<8x128xf32>
    %397 = math.tanh %396 : vector<8x128xf32>
    %398 = vector.extract_strided_slice %383 {offsets = [0, 384], sizes = [8, 128], strides = [1, 1]} : vector<8x512xf32> to vector<8x128xf32>
    %399 = arith.negf %398 : vector<8x128xf32>
    %400 = math.exp %399 : vector<8x128xf32>
    %cst_124 = arith.constant 1.000000e+00 : f32
    %401 = vector.broadcast %cst_124 : f32 to vector<8x128xf32>
    %402 = arith.addf %401, %400 : vector<8x128xf32>
    %403 = arith.divf %401, %402 : vector<8x128xf32>
    %404 = arith.mulf %395, %304 : vector<8x128xf32>
    %405 = arith.mulf %389, %397 : vector<8x128xf32>
    %406 = arith.addf %404, %405 : vector<8x128xf32>
    %407 = math.tanh %406 : vector<8x128xf32>
    %408 = arith.mulf %403, %407 : vector<8x128xf32>
    %c4_i32 = arith.constant 4 : i32
    %409 = arith.index_cast %c4_i32 : i32 to index
    %c0_125 = arith.constant 0 : index
    %c0_126 = arith.constant 0 : index
    %410 = vector.load %arg0[%409, %c0_125, %c0_126] : memref<8x8x128xf32, #tpu.memory_space<vmem>>, vector<1x8x128xf32>
    %411 = vector.shape_cast %410 : vector<1x8x128xf32> to vector<8x128xf32>
    %412 = tpu.concatenate %411, %342 in 1 : vector<8x128xf32>, vector<8x128xf32> -> vector<8x256xf32>
    %c0_127 = arith.constant 0 : index
    %c0_128 = arith.constant 0 : index
    %c0_129 = arith.constant 0 : index
    %413 = vector.load %arg1[%c0_127, %c0_128, %c0_129] : memref<3x256x512xf32, #tpu.memory_space<vmem>>, vector<1x256x512xf32>
    %414 = vector.shape_cast %413 : vector<1x256x512xf32> to vector<256x512xf32>
    %cst_130 = arith.constant dense<0.000000e+00> : vector<8x512xf32>
    %415 = tpu.matmul %412, %414, %cst_130 {dimension_numbers = #tpu.dot_dimension_numbers<[1], [0], [0], [1], [0, 0, 1, 1], [], []>} : vector<8x256xf32>, vector<256x512xf32>, vector<8x512xf32> -> vector<8x512xf32>
    %c0_131 = arith.constant 0 : index
    %c0_132 = arith.constant 0 : index
    %c0_133 = arith.constant 0 : index
    %416 = vector.load %arg2[%c0_131, %c0_132, %c0_133] : memref<3x1x512xf32, #tpu.memory_space<vmem>>, vector<1x1x512xf32>
    %417 = vector.shape_cast %416 : vector<1x1x512xf32> to vector<1x512xf32>
    %418 = vector.broadcast %417 : vector<1x512xf32> to vector<8x512xf32>
    %419 = arith.addf %415, %418 : vector<8x512xf32>
    %420 = vector.extract_strided_slice %419 {offsets = [0, 0], sizes = [8, 128], strides = [1, 1]} : vector<8x512xf32> to vector<8x128xf32>
    %421 = arith.negf %420 : vector<8x128xf32>
    %422 = math.exp %421 : vector<8x128xf32>
    %cst_134 = arith.constant 1.000000e+00 : f32
    %423 = vector.broadcast %cst_134 : f32 to vector<8x128xf32>
    %424 = arith.addf %423, %422 : vector<8x128xf32>
    %425 = arith.divf %423, %424 : vector<8x128xf32>
    %426 = vector.extract_strided_slice %419 {offsets = [0, 128], sizes = [8, 128], strides = [1, 1]} : vector<8x512xf32> to vector<8x128xf32>
    %427 = arith.negf %426 : vector<8x128xf32>
    %428 = math.exp %427 : vector<8x128xf32>
    %cst_135 = arith.constant 1.000000e+00 : f32
    %429 = vector.broadcast %cst_135 : f32 to vector<8x128xf32>
    %430 = arith.addf %429, %428 : vector<8x128xf32>
    %431 = arith.divf %429, %430 : vector<8x128xf32>
    %432 = vector.extract_strided_slice %419 {offsets = [0, 256], sizes = [8, 128], strides = [1, 1]} : vector<8x512xf32> to vector<8x128xf32>
    %433 = math.tanh %432 : vector<8x128xf32>
    %434 = vector.extract_strided_slice %419 {offsets = [0, 384], sizes = [8, 128], strides = [1, 1]} : vector<8x512xf32> to vector<8x128xf32>
    %435 = arith.negf %434 : vector<8x128xf32>
    %436 = math.exp %435 : vector<8x128xf32>
    %cst_136 = arith.constant 1.000000e+00 : f32
    %437 = vector.broadcast %cst_136 : f32 to vector<8x128xf32>
    %438 = arith.addf %437, %436 : vector<8x128xf32>
    %439 = arith.divf %437, %438 : vector<8x128xf32>
    %440 = arith.mulf %431, %340 : vector<8x128xf32>
    %441 = arith.mulf %425, %433 : vector<8x128xf32>
    %442 = arith.addf %440, %441 : vector<8x128xf32>
    %443 = math.tanh %442 : vector<8x128xf32>
    %444 = arith.mulf %439, %443 : vector<8x128xf32>
    %445 = tpu.concatenate %444, %375 in 1 : vector<8x128xf32>, vector<8x128xf32> -> vector<8x256xf32>
    %c1_137 = arith.constant 1 : index
    %c0_138 = arith.constant 0 : index
    %c0_139 = arith.constant 0 : index
    %446 = vector.load %arg1[%c1_137, %c0_138, %c0_139] : memref<3x256x512xf32, #tpu.memory_space<vmem>>, vector<1x256x512xf32>
    %447 = vector.shape_cast %446 : vector<1x256x512xf32> to vector<256x512xf32>
    %cst_140 = arith.constant dense<0.000000e+00> : vector<8x512xf32>
    %448 = tpu.matmul %445, %447, %cst_140 {dimension_numbers = #tpu.dot_dimension_numbers<[1], [0], [0], [1], [0, 0, 1, 1], [], []>} : vector<8x256xf32>, vector<256x512xf32>, vector<8x512xf32> -> vector<8x512xf32>
    %c1_141 = arith.constant 1 : index
    %c0_142 = arith.constant 0 : index
    %c0_143 = arith.constant 0 : index
    %449 = vector.load %arg2[%c1_141, %c0_142, %c0_143] : memref<3x1x512xf32, #tpu.memory_space<vmem>>, vector<1x1x512xf32>
    %450 = vector.shape_cast %449 : vector<1x1x512xf32> to vector<1x512xf32>
    %451 = vector.broadcast %450 : vector<1x512xf32> to vector<8x512xf32>
    %452 = arith.addf %448, %451 : vector<8x512xf32>
    %453 = vector.extract_strided_slice %452 {offsets = [0, 0], sizes = [8, 128], strides = [1, 1]} : vector<8x512xf32> to vector<8x128xf32>
    %454 = arith.negf %453 : vector<8x128xf32>
    %455 = math.exp %454 : vector<8x128xf32>
    %cst_144 = arith.constant 1.000000e+00 : f32
    %456 = vector.broadcast %cst_144 : f32 to vector<8x128xf32>
    %457 = arith.addf %456, %455 : vector<8x128xf32>
    %458 = arith.divf %456, %457 : vector<8x128xf32>
    %459 = vector.extract_strided_slice %452 {offsets = [0, 128], sizes = [8, 128], strides = [1, 1]} : vector<8x512xf32> to vector<8x128xf32>
    %460 = arith.negf %459 : vector<8x128xf32>
    %461 = math.exp %460 : vector<8x128xf32>
    %cst_145 = arith.constant 1.000000e+00 : f32
    %462 = vector.broadcast %cst_145 : f32 to vector<8x128xf32>
    %463 = arith.addf %462, %461 : vector<8x128xf32>
    %464 = arith.divf %462, %463 : vector<8x128xf32>
    %465 = vector.extract_strided_slice %452 {offsets = [0, 256], sizes = [8, 128], strides = [1, 1]} : vector<8x512xf32> to vector<8x128xf32>
    %466 = math.tanh %465 : vector<8x128xf32>
    %467 = vector.extract_strided_slice %452 {offsets = [0, 384], sizes = [8, 128], strides = [1, 1]} : vector<8x512xf32> to vector<8x128xf32>
    %468 = arith.negf %467 : vector<8x128xf32>
    %469 = math.exp %468 : vector<8x128xf32>
    %cst_146 = arith.constant 1.000000e+00 : f32
    %470 = vector.broadcast %cst_146 : f32 to vector<8x128xf32>
    %471 = arith.addf %470, %469 : vector<8x128xf32>
    %472 = arith.divf %470, %471 : vector<8x128xf32>
    %473 = arith.mulf %464, %373 : vector<8x128xf32>
    %474 = arith.mulf %458, %466 : vector<8x128xf32>
    %475 = arith.addf %473, %474 : vector<8x128xf32>
    %476 = math.tanh %475 : vector<8x128xf32>
    %477 = arith.mulf %472, %476 : vector<8x128xf32>
    %478 = tpu.concatenate %477, %408 in 1 : vector<8x128xf32>, vector<8x128xf32> -> vector<8x256xf32>
    %c2_147 = arith.constant 2 : index
    %c0_148 = arith.constant 0 : index
    %c0_149 = arith.constant 0 : index
    %479 = vector.load %arg1[%c2_147, %c0_148, %c0_149] : memref<3x256x512xf32, #tpu.memory_space<vmem>>, vector<1x256x512xf32>
    %480 = vector.shape_cast %479 : vector<1x256x512xf32> to vector<256x512xf32>
    %cst_150 = arith.constant dense<0.000000e+00> : vector<8x512xf32>
    %481 = tpu.matmul %478, %480, %cst_150 {dimension_numbers = #tpu.dot_dimension_numbers<[1], [0], [0], [1], [0, 0, 1, 1], [], []>} : vector<8x256xf32>, vector<256x512xf32>, vector<8x512xf32> -> vector<8x512xf32>
    %c2_151 = arith.constant 2 : index
    %c0_152 = arith.constant 0 : index
    %c0_153 = arith.constant 0 : index
    %482 = vector.load %arg2[%c2_151, %c0_152, %c0_153] : memref<3x1x512xf32, #tpu.memory_space<vmem>>, vector<1x1x512xf32>
    %483 = vector.shape_cast %482 : vector<1x1x512xf32> to vector<1x512xf32>
    %484 = vector.broadcast %483 : vector<1x512xf32> to vector<8x512xf32>
    %485 = arith.addf %481, %484 : vector<8x512xf32>
    %486 = vector.extract_strided_slice %485 {offsets = [0, 0], sizes = [8, 128], strides = [1, 1]} : vector<8x512xf32> to vector<8x128xf32>
    %487 = arith.negf %486 : vector<8x128xf32>
    %488 = math.exp %487 : vector<8x128xf32>
    %cst_154 = arith.constant 1.000000e+00 : f32
    %489 = vector.broadcast %cst_154 : f32 to vector<8x128xf32>
    %490 = arith.addf %489, %488 : vector<8x128xf32>
    %491 = arith.divf %489, %490 : vector<8x128xf32>
    %492 = vector.extract_strided_slice %485 {offsets = [0, 128], sizes = [8, 128], strides = [1, 1]} : vector<8x512xf32> to vector<8x128xf32>
    %493 = arith.negf %492 : vector<8x128xf32>
    %494 = math.exp %493 : vector<8x128xf32>
    %cst_155 = arith.constant 1.000000e+00 : f32
    %495 = vector.broadcast %cst_155 : f32 to vector<8x128xf32>
    %496 = arith.addf %495, %494 : vector<8x128xf32>
    %497 = arith.divf %495, %496 : vector<8x128xf32>
    %498 = vector.extract_strided_slice %485 {offsets = [0, 256], sizes = [8, 128], strides = [1, 1]} : vector<8x512xf32> to vector<8x128xf32>
    %499 = math.tanh %498 : vector<8x128xf32>
    %500 = vector.extract_strided_slice %485 {offsets = [0, 384], sizes = [8, 128], strides = [1, 1]} : vector<8x512xf32> to vector<8x128xf32>
    %501 = arith.negf %500 : vector<8x128xf32>
    %502 = math.exp %501 : vector<8x128xf32>
    %cst_156 = arith.constant 1.000000e+00 : f32
    %503 = vector.broadcast %cst_156 : f32 to vector<8x128xf32>
    %504 = arith.addf %503, %502 : vector<8x128xf32>
    %505 = arith.divf %503, %504 : vector<8x128xf32>
    %506 = arith.mulf %497, %406 : vector<8x128xf32>
    %507 = arith.mulf %491, %499 : vector<8x128xf32>
    %508 = arith.addf %506, %507 : vector<8x128xf32>
    %509 = math.tanh %508 : vector<8x128xf32>
    %510 = arith.mulf %505, %509 : vector<8x128xf32>
    %c5_i32 = arith.constant 5 : i32
    %511 = arith.index_cast %c5_i32 : i32 to index
    %c0_157 = arith.constant 0 : index
    %c0_158 = arith.constant 0 : index
    %512 = vector.load %arg0[%511, %c0_157, %c0_158] : memref<8x8x128xf32, #tpu.memory_space<vmem>>, vector<1x8x128xf32>
    %513 = vector.shape_cast %512 : vector<1x8x128xf32> to vector<8x128xf32>
    %514 = tpu.concatenate %513, %444 in 1 : vector<8x128xf32>, vector<8x128xf32> -> vector<8x256xf32>
    %c0_159 = arith.constant 0 : index
    %c0_160 = arith.constant 0 : index
    %c0_161 = arith.constant 0 : index
    %515 = vector.load %arg1[%c0_159, %c0_160, %c0_161] : memref<3x256x512xf32, #tpu.memory_space<vmem>>, vector<1x256x512xf32>
    %516 = vector.shape_cast %515 : vector<1x256x512xf32> to vector<256x512xf32>
    %cst_162 = arith.constant dense<0.000000e+00> : vector<8x512xf32>
    %517 = tpu.matmul %514, %516, %cst_162 {dimension_numbers = #tpu.dot_dimension_numbers<[1], [0], [0], [1], [0, 0, 1, 1], [], []>} : vector<8x256xf32>, vector<256x512xf32>, vector<8x512xf32> -> vector<8x512xf32>
    %c0_163 = arith.constant 0 : index
    %c0_164 = arith.constant 0 : index
    %c0_165 = arith.constant 0 : index
    %518 = vector.load %arg2[%c0_163, %c0_164, %c0_165] : memref<3x1x512xf32, #tpu.memory_space<vmem>>, vector<1x1x512xf32>
    %519 = vector.shape_cast %518 : vector<1x1x512xf32> to vector<1x512xf32>
    %520 = vector.broadcast %519 : vector<1x512xf32> to vector<8x512xf32>
    %521 = arith.addf %517, %520 : vector<8x512xf32>
    %522 = vector.extract_strided_slice %521 {offsets = [0, 0], sizes = [8, 128], strides = [1, 1]} : vector<8x512xf32> to vector<8x128xf32>
    %523 = arith.negf %522 : vector<8x128xf32>
    %524 = math.exp %523 : vector<8x128xf32>
    %cst_166 = arith.constant 1.000000e+00 : f32
    %525 = vector.broadcast %cst_166 : f32 to vector<8x128xf32>
    %526 = arith.addf %525, %524 : vector<8x128xf32>
    %527 = arith.divf %525, %526 : vector<8x128xf32>
    %528 = vector.extract_strided_slice %521 {offsets = [0, 128], sizes = [8, 128], strides = [1, 1]} : vector<8x512xf32> to vector<8x128xf32>
    %529 = arith.negf %528 : vector<8x128xf32>
    %530 = math.exp %529 : vector<8x128xf32>
    %cst_167 = arith.constant 1.000000e+00 : f32
    %531 = vector.broadcast %cst_167 : f32 to vector<8x128xf32>
    %532 = arith.addf %531, %530 : vector<8x128xf32>
    %533 = arith.divf %531, %532 : vector<8x128xf32>
    %534 = vector.extract_strided_slice %521 {offsets = [0, 256], sizes = [8, 128], strides = [1, 1]} : vector<8x512xf32> to vector<8x128xf32>
    %535 = math.tanh %534 : vector<8x128xf32>
    %536 = vector.extract_strided_slice %521 {offsets = [0, 384], sizes = [8, 128], strides = [1, 1]} : vector<8x512xf32> to vector<8x128xf32>
    %537 = arith.negf %536 : vector<8x128xf32>
    %538 = math.exp %537 : vector<8x128xf32>
    %cst_168 = arith.constant 1.000000e+00 : f32
    %539 = vector.broadcast %cst_168 : f32 to vector<8x128xf32>
    %540 = arith.addf %539, %538 : vector<8x128xf32>
    %541 = arith.divf %539, %540 : vector<8x128xf32>
    %542 = arith.mulf %533, %442 : vector<8x128xf32>
    %543 = arith.mulf %527, %535 : vector<8x128xf32>
    %544 = arith.addf %542, %543 : vector<8x128xf32>
    %545 = math.tanh %544 : vector<8x128xf32>
    %546 = arith.mulf %541, %545 : vector<8x128xf32>
    %547 = tpu.concatenate %546, %477 in 1 : vector<8x128xf32>, vector<8x128xf32> -> vector<8x256xf32>
    %c1_169 = arith.constant 1 : index
    %c0_170 = arith.constant 0 : index
    %c0_171 = arith.constant 0 : index
    %548 = vector.load %arg1[%c1_169, %c0_170, %c0_171] : memref<3x256x512xf32, #tpu.memory_space<vmem>>, vector<1x256x512xf32>
    %549 = vector.shape_cast %548 : vector<1x256x512xf32> to vector<256x512xf32>
    %cst_172 = arith.constant dense<0.000000e+00> : vector<8x512xf32>
    %550 = tpu.matmul %547, %549, %cst_172 {dimension_numbers = #tpu.dot_dimension_numbers<[1], [0], [0], [1], [0, 0, 1, 1], [], []>} : vector<8x256xf32>, vector<256x512xf32>, vector<8x512xf32> -> vector<8x512xf32>
    %c1_173 = arith.constant 1 : index
    %c0_174 = arith.constant 0 : index
    %c0_175 = arith.constant 0 : index
    %551 = vector.load %arg2[%c1_173, %c0_174, %c0_175] : memref<3x1x512xf32, #tpu.memory_space<vmem>>, vector<1x1x512xf32>
    %552 = vector.shape_cast %551 : vector<1x1x512xf32> to vector<1x512xf32>
    %553 = vector.broadcast %552 : vector<1x512xf32> to vector<8x512xf32>
    %554 = arith.addf %550, %553 : vector<8x512xf32>
    %555 = vector.extract_strided_slice %554 {offsets = [0, 0], sizes = [8, 128], strides = [1, 1]} : vector<8x512xf32> to vector<8x128xf32>
    %556 = arith.negf %555 : vector<8x128xf32>
    %557 = math.exp %556 : vector<8x128xf32>
    %cst_176 = arith.constant 1.000000e+00 : f32
    %558 = vector.broadcast %cst_176 : f32 to vector<8x128xf32>
    %559 = arith.addf %558, %557 : vector<8x128xf32>
    %560 = arith.divf %558, %559 : vector<8x128xf32>
    %561 = vector.extract_strided_slice %554 {offsets = [0, 128], sizes = [8, 128], strides = [1, 1]} : vector<8x512xf32> to vector<8x128xf32>
    %562 = arith.negf %561 : vector<8x128xf32>
    %563 = math.exp %562 : vector<8x128xf32>
    %cst_177 = arith.constant 1.000000e+00 : f32
    %564 = vector.broadcast %cst_177 : f32 to vector<8x128xf32>
    %565 = arith.addf %564, %563 : vector<8x128xf32>
    %566 = arith.divf %564, %565 : vector<8x128xf32>
    %567 = vector.extract_strided_slice %554 {offsets = [0, 256], sizes = [8, 128], strides = [1, 1]} : vector<8x512xf32> to vector<8x128xf32>
    %568 = math.tanh %567 : vector<8x128xf32>
    %569 = vector.extract_strided_slice %554 {offsets = [0, 384], sizes = [8, 128], strides = [1, 1]} : vector<8x512xf32> to vector<8x128xf32>
    %570 = arith.negf %569 : vector<8x128xf32>
    %571 = math.exp %570 : vector<8x128xf32>
    %cst_178 = arith.constant 1.000000e+00 : f32
    %572 = vector.broadcast %cst_178 : f32 to vector<8x128xf32>
    %573 = arith.addf %572, %571 : vector<8x128xf32>
    %574 = arith.divf %572, %573 : vector<8x128xf32>
    %575 = arith.mulf %566, %475 : vector<8x128xf32>
    %576 = arith.mulf %560, %568 : vector<8x128xf32>
    %577 = arith.addf %575, %576 : vector<8x128xf32>
    %578 = math.tanh %577 : vector<8x128xf32>
    %579 = arith.mulf %574, %578 : vector<8x128xf32>
    %580 = tpu.concatenate %579, %510 in 1 : vector<8x128xf32>, vector<8x128xf32> -> vector<8x256xf32>
    %c2_179 = arith.constant 2 : index
    %c0_180 = arith.constant 0 : index
    %c0_181 = arith.constant 0 : index
    %581 = vector.load %arg1[%c2_179, %c0_180, %c0_181] : memref<3x256x512xf32, #tpu.memory_space<vmem>>, vector<1x256x512xf32>
    %582 = vector.shape_cast %581 : vector<1x256x512xf32> to vector<256x512xf32>
    %cst_182 = arith.constant dense<0.000000e+00> : vector<8x512xf32>
    %583 = tpu.matmul %580, %582, %cst_182 {dimension_numbers = #tpu.dot_dimension_numbers<[1], [0], [0], [1], [0, 0, 1, 1], [], []>} : vector<8x256xf32>, vector<256x512xf32>, vector<8x512xf32> -> vector<8x512xf32>
    %c2_183 = arith.constant 2 : index
    %c0_184 = arith.constant 0 : index
    %c0_185 = arith.constant 0 : index
    %584 = vector.load %arg2[%c2_183, %c0_184, %c0_185] : memref<3x1x512xf32, #tpu.memory_space<vmem>>, vector<1x1x512xf32>
    %585 = vector.shape_cast %584 : vector<1x1x512xf32> to vector<1x512xf32>
    %586 = vector.broadcast %585 : vector<1x512xf32> to vector<8x512xf32>
    %587 = arith.addf %583, %586 : vector<8x512xf32>
    %588 = vector.extract_strided_slice %587 {offsets = [0, 0], sizes = [8, 128], strides = [1, 1]} : vector<8x512xf32> to vector<8x128xf32>
    %589 = arith.negf %588 : vector<8x128xf32>
    %590 = math.exp %589 : vector<8x128xf32>
    %cst_186 = arith.constant 1.000000e+00 : f32
    %591 = vector.broadcast %cst_186 : f32 to vector<8x128xf32>
    %592 = arith.addf %591, %590 : vector<8x128xf32>
    %593 = arith.divf %591, %592 : vector<8x128xf32>
    %594 = vector.extract_strided_slice %587 {offsets = [0, 128], sizes = [8, 128], strides = [1, 1]} : vector<8x512xf32> to vector<8x128xf32>
    %595 = arith.negf %594 : vector<8x128xf32>
    %596 = math.exp %595 : vector<8x128xf32>
    %cst_187 = arith.constant 1.000000e+00 : f32
    %597 = vector.broadcast %cst_187 : f32 to vector<8x128xf32>
    %598 = arith.addf %597, %596 : vector<8x128xf32>
    %599 = arith.divf %597, %598 : vector<8x128xf32>
    %600 = vector.extract_strided_slice %587 {offsets = [0, 256], sizes = [8, 128], strides = [1, 1]} : vector<8x512xf32> to vector<8x128xf32>
    %601 = math.tanh %600 : vector<8x128xf32>
    %602 = vector.extract_strided_slice %587 {offsets = [0, 384], sizes = [8, 128], strides = [1, 1]} : vector<8x512xf32> to vector<8x128xf32>
    %603 = arith.negf %602 : vector<8x128xf32>
    %604 = math.exp %603 : vector<8x128xf32>
    %cst_188 = arith.constant 1.000000e+00 : f32
    %605 = vector.broadcast %cst_188 : f32 to vector<8x128xf32>
    %606 = arith.addf %605, %604 : vector<8x128xf32>
    %607 = arith.divf %605, %606 : vector<8x128xf32>
    %608 = arith.mulf %599, %508 : vector<8x128xf32>
    %609 = arith.mulf %593, %601 : vector<8x128xf32>
    %610 = arith.addf %608, %609 : vector<8x128xf32>
    %611 = math.tanh %610 : vector<8x128xf32>
    %612 = arith.mulf %607, %611 : vector<8x128xf32>
    %c6_i32 = arith.constant 6 : i32
    %613 = arith.index_cast %c6_i32 : i32 to index
    %c0_189 = arith.constant 0 : index
    %c0_190 = arith.constant 0 : index
    %614 = vector.load %arg0[%613, %c0_189, %c0_190] : memref<8x8x128xf32, #tpu.memory_space<vmem>>, vector<1x8x128xf32>
    %615 = vector.shape_cast %614 : vector<1x8x128xf32> to vector<8x128xf32>
    %616 = tpu.concatenate %615, %546 in 1 : vector<8x128xf32>, vector<8x128xf32> -> vector<8x256xf32>
    %c0_191 = arith.constant 0 : index
    %c0_192 = arith.constant 0 : index
    %c0_193 = arith.constant 0 : index
    %617 = vector.load %arg1[%c0_191, %c0_192, %c0_193] : memref<3x256x512xf32, #tpu.memory_space<vmem>>, vector<1x256x512xf32>
    %618 = vector.shape_cast %617 : vector<1x256x512xf32> to vector<256x512xf32>
    %cst_194 = arith.constant dense<0.000000e+00> : vector<8x512xf32>
    %619 = tpu.matmul %616, %618, %cst_194 {dimension_numbers = #tpu.dot_dimension_numbers<[1], [0], [0], [1], [0, 0, 1, 1], [], []>} : vector<8x256xf32>, vector<256x512xf32>, vector<8x512xf32> -> vector<8x512xf32>
    %c0_195 = arith.constant 0 : index
    %c0_196 = arith.constant 0 : index
    %c0_197 = arith.constant 0 : index
    %620 = vector.load %arg2[%c0_195, %c0_196, %c0_197] : memref<3x1x512xf32, #tpu.memory_space<vmem>>, vector<1x1x512xf32>
    %621 = vector.shape_cast %620 : vector<1x1x512xf32> to vector<1x512xf32>
    %622 = vector.broadcast %621 : vector<1x512xf32> to vector<8x512xf32>
    %623 = arith.addf %619, %622 : vector<8x512xf32>
    %624 = vector.extract_strided_slice %623 {offsets = [0, 0], sizes = [8, 128], strides = [1, 1]} : vector<8x512xf32> to vector<8x128xf32>
    %625 = arith.negf %624 : vector<8x128xf32>
    %626 = math.exp %625 : vector<8x128xf32>
    %cst_198 = arith.constant 1.000000e+00 : f32
    %627 = vector.broadcast %cst_198 : f32 to vector<8x128xf32>
    %628 = arith.addf %627, %626 : vector<8x128xf32>
    %629 = arith.divf %627, %628 : vector<8x128xf32>
    %630 = vector.extract_strided_slice %623 {offsets = [0, 128], sizes = [8, 128], strides = [1, 1]} : vector<8x512xf32> to vector<8x128xf32>
    %631 = arith.negf %630 : vector<8x128xf32>
    %632 = math.exp %631 : vector<8x128xf32>
    %cst_199 = arith.constant 1.000000e+00 : f32
    %633 = vector.broadcast %cst_199 : f32 to vector<8x128xf32>
    %634 = arith.addf %633, %632 : vector<8x128xf32>
    %635 = arith.divf %633, %634 : vector<8x128xf32>
    %636 = vector.extract_strided_slice %623 {offsets = [0, 256], sizes = [8, 128], strides = [1, 1]} : vector<8x512xf32> to vector<8x128xf32>
    %637 = math.tanh %636 : vector<8x128xf32>
    %638 = vector.extract_strided_slice %623 {offsets = [0, 384], sizes = [8, 128], strides = [1, 1]} : vector<8x512xf32> to vector<8x128xf32>
    %639 = arith.negf %638 : vector<8x128xf32>
    %640 = math.exp %639 : vector<8x128xf32>
    %cst_200 = arith.constant 1.000000e+00 : f32
    %641 = vector.broadcast %cst_200 : f32 to vector<8x128xf32>
    %642 = arith.addf %641, %640 : vector<8x128xf32>
    %643 = arith.divf %641, %642 : vector<8x128xf32>
    %644 = arith.mulf %635, %544 : vector<8x128xf32>
    %645 = arith.mulf %629, %637 : vector<8x128xf32>
    %646 = arith.addf %644, %645 : vector<8x128xf32>
    %647 = math.tanh %646 : vector<8x128xf32>
    %648 = arith.mulf %643, %647 : vector<8x128xf32>
    %649 = tpu.concatenate %648, %579 in 1 : vector<8x128xf32>, vector<8x128xf32> -> vector<8x256xf32>
    %c1_201 = arith.constant 1 : index
    %c0_202 = arith.constant 0 : index
    %c0_203 = arith.constant 0 : index
    %650 = vector.load %arg1[%c1_201, %c0_202, %c0_203] : memref<3x256x512xf32, #tpu.memory_space<vmem>>, vector<1x256x512xf32>
    %651 = vector.shape_cast %650 : vector<1x256x512xf32> to vector<256x512xf32>
    %cst_204 = arith.constant dense<0.000000e+00> : vector<8x512xf32>
    %652 = tpu.matmul %649, %651, %cst_204 {dimension_numbers = #tpu.dot_dimension_numbers<[1], [0], [0], [1], [0, 0, 1, 1], [], []>} : vector<8x256xf32>, vector<256x512xf32>, vector<8x512xf32> -> vector<8x512xf32>
    %c1_205 = arith.constant 1 : index
    %c0_206 = arith.constant 0 : index
    %c0_207 = arith.constant 0 : index
    %653 = vector.load %arg2[%c1_205, %c0_206, %c0_207] : memref<3x1x512xf32, #tpu.memory_space<vmem>>, vector<1x1x512xf32>
    %654 = vector.shape_cast %653 : vector<1x1x512xf32> to vector<1x512xf32>
    %655 = vector.broadcast %654 : vector<1x512xf32> to vector<8x512xf32>
    %656 = arith.addf %652, %655 : vector<8x512xf32>
    %657 = vector.extract_strided_slice %656 {offsets = [0, 0], sizes = [8, 128], strides = [1, 1]} : vector<8x512xf32> to vector<8x128xf32>
    %658 = arith.negf %657 : vector<8x128xf32>
    %659 = math.exp %658 : vector<8x128xf32>
    %cst_208 = arith.constant 1.000000e+00 : f32
    %660 = vector.broadcast %cst_208 : f32 to vector<8x128xf32>
    %661 = arith.addf %660, %659 : vector<8x128xf32>
    %662 = arith.divf %660, %661 : vector<8x128xf32>
    %663 = vector.extract_strided_slice %656 {offsets = [0, 128], sizes = [8, 128], strides = [1, 1]} : vector<8x512xf32> to vector<8x128xf32>
    %664 = arith.negf %663 : vector<8x128xf32>
    %665 = math.exp %664 : vector<8x128xf32>
    %cst_209 = arith.constant 1.000000e+00 : f32
    %666 = vector.broadcast %cst_209 : f32 to vector<8x128xf32>
    %667 = arith.addf %666, %665 : vector<8x128xf32>
    %668 = arith.divf %666, %667 : vector<8x128xf32>
    %669 = vector.extract_strided_slice %656 {offsets = [0, 256], sizes = [8, 128], strides = [1, 1]} : vector<8x512xf32> to vector<8x128xf32>
    %670 = math.tanh %669 : vector<8x128xf32>
    %671 = vector.extract_strided_slice %656 {offsets = [0, 384], sizes = [8, 128], strides = [1, 1]} : vector<8x512xf32> to vector<8x128xf32>
    %672 = arith.negf %671 : vector<8x128xf32>
    %673 = math.exp %672 : vector<8x128xf32>
    %cst_210 = arith.constant 1.000000e+00 : f32
    %674 = vector.broadcast %cst_210 : f32 to vector<8x128xf32>
    %675 = arith.addf %674, %673 : vector<8x128xf32>
    %676 = arith.divf %674, %675 : vector<8x128xf32>
    %677 = arith.mulf %668, %577 : vector<8x128xf32>
    %678 = arith.mulf %662, %670 : vector<8x128xf32>
    %679 = arith.addf %677, %678 : vector<8x128xf32>
    %680 = math.tanh %679 : vector<8x128xf32>
    %681 = arith.mulf %676, %680 : vector<8x128xf32>
    %682 = tpu.concatenate %681, %612 in 1 : vector<8x128xf32>, vector<8x128xf32> -> vector<8x256xf32>
    %c2_211 = arith.constant 2 : index
    %c0_212 = arith.constant 0 : index
    %c0_213 = arith.constant 0 : index
    %683 = vector.load %arg1[%c2_211, %c0_212, %c0_213] : memref<3x256x512xf32, #tpu.memory_space<vmem>>, vector<1x256x512xf32>
    %684 = vector.shape_cast %683 : vector<1x256x512xf32> to vector<256x512xf32>
    %cst_214 = arith.constant dense<0.000000e+00> : vector<8x512xf32>
    %685 = tpu.matmul %682, %684, %cst_214 {dimension_numbers = #tpu.dot_dimension_numbers<[1], [0], [0], [1], [0, 0, 1, 1], [], []>} : vector<8x256xf32>, vector<256x512xf32>, vector<8x512xf32> -> vector<8x512xf32>
    %c2_215 = arith.constant 2 : index
    %c0_216 = arith.constant 0 : index
    %c0_217 = arith.constant 0 : index
    %686 = vector.load %arg2[%c2_215, %c0_216, %c0_217] : memref<3x1x512xf32, #tpu.memory_space<vmem>>, vector<1x1x512xf32>
    %687 = vector.shape_cast %686 : vector<1x1x512xf32> to vector<1x512xf32>
    %688 = vector.broadcast %687 : vector<1x512xf32> to vector<8x512xf32>
    %689 = arith.addf %685, %688 : vector<8x512xf32>
    %690 = vector.extract_strided_slice %689 {offsets = [0, 0], sizes = [8, 128], strides = [1, 1]} : vector<8x512xf32> to vector<8x128xf32>
    %691 = arith.negf %690 : vector<8x128xf32>
    %692 = math.exp %691 : vector<8x128xf32>
    %cst_218 = arith.constant 1.000000e+00 : f32
    %693 = vector.broadcast %cst_218 : f32 to vector<8x128xf32>
    %694 = arith.addf %693, %692 : vector<8x128xf32>
    %695 = arith.divf %693, %694 : vector<8x128xf32>
    %696 = vector.extract_strided_slice %689 {offsets = [0, 128], sizes = [8, 128], strides = [1, 1]} : vector<8x512xf32> to vector<8x128xf32>
    %697 = arith.negf %696 : vector<8x128xf32>
    %698 = math.exp %697 : vector<8x128xf32>
    %cst_219 = arith.constant 1.000000e+00 : f32
    %699 = vector.broadcast %cst_219 : f32 to vector<8x128xf32>
    %700 = arith.addf %699, %698 : vector<8x128xf32>
    %701 = arith.divf %699, %700 : vector<8x128xf32>
    %702 = vector.extract_strided_slice %689 {offsets = [0, 256], sizes = [8, 128], strides = [1, 1]} : vector<8x512xf32> to vector<8x128xf32>
    %703 = math.tanh %702 : vector<8x128xf32>
    %704 = vector.extract_strided_slice %689 {offsets = [0, 384], sizes = [8, 128], strides = [1, 1]} : vector<8x512xf32> to vector<8x128xf32>
    %705 = arith.negf %704 : vector<8x128xf32>
    %706 = math.exp %705 : vector<8x128xf32>
    %cst_220 = arith.constant 1.000000e+00 : f32
    %707 = vector.broadcast %cst_220 : f32 to vector<8x128xf32>
    %708 = arith.addf %707, %706 : vector<8x128xf32>
    %709 = arith.divf %707, %708 : vector<8x128xf32>
    %710 = arith.mulf %701, %610 : vector<8x128xf32>
    %711 = arith.mulf %695, %703 : vector<8x128xf32>
    %712 = arith.addf %710, %711 : vector<8x128xf32>
    %713 = math.tanh %712 : vector<8x128xf32>
    %714 = arith.mulf %709, %713 : vector<8x128xf32>
    %c7_i32 = arith.constant 7 : i32
    %715 = arith.index_cast %c7_i32 : i32 to index
    %c0_221 = arith.constant 0 : index
    %c0_222 = arith.constant 0 : index
    %716 = vector.load %arg0[%715, %c0_221, %c0_222] : memref<8x8x128xf32, #tpu.memory_space<vmem>>, vector<1x8x128xf32>
    %717 = vector.shape_cast %716 : vector<1x8x128xf32> to vector<8x128xf32>
    %718 = tpu.concatenate %717, %648 in 1 : vector<8x128xf32>, vector<8x128xf32> -> vector<8x256xf32>
    %c0_223 = arith.constant 0 : index
    %c0_224 = arith.constant 0 : index
    %c0_225 = arith.constant 0 : index
    %719 = vector.load %arg1[%c0_223, %c0_224, %c0_225] : memref<3x256x512xf32, #tpu.memory_space<vmem>>, vector<1x256x512xf32>
    %720 = vector.shape_cast %719 : vector<1x256x512xf32> to vector<256x512xf32>
    %cst_226 = arith.constant dense<0.000000e+00> : vector<8x512xf32>
    %721 = tpu.matmul %718, %720, %cst_226 {dimension_numbers = #tpu.dot_dimension_numbers<[1], [0], [0], [1], [0, 0, 1, 1], [], []>} : vector<8x256xf32>, vector<256x512xf32>, vector<8x512xf32> -> vector<8x512xf32>
    %c0_227 = arith.constant 0 : index
    %c0_228 = arith.constant 0 : index
    %c0_229 = arith.constant 0 : index
    %722 = vector.load %arg2[%c0_227, %c0_228, %c0_229] : memref<3x1x512xf32, #tpu.memory_space<vmem>>, vector<1x1x512xf32>
    %723 = vector.shape_cast %722 : vector<1x1x512xf32> to vector<1x512xf32>
    %724 = vector.broadcast %723 : vector<1x512xf32> to vector<8x512xf32>
    %725 = arith.addf %721, %724 : vector<8x512xf32>
    %726 = vector.extract_strided_slice %725 {offsets = [0, 0], sizes = [8, 128], strides = [1, 1]} : vector<8x512xf32> to vector<8x128xf32>
    %727 = arith.negf %726 : vector<8x128xf32>
    %728 = math.exp %727 : vector<8x128xf32>
    %cst_230 = arith.constant 1.000000e+00 : f32
    %729 = vector.broadcast %cst_230 : f32 to vector<8x128xf32>
    %730 = arith.addf %729, %728 : vector<8x128xf32>
    %731 = arith.divf %729, %730 : vector<8x128xf32>
    %732 = vector.extract_strided_slice %725 {offsets = [0, 128], sizes = [8, 128], strides = [1, 1]} : vector<8x512xf32> to vector<8x128xf32>
    %733 = arith.negf %732 : vector<8x128xf32>
    %734 = math.exp %733 : vector<8x128xf32>
    %cst_231 = arith.constant 1.000000e+00 : f32
    %735 = vector.broadcast %cst_231 : f32 to vector<8x128xf32>
    %736 = arith.addf %735, %734 : vector<8x128xf32>
    %737 = arith.divf %735, %736 : vector<8x128xf32>
    %738 = vector.extract_strided_slice %725 {offsets = [0, 256], sizes = [8, 128], strides = [1, 1]} : vector<8x512xf32> to vector<8x128xf32>
    %739 = math.tanh %738 : vector<8x128xf32>
    %740 = vector.extract_strided_slice %725 {offsets = [0, 384], sizes = [8, 128], strides = [1, 1]} : vector<8x512xf32> to vector<8x128xf32>
    %741 = arith.negf %740 : vector<8x128xf32>
    %742 = math.exp %741 : vector<8x128xf32>
    %cst_232 = arith.constant 1.000000e+00 : f32
    %743 = vector.broadcast %cst_232 : f32 to vector<8x128xf32>
    %744 = arith.addf %743, %742 : vector<8x128xf32>
    %745 = arith.divf %743, %744 : vector<8x128xf32>
    %746 = arith.mulf %737, %646 : vector<8x128xf32>
    %747 = arith.mulf %731, %739 : vector<8x128xf32>
    %748 = arith.addf %746, %747 : vector<8x128xf32>
    %749 = math.tanh %748 : vector<8x128xf32>
    %750 = arith.mulf %745, %749 : vector<8x128xf32>
    %751 = tpu.concatenate %750, %681 in 1 : vector<8x128xf32>, vector<8x128xf32> -> vector<8x256xf32>
    %c1_233 = arith.constant 1 : index
    %c0_234 = arith.constant 0 : index
    %c0_235 = arith.constant 0 : index
    %752 = vector.load %arg1[%c1_233, %c0_234, %c0_235] : memref<3x256x512xf32, #tpu.memory_space<vmem>>, vector<1x256x512xf32>
    %753 = vector.shape_cast %752 : vector<1x256x512xf32> to vector<256x512xf32>
    %cst_236 = arith.constant dense<0.000000e+00> : vector<8x512xf32>
    %754 = tpu.matmul %751, %753, %cst_236 {dimension_numbers = #tpu.dot_dimension_numbers<[1], [0], [0], [1], [0, 0, 1, 1], [], []>} : vector<8x256xf32>, vector<256x512xf32>, vector<8x512xf32> -> vector<8x512xf32>
    %c1_237 = arith.constant 1 : index
    %c0_238 = arith.constant 0 : index
    %c0_239 = arith.constant 0 : index
    %755 = vector.load %arg2[%c1_237, %c0_238, %c0_239] : memref<3x1x512xf32, #tpu.memory_space<vmem>>, vector<1x1x512xf32>
    %756 = vector.shape_cast %755 : vector<1x1x512xf32> to vector<1x512xf32>
    %757 = vector.broadcast %756 : vector<1x512xf32> to vector<8x512xf32>
    %758 = arith.addf %754, %757 : vector<8x512xf32>
    %759 = vector.extract_strided_slice %758 {offsets = [0, 0], sizes = [8, 128], strides = [1, 1]} : vector<8x512xf32> to vector<8x128xf32>
    %760 = arith.negf %759 : vector<8x128xf32>
    %761 = math.exp %760 : vector<8x128xf32>
    %cst_240 = arith.constant 1.000000e+00 : f32
    %762 = vector.broadcast %cst_240 : f32 to vector<8x128xf32>
    %763 = arith.addf %762, %761 : vector<8x128xf32>
    %764 = arith.divf %762, %763 : vector<8x128xf32>
    %765 = vector.extract_strided_slice %758 {offsets = [0, 128], sizes = [8, 128], strides = [1, 1]} : vector<8x512xf32> to vector<8x128xf32>
    %766 = arith.negf %765 : vector<8x128xf32>
    %767 = math.exp %766 : vector<8x128xf32>
    %cst_241 = arith.constant 1.000000e+00 : f32
    %768 = vector.broadcast %cst_241 : f32 to vector<8x128xf32>
    %769 = arith.addf %768, %767 : vector<8x128xf32>
    %770 = arith.divf %768, %769 : vector<8x128xf32>
    %771 = vector.extract_strided_slice %758 {offsets = [0, 256], sizes = [8, 128], strides = [1, 1]} : vector<8x512xf32> to vector<8x128xf32>
    %772 = math.tanh %771 : vector<8x128xf32>
    %773 = vector.extract_strided_slice %758 {offsets = [0, 384], sizes = [8, 128], strides = [1, 1]} : vector<8x512xf32> to vector<8x128xf32>
    %774 = arith.negf %773 : vector<8x128xf32>
    %775 = math.exp %774 : vector<8x128xf32>
    %cst_242 = arith.constant 1.000000e+00 : f32
    %776 = vector.broadcast %cst_242 : f32 to vector<8x128xf32>
    %777 = arith.addf %776, %775 : vector<8x128xf32>
    %778 = arith.divf %776, %777 : vector<8x128xf32>
    %779 = arith.mulf %770, %679 : vector<8x128xf32>
    %780 = arith.mulf %764, %772 : vector<8x128xf32>
    %781 = arith.addf %779, %780 : vector<8x128xf32>
    %782 = math.tanh %781 : vector<8x128xf32>
    %783 = arith.mulf %778, %782 : vector<8x128xf32>
    %784 = tpu.concatenate %783, %714 in 1 : vector<8x128xf32>, vector<8x128xf32> -> vector<8x256xf32>
    %c2_243 = arith.constant 2 : index
    %c0_244 = arith.constant 0 : index
    %c0_245 = arith.constant 0 : index
    %785 = vector.load %arg1[%c2_243, %c0_244, %c0_245] : memref<3x256x512xf32, #tpu.memory_space<vmem>>, vector<1x256x512xf32>
    %786 = vector.shape_cast %785 : vector<1x256x512xf32> to vector<256x512xf32>
    %cst_246 = arith.constant dense<0.000000e+00> : vector<8x512xf32>
    %787 = tpu.matmul %784, %786, %cst_246 {dimension_numbers = #tpu.dot_dimension_numbers<[1], [0], [0], [1], [0, 0, 1, 1], [], []>} : vector<8x256xf32>, vector<256x512xf32>, vector<8x512xf32> -> vector<8x512xf32>
    %c2_247 = arith.constant 2 : index
    %c0_248 = arith.constant 0 : index
    %c0_249 = arith.constant 0 : index
    %788 = vector.load %arg2[%c2_247, %c0_248, %c0_249] : memref<3x1x512xf32, #tpu.memory_space<vmem>>, vector<1x1x512xf32>
    %789 = vector.shape_cast %788 : vector<1x1x512xf32> to vector<1x512xf32>
    %790 = vector.broadcast %789 : vector<1x512xf32> to vector<8x512xf32>
    %791 = arith.addf %787, %790 : vector<8x512xf32>
    %792 = vector.extract_strided_slice %791 {offsets = [0, 0], sizes = [8, 128], strides = [1, 1]} : vector<8x512xf32> to vector<8x128xf32>
    %793 = arith.negf %792 : vector<8x128xf32>
    %794 = math.exp %793 : vector<8x128xf32>
    %cst_250 = arith.constant 1.000000e+00 : f32
    %795 = vector.broadcast %cst_250 : f32 to vector<8x128xf32>
    %796 = arith.addf %795, %794 : vector<8x128xf32>
    %797 = arith.divf %795, %796 : vector<8x128xf32>
    %798 = vector.extract_strided_slice %791 {offsets = [0, 128], sizes = [8, 128], strides = [1, 1]} : vector<8x512xf32> to vector<8x128xf32>
    %799 = arith.negf %798 : vector<8x128xf32>
    %800 = math.exp %799 : vector<8x128xf32>
    %cst_251 = arith.constant 1.000000e+00 : f32
    %801 = vector.broadcast %cst_251 : f32 to vector<8x128xf32>
    %802 = arith.addf %801, %800 : vector<8x128xf32>
    %803 = arith.divf %801, %802 : vector<8x128xf32>
    %804 = vector.extract_strided_slice %791 {offsets = [0, 256], sizes = [8, 128], strides = [1, 1]} : vector<8x512xf32> to vector<8x128xf32>
    %805 = math.tanh %804 : vector<8x128xf32>
    %806 = vector.extract_strided_slice %791 {offsets = [0, 384], sizes = [8, 128], strides = [1, 1]} : vector<8x512xf32> to vector<8x128xf32>
    %807 = arith.negf %806 : vector<8x128xf32>
    %808 = math.exp %807 : vector<8x128xf32>
    %cst_252 = arith.constant 1.000000e+00 : f32
    %809 = vector.broadcast %cst_252 : f32 to vector<8x128xf32>
    %810 = arith.addf %809, %808 : vector<8x128xf32>
    %811 = arith.divf %809, %810 : vector<8x128xf32>
    %812 = arith.mulf %803, %712 : vector<8x128xf32>
    %813 = arith.mulf %797, %805 : vector<8x128xf32>
    %814 = arith.addf %812, %813 : vector<8x128xf32>
    %815 = math.tanh %814 : vector<8x128xf32>
    %816 = arith.mulf %811, %815 : vector<8x128xf32>
    %c8_i32 = arith.constant 8 : i32
    %c0_253 = arith.constant 0 : index
    %c0_254 = arith.constant 0 : index
    %817 = vector.load %arg3[%c0_253, %c0_254] : memref<128x64xf32, #tpu.memory_space<vmem>>, vector<128x64xf32>
    %cst_255 = arith.constant dense<0.000000e+00> : vector<8x64xf32>
    %818 = tpu.matmul %816, %817, %cst_255 {dimension_numbers = #tpu.dot_dimension_numbers<[1], [0], [0], [1], [0, 0, 1, 1], [], []>} : vector<8x128xf32>, vector<128x64xf32>, vector<8x64xf32> -> vector<8x64xf32>
    %c0_256 = arith.constant 0 : index
    %c0_257 = arith.constant 0 : index
    %819 = vector.load %arg4[%c0_256, %c0_257] : memref<1x64xf32, #tpu.memory_space<vmem>>, vector<1x64xf32>
    %820 = vector.broadcast %819 : vector<1x64xf32> to vector<8x64xf32>
    %821 = arith.addf %818, %820 : vector<8x64xf32>
    %cst_258 = arith.constant 0.000000e+00 : f32
    %822 = vector.broadcast %cst_258 : f32 to vector<8x64xf32>
    %823 = arith.maximumf %821, %822 : vector<8x64xf32>
    %c0_259 = arith.constant 0 : index
    %c0_260 = arith.constant 0 : index
    %824 = vector.load %arg5[%c0_259, %c0_260] : memref<64x32xf32, #tpu.memory_space<vmem>>, vector<64x32xf32>
    %cst_261 = arith.constant dense<0.000000e+00> : vector<8x32xf32>
    %825 = tpu.matmul %823, %824, %cst_261 {dimension_numbers = #tpu.dot_dimension_numbers<[1], [0], [0], [1], [0, 0, 1, 1], [], []>} : vector<8x64xf32>, vector<64x32xf32>, vector<8x32xf32> -> vector<8x32xf32>
    %c0_262 = arith.constant 0 : index
    %c0_263 = arith.constant 0 : index
    %826 = vector.load %arg6[%c0_262, %c0_263] : memref<1x32xf32, #tpu.memory_space<vmem>>, vector<1x32xf32>
    %827 = vector.broadcast %826 : vector<1x32xf32> to vector<8x32xf32>
    %828 = arith.addf %825, %827 : vector<8x32xf32>
    %cst_264 = arith.constant 0.000000e+00 : f32
    %829 = vector.broadcast %cst_264 : f32 to vector<8x32xf32>
    %830 = arith.maximumf %828, %829 : vector<8x32xf32>
    %c0_265 = arith.constant 0 : index
    %c0_266 = arith.constant 0 : index
    %831 = vector.load %arg7[%c0_265, %c0_266] : memref<32x1xf32, #tpu.memory_space<vmem>>, vector<32x1xf32>
    %cst_267 = arith.constant dense<0.000000e+00> : vector<8x1xf32>
    %832 = tpu.matmul %830, %831, %cst_267 {dimension_numbers = #tpu.dot_dimension_numbers<[1], [0], [0], [1], [0, 0, 1, 1], [], []>} : vector<8x32xf32>, vector<32x1xf32>, vector<8x1xf32> -> vector<8x1xf32>
    %c0_268 = arith.constant 0 : index
    %c0_269 = arith.constant 0 : index
    %833 = vector.load %arg8[%c0_268, %c0_269] : memref<1x1xf32, #tpu.memory_space<vmem>>, vector<1x1xf32>
    %834 = vector.broadcast %833 : vector<1x1xf32> to vector<8x1xf32>
    %835 = arith.addf %832, %834 : vector<8x1xf32>
    %836 = math.tanh %835 : vector<8x1xf32>
    %c0_270 = arith.constant 0 : index
    %c0_271 = arith.constant 0 : index
    %837 = vector.load %arg9[%c0_270, %c0_271] : memref<8x1xf32, #tpu.memory_space<vmem>>, vector<8x1xf32>
    tpu.vector_store %arg9[%c0_270, %c0_271], %836 {strides = array<i32>} : memref<8x1xf32, #tpu.memory_space<vmem>>, vector<8x1xf32>,
    return
  }
}

</mosaic_0001>

<llo_original>
// kernel: tpu_custom_call.1
$region0: #{tpu_custom_call.1}
  #allocation0 [shape = 'u32[]', space=smem, size = 0x4, offset = 0x4, fixed_abs, tag = 'smem constant byte address 0x4 - core index']
  #allocation1 [shape = 'u32[144,128]{1,0:T(1,128)}', space=vmem, size = 0x12000, scoped, tag = 'internal scratch']
  #allocation2 [shape = 'f32[1,1]{1,0:T(1,128)S(1)}', space=vmem, size = 0x200, scoped, tag = 'scoped memory for tpu_custom_call.1']
  %s0 = inlined_call_operand.hbm [shape: f32[8,8,128], index: 0, kind: input, shape index: {}]
  %s1 = inlined_call_operand.hbm [shape: f32[3,256,512], index: 1, kind: input, shape index: {}]
  %s2 = inlined_call_operand.hbm [shape: f32[3,1,512], index: 2, kind: input, shape index: {}]
  %s3 = inlined_call_operand.vmem [shape: f32[128,64], index: 3, kind: input, shape index: {}]
  %s4 = inlined_call_operand.hbm [shape: f32[1,64], index: 4, kind: input, shape index: {}]
  %s5 = inlined_call_operand.vmem [shape: f32[64,32], index: 5, kind: input, shape index: {}]
  %s6 = inlined_call_operand.hbm [shape: f32[1,32], index: 6, kind: input, shape index: {}]
  %s7 = inlined_call_operand.vmem [shape: f32[32,1], index: 7, kind: input, shape index: {}]
  %s8 = inlined_call_operand.<no memory space> [shape: f32[1,1], index: 8, kind: input, shape index: {}]
  %s9 = inlined_call_operand.vmem [shape: f32[8,1], index: 9, kind: output, shape index: {}]
  %s10 = sld [smem:[#allocation0]]
  $region66: #{tpu_custom_call.1} parent=0
    _
  %s12 = ssub.s32 1, %s10
  %s13 = scalar_select 0, %s12, %s10
  %v14 = vstv %s8
  %15 = vst [vmem:[#allocation2] sm:$0x1] %v14
  $region1: #{tpu_custom_call.1} parent=0
    #allocation3 [shape = 'u8[32768]{0}', space=vmem, size = 0x8000, scoped, tag = 'input window, operand 0, single buffered']
    #allocation4 [shape = 's32[1]{0}', space=sflag, size = 0x4, scoped, tag = 'scoped memory for tpu_custom_call.1']
    #allocation5 [shape = 'u8[1572864]{0}', space=vmem, size = 0x180000, scoped, tag = 'input window, operand 1, single buffered']
    #allocation6 [shape = 's32[1]{0}', space=sflag, size = 0x4, scoped, tag = 'scoped memory for tpu_custom_call.1']
    #allocation7 [shape = 'u8[6144]{0}', space=vmem, size = 0x1800, scoped, tag = 'input window, operand 2, single buffered']
    #allocation8 [shape = 'u8[512]{0}', space=vmem, size = 0x400, scoped, tag = 'input window, operand 4, single buffered']
    #allocation9 [shape = 's32[1]{0}', space=sflag, size = 0x4, scoped, tag = 'scoped memory for tpu_custom_call.1']
    #allocation10 [shape = 'u8[512]{0}', space=vmem, size = 0x400, scoped, tag = 'input window, operand 6, single buffered']
    %16 = vsyncpa [#allocation4], 0
    %17 = vsyncpa [#allocation6], 0
    %18 = vsyncpa [#allocation9], 0
    // Predicated region
    $region2: #{tpu_custom_call.1} parent=1 // pred_check
      _
    $region3: #{tpu_custom_call.1} parent=1 // pred_check_branch
      %20 = sbr.rel (0) target = $region5
    $region4: #{tpu_custom_call.1} parent=1 // pred_region
      %s22 = ssub.s32 1024, 1024
      %23 = vsyncadd [#allocation4], %s22
      %s24 = sshll.u32 [#allocation3], 4
      %s25 = int_to_ptr.vmem [resolvable:$true] %s24
      %30 = dma.hbm_to_vmem [thread:$0]  %s0, 1024, %s25, [#allocation4], 128, 128, 8
    $region5: #{tpu_custom_call.1} parent=1 // pred_fallthru
      _
    // Predicated region
    $region6: #{tpu_custom_call.1} parent=1 // pred_check
      _
    $region7: #{tpu_custom_call.1} parent=1 // pred_check_branch
      %32 = sbr.rel (0) target = $region9
    $region8: #{tpu_custom_call.1} parent=1 // pred_region
      %s34 = ssub.s32 49152, 49152
      %35 = vsyncadd [#allocation6], %s34
      %s36 = sshll.u32 [#allocation5], 4
      %s37 = int_to_ptr.vmem [resolvable:$true] %s36
      %42 = dma.hbm_to_vmem [thread:$0]  %s1, 49152, %s37, [#allocation6], 512, 512, 32
    $region9: #{tpu_custom_call.1} parent=1 // pred_fallthru
      _
    // Predicated region
    $region10: #{tpu_custom_call.1} parent=1 // pred_check
      _
    $region11: #{tpu_custom_call.1} parent=1 // pred_check_branch
      %44 = sbr.rel (0) target = $region13
    $region12: #{tpu_custom_call.1} parent=1 // pred_region
      %s46 = ssub.s32 192, 192
      %47 = vsyncadd [#allocation6], %s46
      %s48 = sshll.u32 [#allocation7], 4
      %s49 = int_to_ptr.vmem [resolvable:$true] %s48
      %54 = dma.hbm_to_vmem [thread:$0]  %s2, 192, %s49, [#allocation6], 64, 64, 4
    $region13: #{tpu_custom_call.1} parent=1 // pred_fallthru
      _
    // Predicated region
    $region14: #{tpu_custom_call.1} parent=1 // pred_check
      _
    $region15: #{tpu_custom_call.1} parent=1 // pred_check_branch
      %56 = sbr.rel (0) target = $region17
    $region16: #{tpu_custom_call.1} parent=1 // pred_region
      _
    $region17: #{tpu_custom_call.1} parent=1 // pred_fallthru
      _
    // Predicated region
    $region18: #{tpu_custom_call.1} parent=1 // pred_check
      _
    $region19: #{tpu_custom_call.1} parent=1 // pred_check_branch
      %58 = sbr.rel (0) target = $region21
    $region20: #{tpu_custom_call.1} parent=1 // pred_region
      %s60 = ssub.s32 16, 16
      %61 = vsyncadd [#allocation9], %s60
      %s63 = sshll.u32 [#allocation8], 4
      %s64 = int_to_ptr.vmem [resolvable:$true] %s63
      %66 = dma.hbm_to_vmem [thread:$0]  %s4, 16, %s64, [#allocation9]
    $region21: #{tpu_custom_call.1} parent=1 // pred_fallthru
      _
    // Predicated region
    $region22: #{tpu_custom_call.1} parent=1 // pred_check
      _
    $region23: #{tpu_custom_call.1} parent=1 // pred_check_branch
      %68 = sbr.rel (0) target = $region25
    $region24: #{tpu_custom_call.1} parent=1 // pred_region
      _
    $region25: #{tpu_custom_call.1} parent=1 // pred_fallthru
      _
    // Predicated region
    $region26: #{tpu_custom_call.1} parent=1 // pred_check
      _
    $region27: #{tpu_custom_call.1} parent=1 // pred_check_branch
      %70 = sbr.rel (0) target = $region29
    $region28: #{tpu_custom_call.1} parent=1 // pred_region
      %s72 = ssub.s32 16, 16
      %73 = vsyncadd [#allocation9], %s72
      %s75 = sshll.u32 [#allocation10], 4
      %s76 = int_to_ptr.vmem [resolvable:$true] %s75
      %78 = dma.hbm_to_vmem [thread:$0]  %s6, 16, %s76, [#allocation9]
    $region29: #{tpu_custom_call.1} parent=1 // pred_fallthru
      _
    // Predicated region
    $region30: #{tpu_custom_call.1} parent=1 // pred_check
      _
    $region31: #{tpu_custom_call.1} parent=1 // pred_check_branch
      %80 = sbr.rel (0) target = $region33
    $region32: #{tpu_custom_call.1} parent=1 // pred_region
      _
    $region33: #{tpu_custom_call.1} parent=1 // pred_fallthru
      _
    // Predicated region
    $region34: #{tpu_custom_call.1} parent=1 // pred_check
      _
    $region35: #{tpu_custom_call.1} parent=1 // pred_check_branch
      %82 = sbr.rel (0) target = $region37
    $region36: #{tpu_custom_call.1} parent=1 // pred_region
      _
    $region37: #{tpu_custom_call.1} parent=1 // pred_fallthru
      _
    // Predicated region
    $region38: #{tpu_custom_call.1} parent=1 // pred_check
      _
    $region39: #{tpu_custom_call.1} parent=1 // pred_check_branch
      %84 = sbr.rel (0) target = $region41
    $region40: #{tpu_custom_call.1} parent=1 // pred_region
      %85 = dma.done [#allocation4], 1024
    $region41: #{tpu_custom_call.1} parent=1 // pred_fallthru
      _
    // Predicated region
    $region42: #{tpu_custom_call.1} parent=1 // pred_check
      _
    $region43: #{tpu_custom_call.1} parent=1 // pred_check_branch
      %87 = sbr.rel (0) target = $region45
    $region44: #{tpu_custom_call.1} parent=1 // pred_region
      %88 = dma.done [#allocation6], 49152
    $region45: #{tpu_custom_call.1} parent=1 // pred_fallthru
      _
    // Predicated region
    $region46: #{tpu_custom_call.1} parent=1 // pred_check
      _
    $region47: #{tpu_custom_call.1} parent=1 // pred_check_branch
      %90 = sbr.rel (0) target = $region49
    $region48: #{tpu_custom_call.1} parent=1 // pred_region
      %91 = dma.done [#allocation6], 192
    $region49: #{tpu_custom_call.1} parent=1 // pred_fallthru
      _
    // Predicated region
    $region50: #{tpu_custom_call.1} parent=1 // pred_check
      _
    $region51: #{tpu_custom_call.1} parent=1 // pred_check_branch
      %93 = sbr.rel (0) target = $region53
    $region52: #{tpu_custom_call.1} parent=1 // pred_region
      %94 = dma.done [#allocation9], 16
    $region53: #{tpu_custom_call.1} parent=1 // pred_fallthru
      _
    // Predicated region
    $region54: #{tpu_custom_call.1} parent=1 // pred_check
      _
    $region55: #{tpu_custom_call.1} parent=1 // pred_check_branch
      %96 = sbr.rel (0) target = $region57
    $region56: #{tpu_custom_call.1} parent=1 // pred_region
      %97 = dma.done [#allocation9], 16
    $region57: #{tpu_custom_call.1} parent=1 // pred_fallthru
      _
    %v98 = vld [vmem:[#allocation3] sm:$0xff]
    %v99 = vld [vmem:[#allocation5] sm:$0xff]
    %v100 = vld [vmem:[#allocation5 + $0x8] sm:$0xff]
    %v101 = vld [vmem:[#allocation5 + $0x10] sm:$0xff]
    %v102 = vld [vmem:[#allocation5 + $0x18] sm:$0xff]
    %v103 = vld [vmem:[#allocation5 + $0x20] sm:$0xff]
    %v104 = vld [vmem:[#allocation5 + $0x28] sm:$0xff]
    %v105 = vld [vmem:[#allocation5 + $0x30] sm:$0xff]
    %v106 = vld [vmem:[#allocation5 + $0x38] sm:$0xff]
    %v107 = vld [vmem:[#allocation5 + $0x40] sm:$0xff]
    %v108 = vld [vmem:[#allocation5 + $0x48] sm:$0xff]
    %v109 = vld [vmem:[#allocation5 + $0x50] sm:$0xff]
    %v110 = vld [vmem:[#allocation5 + $0x58] sm:$0xff]
    %v111 = vld [vmem:[#allocation5 + $0x60] sm:$0xff]
    %v112 = vld [vmem:[#allocation5 + $0x68] sm:$0xff]
    %v113 = vld [vmem:[#allocation5 + $0x70] sm:$0xff]
    %v114 = vld [vmem:[#allocation5 + $0x78] sm:$0xff]
    %v115 = vld [vmem:[#allocation5 + $0x80] sm:$0xff]
    %v116 = vld [vmem:[#allocation5 + $0x88] sm:$0xff]
    %v117 = vld [vmem:[#allocation5 + $0x90] sm:$0xff]
    %v118 = vld [vmem:[#allocation5 + $0x98] sm:$0xff]
    %v119 = vld [vmem:[#allocation5 + $0xa0] sm:$0xff]
    %v120 = vld [vmem:[#allocation5 + $0xa8] sm:$0xff]
    %v121 = vld [vmem:[#allocation5 + $0xb0] sm:$0xff]
    %v122 = vld [vmem:[#allocation5 + $0xb8] sm:$0xff]
    %v123 = vld [vmem:[#allocation5 + $0xc0] sm:$0xff]
    %v124 = vld [vmem:[#allocation5 + $0xc8] sm:$0xff]
    %v125 = vld [vmem:[#allocation5 + $0xd0] sm:$0xff]
    %v126 = vld [vmem:[#allocation5 + $0xd8] sm:$0xff]
    %v127 = vld [vmem:[#allocation5 + $0xe0] sm:$0xff]
    %v128 = vld [vmem:[#allocation5 + $0xe8] sm:$0xff]
    %v129 = vld [vmem:[#allocation5 + $0xf0] sm:$0xff]
    %v130 = vld [vmem:[#allocation5 + $0xf8] sm:$0xff]
    %v131 = vld [vmem:[#allocation5 + $0x100] sm:$0xff]
    %v132 = vld [vmem:[#allocation5 + $0x108] sm:$0xff]
    %v133 = vld [vmem:[#allocation5 + $0x110] sm:$0xff]
    %v134 = vld [vmem:[#allocation5 + $0x118] sm:$0xff]
    %v135 = vld [vmem:[#allocation5 + $0x120] sm:$0xff]
    %v136 = vld [vmem:[#allocation5 + $0x128] sm:$0xff]
    %v137 = vld [vmem:[#allocation5 + $0x130] sm:$0xff]
    %v138 = vld [vmem:[#allocation5 + $0x138] sm:$0xff]
    %v139 = vld [vmem:[#allocation5 + $0x140] sm:$0xff]
    %v140 = vld [vmem:[#allocation5 + $0x148] sm:$0xff]
    %v141 = vld [vmem:[#allocation5 + $0x150] sm:$0xff]
    %v142 = vld [vmem:[#allocation5 + $0x158] sm:$0xff]
    %v143 = vld [vmem:[#allocation5 + $0x160] sm:$0xff]
    %v144 = vld [vmem:[#allocation5 + $0x168] sm:$0xff]
    %v145 = vld [vmem:[#allocation5 + $0x170] sm:$0xff]
    %v146 = vld [vmem:[#allocation5 + $0x178] sm:$0xff]
    %v147 = vld [vmem:[#allocation5 + $0x180] sm:$0xff]
    %v148 = vld [vmem:[#allocation5 + $0x188] sm:$0xff]
    %v149 = vld [vmem:[#allocation5 + $0x190] sm:$0xff]
    %v150 = vld [vmem:[#allocation5 + $0x198] sm:$0xff]
    %v151 = vld [vmem:[#allocation5 + $0x1a0] sm:$0xff]
    %v152 = vld [vmem:[#allocation5 + $0x1a8] sm:$0xff]
    %v153 = vld [vmem:[#allocation5 + $0x1b0] sm:$0xff]
    %v154 = vld [vmem:[#allocation5 + $0x1b8] sm:$0xff]
    %v155 = vld [vmem:[#allocation5 + $0x1c0] sm:$0xff]
    %v156 = vld [vmem:[#allocation5 + $0x1c8] sm:$0xff]
    %v157 = vld [vmem:[#allocation5 + $0x1d0] sm:$0xff]
    %v158 = vld [vmem:[#allocation5 + $0x1d8] sm:$0xff]
    %v159 = vld [vmem:[#allocation5 + $0x1e0] sm:$0xff]
    %v160 = vld [vmem:[#allocation5 + $0x1e8] sm:$0xff]
    %v161 = vld [vmem:[#allocation5 + $0x1f0] sm:$0xff]
    %v162 = vld [vmem:[#allocation5 + $0x1f8] sm:$0xff]
    %v163 = vld [vmem:[#allocation5 + $0x200] sm:$0xff]
    %v164 = vld [vmem:[#allocation5 + $0x208] sm:$0xff]
    %v165 = vld [vmem:[#allocation5 + $0x210] sm:$0xff]
    %v166 = vld [vmem:[#allocation5 + $0x218] sm:$0xff]
    %v167 = vld [vmem:[#allocation5 + $0x220] sm:$0xff]
    %v168 = vld [vmem:[#allocation5 + $0x228] sm:$0xff]
    %v169 = vld [vmem:[#allocation5 + $0x230] sm:$0xff]
    %v170 = vld [vmem:[#allocation5 + $0x238] sm:$0xff]
    %v171 = vld [vmem:[#allocation5 + $0x240] sm:$0xff]
    %v172 = vld [vmem:[#allocation5 + $0x248] sm:$0xff]
    %v173 = vld [vmem:[#allocation5 + $0x250] sm:$0xff]
    %v174 = vld [vmem:[#allocation5 + $0x258] sm:$0xff]
    %v175 = vld [vmem:[#allocation5 + $0x260] sm:$0xff]
    %v176 = vld [vmem:[#allocation5 + $0x268] sm:$0xff]
    %v177 = vld [vmem:[#allocation5 + $0x270] sm:$0xff]
    %v178 = vld [vmem:[#allocation5 + $0x278] sm:$0xff]
    %v179 = vld [vmem:[#allocation5 + $0x280] sm:$0xff]
    %v180 = vld [vmem:[#allocation5 + $0x288] sm:$0xff]
    %v181 = vld [vmem:[#allocation5 + $0x290] sm:$0xff]
    %v182 = vld [vmem:[#allocation5 + $0x298] sm:$0xff]
    %v183 = vld [vmem:[#allocation5 + $0x2a0] sm:$0xff]
    %v184 = vld [vmem:[#allocation5 + $0x2a8] sm:$0xff]
    %v185 = vld [vmem:[#allocation5 + $0x2b0] sm:$0xff]
    %v186 = vld [vmem:[#allocation5 + $0x2b8] sm:$0xff]
    %v187 = vld [vmem:[#allocation5 + $0x2c0] sm:$0xff]
    %v188 = vld [vmem:[#allocation5 + $0x2c8] sm:$0xff]
    %v189 = vld [vmem:[#allocation5 + $0x2d0] sm:$0xff]
    %v190 = vld [vmem:[#allocation5 + $0x2d8] sm:$0xff]
    %v191 = vld [vmem:[#allocation5 + $0x2e0] sm:$0xff]
    %v192 = vld [vmem:[#allocation5 + $0x2e8] sm:$0xff]
    %v193 = vld [vmem:[#allocation5 + $0x2f0] sm:$0xff]
    %v194 = vld [vmem:[#allocation5 + $0x2f8] sm:$0xff]
    %v195 = vld [vmem:[#allocation5 + $0x300] sm:$0xff]
    %v196 = vld [vmem:[#allocation5 + $0x308] sm:$0xff]
    %v197 = vld [vmem:[#allocation5 + $0x310] sm:$0xff]
    %v198 = vld [vmem:[#allocation5 + $0x318] sm:$0xff]
    %v199 = vld [vmem:[#allocation5 + $0x320] sm:$0xff]
    %v200 = vld [vmem:[#allocation5 + $0x328] sm:$0xff]
    %v201 = vld [vmem:[#allocation5 + $0x330] sm:$0xff]
    %v202 = vld [vmem:[#allocation5 + $0x338] sm:$0xff]
    %v203 = vld [vmem:[#allocation5 + $0x340] sm:$0xff]
    %v204 = vld [vmem:[#allocation5 + $0x348] sm:$0xff]
    %v205 = vld [vmem:[#allocation5 + $0x350] sm:$0xff]
    %v206 = vld [vmem:[#allocation5 + $0x358] sm:$0xff]
    %v207 = vld [vmem:[#allocation5 + $0x360] sm:$0xff]
    %v208 = vld [vmem:[#allocation5 + $0x368] sm:$0xff]
    %v209 = vld [vmem:[#allocation5 + $0x370] sm:$0xff]
    %v210 = vld [vmem:[#allocation5 + $0x378] sm:$0xff]
    %v211 = vld [vmem:[#allocation5 + $0x380] sm:$0xff]
    %v212 = vld [vmem:[#allocation5 + $0x388] sm:$0xff]
    %v213 = vld [vmem:[#allocation5 + $0x390] sm:$0xff]
    %v214 = vld [vmem:[#allocation5 + $0x398] sm:$0xff]
    %v215 = vld [vmem:[#allocation5 + $0x3a0] sm:$0xff]
    %v216 = vld [vmem:[#allocation5 + $0x3a8] sm:$0xff]
    %v217 = vld [vmem:[#allocation5 + $0x3b0] sm:$0xff]
    %v218 = vld [vmem:[#allocation5 + $0x3b8] sm:$0xff]
    %v219 = vld [vmem:[#allocation5 + $0x3c0] sm:$0xff]
    %v220 = vld [vmem:[#allocation5 + $0x3c8] sm:$0xff]
    %v221 = vld [vmem:[#allocation5 + $0x3d0] sm:$0xff]
    %v222 = vld [vmem:[#allocation5 + $0x3d8] sm:$0xff]
    %v223 = vld [vmem:[#allocation5 + $0x3e0] sm:$0xff]
    %v224 = vld [vmem:[#allocation5 + $0x3e8] sm:$0xff]
    %v225 = vld [vmem:[#allocation5 + $0x3f0] sm:$0xff]
    %v226 = vld [vmem:[#allocation5 + $0x3f8] sm:$0xff]
    %v227 = vld [vmem:[#allocation7] sm:$0xf]
    %v229 = vlaneseq
    %v230 = vshrl.u32 %v229, 7
    %v231 = vsub.s32 0, %v230
    %v232 = vrot.slane %v227, %v231
    %v233 = vlaneseq
    %v234 = vshrl.u32 %v233, 7
    %v235 = vsub.s32 1, %v234
    %v236 = vrot.slane %v227, %v235
    %v237 = vlaneseq
    %v238 = vshrl.u32 %v237, 7
    %v239 = vsub.s32 2, %v238
    %v240 = vrot.slane %v227, %v239
    %v241 = vlaneseq
    %v242 = vshrl.u32 %v241, 7
    %v243 = vsub.s32 3, %v242
    %v244 = vrot.slane %v227, %v243
    %249 = vmatprep.subr.mxu0 %v100
    %250 = vmatpush1.msra.mxu0 %v99
    %251 = vmatprep.subr.mxu0 %v104
    %252 = vmatpush1.msra.mxu0 %v103
    %253 = vmatprep.subr.mxu0 %v108
    %254 = vmatpush1.msra.mxu0 %v107
    %255 = vmatprep.subr.mxu0 %v112
    %256 = vmatpush1.msra.mxu0 %v111
    %257 = vmatprep.subr.mxu0 %v116
    %258 = vmatpush1.msra.mxu0 %v115
    %259 = vmatprep.subr.mxu0 %v120
    %260 = vmatpush1.msra.mxu0 %v119
    %261 = vmatprep.subr.mxu0 %v124
    %262 = vmatpush1.msra.mxu0 %v123
    %263 = vmatprep.subr.mxu0 %v128
    %264 = vmatpush1.msra.mxu0 %v127
    %265 = vmatprep.subr.mxu0 %v132
    %266 = vmatpush1.msra.mxu0 %v131
    %267 = vmatprep.subr.mxu0 %v136
    %268 = vmatpush1.msra.mxu0 %v135
    %269 = vmatprep.subr.mxu0 %v140
    %270 = vmatpush1.msra.mxu0 %v139
    %271 = vmatprep.subr.mxu0 %v144
    %272 = vmatpush1.msra.mxu0 %v143
    %273 = vmatprep.subr.mxu0 %v148
    %274 = vmatpush1.msra.mxu0 %v147
    %275 = vmatprep.subr.mxu0 %v152
    %276 = vmatpush1.msra.mxu0 %v151
    %277 = vmatprep.subr.mxu0 %v156
    %278 = vmatpush1.msra.mxu0 %v155
    %279 = vmatprep.subr.mxu0 %v160
    %280 = vmatpush1.msra.mxu0 %v159
    %281 = vmatprep.subr.mxu0 %v164
    %282 = vmatpush1.msra.mxu0 %v163
    %283 = vmatprep.subr.mxu0 %v168
    %284 = vmatpush1.msra.mxu0 %v167
    %285 = vmatprep.subr.mxu0 %v172
    %286 = vmatpush1.msra.mxu0 %v171
    %287 = vmatprep.subr.mxu0 %v176
    %288 = vmatpush1.msra.mxu0 %v175
    %289 = vmatprep.subr.mxu0 %v180
    %290 = vmatpush1.msra.mxu0 %v179
    %291 = vmatprep.subr.mxu0 %v184
    %292 = vmatpush1.msra.mxu0 %v183
    %293 = vmatprep.subr.mxu0 %v188
    %294 = vmatpush1.msra.mxu0 %v187
    %295 = vmatprep.subr.mxu0 %v192
    %296 = vmatpush1.msra.mxu0 %v191
    %297 = vmatprep.subr.mxu0 %v196
    %298 = vmatpush1.msra.mxu0 %v195
    %299 = vmatprep.subr.mxu0 %v200
    %300 = vmatpush1.msra.mxu0 %v199
    %301 = vmatprep.subr.mxu0 %v204
    %302 = vmatpush1.msra.mxu0 %v203
    %303 = vmatprep.subr.mxu0 %v208
    %304 = vmatpush1.msra.mxu0 %v207
    %305 = vmatprep.subr.mxu0 %v212
    %306 = vmatpush1.msra.mxu0 %v211
    %307 = vmatprep.subr.mxu0 %v216
    %308 = vmatpush1.msra.mxu0 %v215
    %309 = vmatprep.subr.mxu0 %v220
    %310 = vmatpush1.msra.mxu0 %v219
    %311 = vmatprep.subr.mxu0 %v224
    %312 = vmatpush1.msra.mxu0 %v223
    %313 = vmatprep.mubr.f32.mxu0 0.0
    %314 = vmatmul.mubr.f32.gmra.mrb[0].mxu0 %v98
    %v315 = vpop.f32.mrb[0].mxu0
    %v316 = vadd.f32 %v232, %v315
    %v317 = vpop.f32.mrb[0].mxu0
    %v318 = vadd.f32 %v236, %v317
    %319 = vdwg.mxu0
    %320 = vmatprep.subr.mxu0 %v102
    %321 = vmatpush1.msra.mxu0 %v101
    %322 = vmatprep.subr.mxu0 %v106
    %323 = vmatpush1.msra.mxu0 %v105
    %324 = vmatprep.subr.mxu0 %v110
    %325 = vmatpush1.msra.mxu0 %v109
    %326 = vmatprep.subr.mxu0 %v114
    %327 = vmatpush1.msra.mxu0 %v113
    %328 = vmatprep.subr.mxu0 %v118
    %329 = vmatpush1.msra.mxu0 %v117
    %330 = vmatprep.subr.mxu0 %v122
    %331 = vmatpush1.msra.mxu0 %v121
    %332 = vmatprep.subr.mxu0 %v126
    %333 = vmatpush1.msra.mxu0 %v125
    %334 = vmatprep.subr.mxu0 %v130
    %335 = vmatpush1.msra.mxu0 %v129
    %336 = vmatprep.subr.mxu0 %v134
    %337 = vmatpush1.msra.mxu0 %v133
    %338 = vmatprep.subr.mxu0 %v138
    %339 = vmatpush1.msra.mxu0 %v137
    %340 = vmatprep.subr.mxu0 %v142
    %341 = vmatpush1.msra.mxu0 %v141
    %342 = vmatprep.subr.mxu0 %v146
    %343 = vmatpush1.msra.mxu0 %v145
    %344 = vmatprep.subr.mxu0 %v150
    %345 = vmatpush1.msra.mxu0 %v149
    %346 = vmatprep.subr.mxu0 %v154
    %347 = vmatpush1.msra.mxu0 %v153
    %348 = vmatprep.subr.mxu0 %v158
    %349 = vmatpush1.msra.mxu0 %v157
    %350 = vmatprep.subr.mxu0 %v162
    %351 = vmatpush1.msra.mxu0 %v161
    %352 = vmatprep.subr.mxu0 %v166
    %353 = vmatpush1.msra.mxu0 %v165
    %354 = vmatprep.subr.mxu0 %v170
    %355 = vmatpush1.msra.mxu0 %v169
    %356 = vmatprep.subr.mxu0 %v174
    %357 = vmatpush1.msra.mxu0 %v173
    %358 = vmatprep.subr.mxu0 %v178
    %359 = vmatpush1.msra.mxu0 %v177
    %360 = vmatprep.subr.mxu0 %v182
    %361 = vmatpush1.msra.mxu0 %v181
    %362 = vmatprep.subr.mxu0 %v186
    %363 = vmatpush1.msra.mxu0 %v185
    %364 = vmatprep.subr.mxu0 %v190
    %365 = vmatpush1.msra.mxu0 %v189
    %366 = vmatprep.subr.mxu0 %v194
    %367 = vmatpush1.msra.mxu0 %v193
    %368 = vmatprep.subr.mxu0 %v198
    %369 = vmatpush1.msra.mxu0 %v197
    %370 = vmatprep.subr.mxu0 %v202
    %371 = vmatpush1.msra.mxu0 %v201
    %372 = vmatprep.subr.mxu0 %v206
    %373 = vmatpush1.msra.mxu0 %v205
    %374 = vmatprep.subr.mxu0 %v210
    %375 = vmatpush1.msra.mxu0 %v209
    %376 = vmatprep.subr.mxu0 %v214
    %377 = vmatpush1.msra.mxu0 %v213
    %378 = vmatprep.subr.mxu0 %v218
    %379 = vmatpush1.msra.mxu0 %v217
    %380 = vmatprep.subr.mxu0 %v222
    %381 = vmatpush1.msra.mxu0 %v221
    %382 = vmatprep.subr.mxu0 %v226
    %383 = vmatpush1.msra.mxu0 %v225
    %384 = vmatprep.mubr.f32.mxu0 0.0
    %385 = vmatmul.mubr.f32.gmra.mrb[0].mxu0 %v98
    %v386 = vpop.f32.mrb[0].mxu0
    %v387 = vadd.f32 %v240, %v386
    %v388 = vpop.f32.mrb[0].mxu0
    %v389 = vadd.f32 %v244, %v388
    %390 = vdwg.mxu0
    %v391 = vxor.u32 %v316, 2147483648
    %v392 = vmul.f32 %v391, 1.442695
    %v393 = vpow.pop %v392
    %v394 = vadd.f32 %v393, 1.0
    %v395 = vrcp.pop %v394
    %v396 = vmul.f32 1.0, %v395
    %v397 = vxor.u32 %v318, 2147483648
    %v398 = vmul.f32 %v397, 1.442695
    %v399 = vpow.pop %v398
    %v400 = vadd.f32 %v399, 1.0
    %v401 = vrcp.pop %v400
    %v402 = vmul.f32 1.0, %v401
    %v403 = vtanh.pop %v387
    %v404 = vxor.u32 %v389, 2147483648
    %v405 = vmul.f32 %v404, 1.442695
    %v406 = vpow.pop %v405
    %v407 = vadd.f32 %v406, 1.0
    %v408 = vrcp.pop %v407
    %v409 = vmul.f32 1.0, %v408
    %v410 = vmul.f32 %v402, 0.0
    %v411 = vmul.f32 %v396, %v403
    %v412 = vadd.f32 %v410, %v411
    %v413 = vtanh.pop %v412
    %v414 = vmul.f32 %v409, %v413
    %s415 = scalar_lea.vmem [#allocation5], 1024
    %v416 = vld [vmem:[%s415] sm:$0xff]
    %v417 = vld [vmem:[%s415 + $0x8] sm:$0xff]
    %v418 = vld [vmem:[%s415 + $0x10] sm:$0xff]
    %v419 = vld [vmem:[%s415 + $0x18] sm:$0xff]
    %v420 = vld [vmem:[%s415 + $0x20] sm:$0xff]
    %v421 = vld [vmem:[%s415 + $0x28] sm:$0xff]
    %v422 = vld [vmem:[%s415 + $0x30] sm:$0xff]
    %v423 = vld [vmem:[%s415 + $0x38] sm:$0xff]
    %v424 = vld [vmem:[%s415 + $0x40] sm:$0xff]
    %v425 = vld [vmem:[%s415 + $0x48] sm:$0xff]
    %v426 = vld [vmem:[%s415 + $0x50] sm:$0xff]
    %v427 = vld [vmem:[%s415 + $0x58] sm:$0xff]
    %v428 = vld [vmem:[%s415 + $0x60] sm:$0xff]
    %v429 = vld [vmem:[%s415 + $0x68] sm:$0xff]
    %v430 = vld [vmem:[%s415 + $0x70] sm:$0xff]
    %v431 = vld [vmem:[%s415 + $0x78] sm:$0xff]
    %v432 = vld [vmem:[%s415 + $0x80] sm:$0xff]
    %v433 = vld [vmem:[%s415 + $0x88] sm:$0xff]
    %v434 = vld [vmem:[%s415 + $0x90] sm:$0xff]
    %v435 = vld [vmem:[%s415 + $0x98] sm:$0xff]
    %v436 = vld [vmem:[%s415 + $0xa0] sm:$0xff]
    %v437 = vld [vmem:[%s415 + $0xa8] sm:$0xff]
    %v438 = vld [vmem:[%s415 + $0xb0] sm:$0xff]
    %v439 = vld [vmem:[%s415 + $0xb8] sm:$0xff]
    %v440 = vld [vmem:[%s415 + $0xc0] sm:$0xff]
    %v441 = vld [vmem:[%s415 + $0xc8] sm:$0xff]
    %v442 = vld [vmem:[%s415 + $0xd0] sm:$0xff]
    %v443 = vld [vmem:[%s415 + $0xd8] sm:$0xff]
    %v444 = vld [vmem:[%s415 + $0xe0] sm:$0xff]
    %v445 = vld [vmem:[%s415 + $0xe8] sm:$0xff]
    %v446 = vld [vmem:[%s415 + $0xf0] sm:$0xff]
    %v447 = vld [vmem:[%s415 + $0xf8] sm:$0xff]
    %v448 = vld [vmem:[%s415 + $0x100] sm:$0xff]
    %v449 = vld [vmem:[%s415 + $0x108] sm:$0xff]
    %v450 = vld [vmem:[%s415 + $0x110] sm:$0xff]
    %v451 = vld [vmem:[%s415 + $0x118] sm:$0xff]
    %v452 = vld [vmem:[%s415 + $0x120] sm:$0xff]
    %v453 = vld [vmem:[%s415 + $0x128] sm:$0xff]
    %v454 = vld [vmem:[%s415 + $0x130] sm:$0xff]
    %v455 = vld [vmem:[%s415 + $0x138] sm:$0xff]
    %v456 = vld [vmem:[%s415 + $0x140] sm:$0xff]
    %v457 = vld [vmem:[%s415 + $0x148] sm:$0xff]
    %v458 = vld [vmem:[%s415 + $0x150] sm:$0xff]
    %v459 = vld [vmem:[%s415 + $0x158] sm:$0xff]
    %v460 = vld [vmem:[%s415 + $0x160] sm:$0xff]
    %v461 = vld [vmem:[%s415 + $0x168] sm:$0xff]
    %v462 = vld [vmem:[%s415 + $0x170] sm:$0xff]
    %v463 = vld [vmem:[%s415 + $0x178] sm:$0xff]
    %v464 = vld [vmem:[%s415 + $0x180] sm:$0xff]
    %v465 = vld [vmem:[%s415 + $0x188] sm:$0xff]
    %v466 = vld [vmem:[%s415 + $0x190] sm:$0xff]
    %v467 = vld [vmem:[%s415 + $0x198] sm:$0xff]
    %v468 = vld [vmem:[%s415 + $0x1a0] sm:$0xff]
    %v469 = vld [vmem:[%s415 + $0x1a8] sm:$0xff]
    %v470 = vld [vmem:[%s415 + $0x1b0] sm:$0xff]
    %v471 = vld [vmem:[%s415 + $0x1b8] sm:$0xff]
    %v472 = vld [vmem:[%s415 + $0x1c0] sm:$0xff]
    %v473 = vld [vmem:[%s415 + $0x1c8] sm:$0xff]
    %v474 = vld [vmem:[%s415 + $0x1d0] sm:$0xff]
    %v475 = vld [vmem:[%s415 + $0x1d8] sm:$0xff]
    %v476 = vld [vmem:[%s415 + $0x1e0] sm:$0xff]
    %v477 = vld [vmem:[%s415 + $0x1e8] sm:$0xff]
    %v478 = vld [vmem:[%s415 + $0x1f0] sm:$0xff]
    %v479 = vld [vmem:[%s415 + $0x1f8] sm:$0xff]
    %v480 = vld [vmem:[%s415 + $0x200] sm:$0xff]
    %v481 = vld [vmem:[%s415 + $0x208] sm:$0xff]
    %v482 = vld [vmem:[%s415 + $0x210] sm:$0xff]
    %v483 = vld [vmem:[%s415 + $0x218] sm:$0xff]
    %v484 = vld [vmem:[%s415 + $0x220] sm:$0xff]
    %v485 = vld [vmem:[%s415 + $0x228] sm:$0xff]
    %v486 = vld [vmem:[%s415 + $0x230] sm:$0xff]
    %v487 = vld [vmem:[%s415 + $0x238] sm:$0xff]
    %v488 = vld [vmem:[%s415 + $0x240] sm:$0xff]
    %v489 = vld [vmem:[%s415 + $0x248] sm:$0xff]
    %v490 = vld [vmem:[%s415 + $0x250] sm:$0xff]
    %v491 = vld [vmem:[%s415 + $0x258] sm:$0xff]
    %v492 = vld [vmem:[%s415 + $0x260] sm:$0xff]
    %v493 = vld [vmem:[%s415 + $0x268] sm:$0xff]
    %v494 = vld [vmem:[%s415 + $0x270] sm:$0xff]
    %v495 = vld [vmem:[%s415 + $0x278] sm:$0xff]
    %v496 = vld [vmem:[%s415 + $0x280] sm:$0xff]
    %v497 = vld [vmem:[%s415 + $0x288] sm:$0xff]
    %v498 = vld [vmem:[%s415 + $0x290] sm:$0xff]
    %v499 = vld [vmem:[%s415 + $0x298] sm:$0xff]
    %v500 = vld [vmem:[%s415 + $0x2a0] sm:$0xff]
    %v501 = vld [vmem:[%s415 + $0x2a8] sm:$0xff]
    %v502 = vld [vmem:[%s415 + $0x2b0] sm:$0xff]
    %v503 = vld [vmem:[%s415 + $0x2b8] sm:$0xff]
    %v504 = vld [vmem:[%s415 + $0x2c0] sm:$0xff]
    %v505 = vld [vmem:[%s415 + $0x2c8] sm:$0xff]
    %v506 = vld [vmem:[%s415 + $0x2d0] sm:$0xff]
    %v507 = vld [vmem:[%s415 + $0x2d8] sm:$0xff]
    %v508 = vld [vmem:[%s415 + $0x2e0] sm:$0xff]
    %v509 = vld [vmem:[%s415 + $0x2e8] sm:$0xff]
    %v510 = vld [vmem:[%s415 + $0x2f0] sm:$0xff]
    %v511 = vld [vmem:[%s415 + $0x2f8] sm:$0xff]
    %v512 = vld [vmem:[%s415 + $0x300] sm:$0xff]
    %v513 = vld [vmem:[%s415 + $0x308] sm:$0xff]
    %v514 = vld [vmem:[%s415 + $0x310] sm:$0xff]
    %v515 = vld [vmem:[%s415 + $0x318] sm:$0xff]
    %v516 = vld [vmem:[%s415 + $0x320] sm:$0xff]
    %v517 = vld [vmem:[%s415 + $0x328] sm:$0xff]
    %v518 = vld [vmem:[%s415 + $0x330] sm:$0xff]
    %v519 = vld [vmem:[%s415 + $0x338] sm:$0xff]
    %v520 = vld [vmem:[%s415 + $0x340] sm:$0xff]
    %v521 = vld [vmem:[%s415 + $0x348] sm:$0xff]
    %v522 = vld [vmem:[%s415 + $0x350] sm:$0xff]
    %v523 = vld [vmem:[%s415 + $0x358] sm:$0xff]
    %v524 = vld [vmem:[%s415 + $0x360] sm:$0xff]
    %v525 = vld [vmem:[%s415 + $0x368] sm:$0xff]
    %v526 = vld [vmem:[%s415 + $0x370] sm:$0xff]
    %v527 = vld [vmem:[%s415 + $0x378] sm:$0xff]
    %v528 = vld [vmem:[%s415 + $0x380] sm:$0xff]
    %v529 = vld [vmem:[%s415 + $0x388] sm:$0xff]
    %v530 = vld [vmem:[%s415 + $0x390] sm:$0xff]
    %v531 = vld [vmem:[%s415 + $0x398] sm:$0xff]
    %v532 = vld [vmem:[%s415 + $0x3a0] sm:$0xff]
    %v533 = vld [vmem:[%s415 + $0x3a8] sm:$0xff]
    %v534 = vld [vmem:[%s415 + $0x3b0] sm:$0xff]
    %v535 = vld [vmem:[%s415 + $0x3b8] sm:$0xff]
    %v536 = vld [vmem:[%s415 + $0x3c0] sm:$0xff]
    %v537 = vld [vmem:[%s415 + $0x3c8] sm:$0xff]
    %v538 = vld [vmem:[%s415 + $0x3d0] sm:$0xff]
    %v539 = vld [vmem:[%s415 + $0x3d8] sm:$0xff]
    %v540 = vld [vmem:[%s415 + $0x3e0] sm:$0xff]
    %v541 = vld [vmem:[%s415 + $0x3e8] sm:$0xff]
    %v542 = vld [vmem:[%s415 + $0x3f0] sm:$0xff]
    %v543 = vld [vmem:[%s415 + $0x3f8] sm:$0xff]
    %s544 = scalar_lea.vmem [#allocation7], 4
    %v545 = vld [vmem:[%s544] sm:$0xf]
    %v547 = vlaneseq
    %v548 = vshrl.u32 %v547, 7
    %v549 = vsub.s32 0, %v548
    %v550 = vrot.slane %v545, %v549
    %v551 = vlaneseq
    %v552 = vshrl.u32 %v551, 7
    %v553 = vsub.s32 1, %v552
    %v554 = vrot.slane %v545, %v553
    %v555 = vlaneseq
    %v556 = vshrl.u32 %v555, 7
    %v557 = vsub.s32 2, %v556
    %v558 = vrot.slane %v545, %v557
    %v559 = vlaneseq
    %v560 = vshrl.u32 %v559, 7
    %v561 = vsub.s32 3, %v560
    %v562 = vrot.slane %v545, %v561
    %567 = vmatprep.subr.mxu0 %v417
    %568 = vmatpush1.msra.mxu0 %v416
    %569 = vmatprep.subr.mxu0 %v421
    %570 = vmatpush1.msra.mxu0 %v420
    %571 = vmatprep.subr.mxu0 %v425
    %572 = vmatpush1.msra.mxu0 %v424
    %573 = vmatprep.subr.mxu0 %v429
    %574 = vmatpush1.msra.mxu0 %v428
    %575 = vmatprep.subr.mxu0 %v433
    %576 = vmatpush1.msra.mxu0 %v432
    %577 = vmatprep.subr.mxu0 %v437
    %578 = vmatpush1.msra.mxu0 %v436
    %579 = vmatprep.subr.mxu0 %v441
    %580 = vmatpush1.msra.mxu0 %v440
    %581 = vmatprep.subr.mxu0 %v445
    %582 = vmatpush1.msra.mxu0 %v444
    %583 = vmatprep.subr.mxu0 %v449
    %584 = vmatpush1.msra.mxu0 %v448
    %585 = vmatprep.subr.mxu0 %v453
    %586 = vmatpush1.msra.mxu0 %v452
    %587 = vmatprep.subr.mxu0 %v457
    %588 = vmatpush1.msra.mxu0 %v456
    %589 = vmatprep.subr.mxu0 %v461
    %590 = vmatpush1.msra.mxu0 %v460
    %591 = vmatprep.subr.mxu0 %v465
    %592 = vmatpush1.msra.mxu0 %v464
    %593 = vmatprep.subr.mxu0 %v469
    %594 = vmatpush1.msra.mxu0 %v468
    %595 = vmatprep.subr.mxu0 %v473
    %596 = vmatpush1.msra.mxu0 %v472
    %597 = vmatprep.subr.mxu0 %v477
    %598 = vmatpush1.msra.mxu0 %v476
    %599 = vmatprep.subr.mxu0 %v481
    %600 = vmatpush1.msra.mxu0 %v480
    %601 = vmatprep.subr.mxu0 %v485
    %602 = vmatpush1.msra.mxu0 %v484
    %603 = vmatprep.subr.mxu0 %v489
    %604 = vmatpush1.msra.mxu0 %v488
    %605 = vmatprep.subr.mxu0 %v493
    %606 = vmatpush1.msra.mxu0 %v492
    %607 = vmatprep.subr.mxu0 %v497
    %608 = vmatpush1.msra.mxu0 %v496
    %609 = vmatprep.subr.mxu0 %v501
    %610 = vmatpush1.msra.mxu0 %v500
    %611 = vmatprep.subr.mxu0 %v505
    %612 = vmatpush1.msra.mxu0 %v504
    %613 = vmatprep.subr.mxu0 %v509
    %614 = vmatpush1.msra.mxu0 %v508
    %615 = vmatprep.subr.mxu0 %v513
    %616 = vmatpush1.msra.mxu0 %v512
    %617 = vmatprep.subr.mxu0 %v517
    %618 = vmatpush1.msra.mxu0 %v516
    %619 = vmatprep.subr.mxu0 %v521
    %620 = vmatpush1.msra.mxu0 %v520
    %621 = vmatprep.subr.mxu0 %v525
    %622 = vmatpush1.msra.mxu0 %v524
    %623 = vmatprep.subr.mxu0 %v529
    %624 = vmatpush1.msra.mxu0 %v528
    %625 = vmatprep.subr.mxu0 %v533
    %626 = vmatpush1.msra.mxu0 %v532
    %627 = vmatprep.subr.mxu0 %v537
    %628 = vmatpush1.msra.mxu0 %v536
    %629 = vmatprep.subr.mxu0 %v541
    %630 = vmatpush1.msra.mxu0 %v540
    %631 = vmatprep.mubr.f32.mxu0 0.0
    %632 = vmatmul.mubr.f32.gmra.mrb[0].mxu0 %v414
    %v633 = vpop.f32.mrb[0].mxu0
    %v634 = vadd.f32 %v550, %v633
    %v635 = vpop.f32.mrb[0].mxu0
    %v636 = vadd.f32 %v554, %v635
    %637 = vdwg.mxu0
    %638 = vmatprep.subr.mxu0 %v419
    %639 = vmatpush1.msra.mxu0 %v418
    %640 = vmatprep.subr.mxu0 %v423
    %641 = vmatpush1.msra.mxu0 %v422
    %642 = vmatprep.subr.mxu0 %v427
    %643 = vmatpush1.msra.mxu0 %v426
    %644 = vmatprep.subr.mxu0 %v431
    %645 = vmatpush1.msra.mxu0 %v430
    %646 = vmatprep.subr.mxu0 %v435
    %647 = vmatpush1.msra.mxu0 %v434
    %648 = vmatprep.subr.mxu0 %v439
    %649 = vmatpush1.msra.mxu0 %v438
    %650 = vmatprep.subr.mxu0 %v443
    %651 = vmatpush1.msra.mxu0 %v442
    %652 = vmatprep.subr.mxu0 %v447
    %653 = vmatpush1.msra.mxu0 %v446
    %654 = vmatprep.subr.mxu0 %v451
    %655 = vmatpush1.msra.mxu0 %v450
    %656 = vmatprep.subr.mxu0 %v455
    %657 = vmatpush1.msra.mxu0 %v454
    %658 = vmatprep.subr.mxu0 %v459
    %659 = vmatpush1.msra.mxu0 %v458
    %660 = vmatprep.subr.mxu0 %v463
    %661 = vmatpush1.msra.mxu0 %v462
    %662 = vmatprep.subr.mxu0 %v467
    %663 = vmatpush1.msra.mxu0 %v466
    %664 = vmatprep.subr.mxu0 %v471
    %665 = vmatpush1.msra.mxu0 %v470
    %666 = vmatprep.subr.mxu0 %v475
    %667 = vmatpush1.msra.mxu0 %v474
    %668 = vmatprep.subr.mxu0 %v479
    %669 = vmatpush1.msra.mxu0 %v478
    %670 = vmatprep.subr.mxu0 %v483
    %671 = vmatpush1.msra.mxu0 %v482
    %672 = vmatprep.subr.mxu0 %v487
    %673 = vmatpush1.msra.mxu0 %v486
    %674 = vmatprep.subr.mxu0 %v491
    %675 = vmatpush1.msra.mxu0 %v490
    %676 = vmatprep.subr.mxu0 %v495
    %677 = vmatpush1.msra.mxu0 %v494
    %678 = vmatprep.subr.mxu0 %v499
    %679 = vmatpush1.msra.mxu0 %v498
    %680 = vmatprep.subr.mxu0 %v503
    %681 = vmatpush1.msra.mxu0 %v502
    %682 = vmatprep.subr.mxu0 %v507
    %683 = vmatpush1.msra.mxu0 %v506
    %684 = vmatprep.subr.mxu0 %v511
    %685 = vmatpush1.msra.mxu0 %v510
    %686 = vmatprep.subr.mxu0 %v515
    %687 = vmatpush1.msra.mxu0 %v514
    %688 = vmatprep.subr.mxu0 %v519
    %689 = vmatpush1.msra.mxu0 %v518
    %690 = vmatprep.subr.mxu0 %v523
    %691 = vmatpush1.msra.mxu0 %v522
    %692 = vmatprep.subr.mxu0 %v527
    %693 = vmatpush1.msra.mxu0 %v526
    %694 = vmatprep.subr.mxu0 %v531
    %695 = vmatpush1.msra.mxu0 %v530
    %696 = vmatprep.subr.mxu0 %v535
    %697 = vmatpush1.msra.mxu0 %v534
    %698 = vmatprep.subr.mxu0 %v539
    %699 = vmatpush1.msra.mxu0 %v538
    %700 = vmatprep.subr.mxu0 %v543
    %701 = vmatpush1.msra.mxu0 %v542
    %702 = vmatprep.mubr.f32.mxu0 0.0
    %703 = vmatmul.mubr.f32.gmra.mrb[0].mxu0 %v414
    %v704 = vpop.f32.mrb[0].mxu0
    %v705 = vadd.f32 %v558, %v704
    %v706 = vpop.f32.mrb[0].mxu0
    %v707 = vadd.f32 %v562, %v706
    %708 = vdwg.mxu0
    %v709 = vxor.u32 %v634, 2147483648
    %v710 = vmul.f32 %v709, 1.442695
    %v711 = vpow.pop %v710
    %v712 = vadd.f32 %v711, 1.0
    %v713 = vrcp.pop %v712
    %v714 = vmul.f32 1.0, %v713
    %v715 = vxor.u32 %v636, 2147483648
    %v716 = vmul.f32 %v715, 1.442695
    %v717 = vpow.pop %v716
    %v718 = vadd.f32 %v717, 1.0
    %v719 = vrcp.pop %v718
    %v720 = vmul.f32 1.0, %v719
    %v721 = vtanh.pop %v705
    %v722 = vxor.u32 %v707, 2147483648
    %v723 = vmul.f32 %v722, 1.442695
    %v724 = vpow.pop %v723
    %v725 = vadd.f32 %v724, 1.0
    %v726 = vrcp.pop %v725
    %v727 = vmul.f32 1.0, %v726
    %v728 = vmul.f32 %v720, 0.0
    %v729 = vmul.f32 %v714, %v721
    %v730 = vadd.f32 %v728, %v729
    %v731 = vtanh.pop %v730
    %v732 = vmul.f32 %v727, %v731
    %s733 = scalar_lea.vmem [#allocation5], 2048
    %v734 = vld [vmem:[%s733] sm:$0xff]
    %v735 = vld [vmem:[%s733 + $0x8] sm:$0xff]
    %v736 = vld [vmem:[%s733 + $0x10] sm:$0xff]
    %v737 = vld [vmem:[%s733 + $0x18] sm:$0xff]
    %v738 = vld [vmem:[%s733 + $0x20] sm:$0xff]
    %v739 = vld [vmem:[%s733 + $0x28] sm:$0xff]
    %v740 = vld [vmem:[%s733 + $0x30] sm:$0xff]
    %v741 = vld [vmem:[%s733 + $0x38] sm:$0xff]
    %v742 = vld [vmem:[%s733 + $0x40] sm:$0xff]
    %v743 = vld [vmem:[%s733 + $0x48] sm:$0xff]
    %v744 = vld [vmem:[%s733 + $0x50] sm:$0xff]
    %v745 = vld [vmem:[%s733 + $0x58] sm:$0xff]
    %v746 = vld [vmem:[%s733 + $0x60] sm:$0xff]
    %v747 = vld [vmem:[%s733 + $0x68] sm:$0xff]
    %v748 = vld [vmem:[%s733 + $0x70] sm:$0xff]
    %v749 = vld [vmem:[%s733 + $0x78] sm:$0xff]
    %v750 = vld [vmem:[%s733 + $0x80] sm:$0xff]
    %v751 = vld [vmem:[%s733 + $0x88] sm:$0xff]
    %v752 = vld [vmem:[%s733 + $0x90] sm:$0xff]
    %v753 = vld [vmem:[%s733 + $0x98] sm:$0xff]
    %v754 = vld [vmem:[%s733 + $0xa0] sm:$0xff]
    %v755 = vld [vmem:[%s733 + $0xa8] sm:$0xff]
    %v756 = vld [vmem:[%s733 + $0xb0] sm:$0xff]
    %v757 = vld [vmem:[%s733 + $0xb8] sm:$0xff]
    %v758 = vld [vmem:[%s733 + $0xc0] sm:$0xff]
    %v759 = vld [vmem:[%s733 + $0xc8] sm:$0xff]
    %v760 = vld [vmem:[%s733 + $0xd0] sm:$0xff]
    %v761 = vld [vmem:[%s733 + $0xd8] sm:$0xff]
    %v762 = vld [vmem:[%s733 + $0xe0] sm:$0xff]
    %v763 = vld [vmem:[%s733 + $0xe8] sm:$0xff]
    %v764 = vld [vmem:[%s733 + $0xf0] sm:$0xff]
    %v765 = vld [vmem:[%s733 + $0xf8] sm:$0xff]
    %v766 = vld [vmem:[%s733 + $0x100] sm:$0xff]
    %v767 = vld [vmem:[%s733 + $0x108] sm:$0xff]
    %v768 = vld [vmem:[%s733 + $0x110] sm:$0xff]
    %v769 = vld [vmem:[%s733 + $0x118] sm:$0xff]
    %v770 = vld [vmem:[%s733 + $0x120] sm:$0xff]
    %v771 = vld [vmem:[%s733 + $0x128] sm:$0xff]
    %v772 = vld [vmem:[%s733 + $0x130] sm:$0xff]
    %v773 = vld [vmem:[%s733 + $0x138] sm:$0xff]
    %v774 = vld [vmem:[%s733 + $0x140] sm:$0xff]
    %v775 = vld [vmem:[%s733 + $0x148] sm:$0xff]
    %v776 = vld [vmem:[%s733 + $0x150] sm:$0xff]
    %v777 = vld [vmem:[%s733 + $0x158] sm:$0xff]
    %v778 = vld [vmem:[%s733 + $0x160] sm:$0xff]
    %v779 = vld [vmem:[%s733 + $0x168] sm:$0xff]
    %v780 = vld [vmem:[%s733 + $0x170] sm:$0xff]
    %v781 = vld [vmem:[%s733 + $0x178] sm:$0xff]
    %v782 = vld [vmem:[%s733 + $0x180] sm:$0xff]
    %v783 = vld [vmem:[%s733 + $0x188] sm:$0xff]
    %v784 = vld [vmem:[%s733 + $0x190] sm:$0xff]
    %v785 = vld [vmem:[%s733 + $0x198] sm:$0xff]
    %v786 = vld [vmem:[%s733 + $0x1a0] sm:$0xff]
    %v787 = vld [vmem:[%s733 + $0x1a8] sm:$0xff]
    %v788 = vld [vmem:[%s733 + $0x1b0] sm:$0xff]
    %v789 = vld [vmem:[%s733 + $0x1b8] sm:$0xff]
    %v790 = vld [vmem:[%s733 + $0x1c0] sm:$0xff]
    %v791 = vld [vmem:[%s733 + $0x1c8] sm:$0xff]
    %v792 = vld [vmem:[%s733 + $0x1d0] sm:$0xff]
    %v793 = vld [vmem:[%s733 + $0x1d8] sm:$0xff]
    %v794 = vld [vmem:[%s733 + $0x1e0] sm:$0xff]
    %v795 = vld [vmem:[%s733 + $0x1e8] sm:$0xff]
    %v796 = vld [vmem:[%s733 + $0x1f0] sm:$0xff]
    %v797 = vld [vmem:[%s733 + $0x1f8] sm:$0xff]
    %v798 = vld [vmem:[%s733 + $0x200] sm:$0xff]
    %v799 = vld [vmem:[%s733 + $0x208] sm:$0xff]
    %v800 = vld [vmem:[%s733 + $0x210] sm:$0xff]
    %v801 = vld [vmem:[%s733 + $0x218] sm:$0xff]
    %v802 = vld [vmem:[%s733 + $0x220] sm:$0xff]
    %v803 = vld [vmem:[%s733 + $0x228] sm:$0xff]
    %v804 = vld [vmem:[%s733 + $0x230] sm:$0xff]
    %v805 = vld [vmem:[%s733 + $0x238] sm:$0xff]
    %v806 = vld [vmem:[%s733 + $0x240] sm:$0xff]
    %v807 = vld [vmem:[%s733 + $0x248] sm:$0xff]
    %v808 = vld [vmem:[%s733 + $0x250] sm:$0xff]
    %v809 = vld [vmem:[%s733 + $0x258] sm:$0xff]
    %v810 = vld [vmem:[%s733 + $0x260] sm:$0xff]
    %v811 = vld [vmem:[%s733 + $0x268] sm:$0xff]
    %v812 = vld [vmem:[%s733 + $0x270] sm:$0xff]
    %v813 = vld [vmem:[%s733 + $0x278] sm:$0xff]
    %v814 = vld [vmem:[%s733 + $0x280] sm:$0xff]
    %v815 = vld [vmem:[%s733 + $0x288] sm:$0xff]
    %v816 = vld [vmem:[%s733 + $0x290] sm:$0xff]
    %v817 = vld [vmem:[%s733 + $0x298] sm:$0xff]
    %v818 = vld [vmem:[%s733 + $0x2a0] sm:$0xff]
    %v819 = vld [vmem:[%s733 + $0x2a8] sm:$0xff]
    %v820 = vld [vmem:[%s733 + $0x2b0] sm:$0xff]
    %v821 = vld [vmem:[%s733 + $0x2b8] sm:$0xff]
    %v822 = vld [vmem:[%s733 + $0x2c0] sm:$0xff]
    %v823 = vld [vmem:[%s733 + $0x2c8] sm:$0xff]
    %v824 = vld [vmem:[%s733 + $0x2d0] sm:$0xff]
    %v825 = vld [vmem:[%s733 + $0x2d8] sm:$0xff]
    %v826 = vld [vmem:[%s733 + $0x2e0] sm:$0xff]
    %v827 = vld [vmem:[%s733 + $0x2e8] sm:$0xff]
    %v828 = vld [vmem:[%s733 + $0x2f0] sm:$0xff]
    %v829 = vld [vmem:[%s733 + $0x2f8] sm:$0xff]
    %v830 = vld [vmem:[%s733 + $0x300] sm:$0xff]
    %v831 = vld [vmem:[%s733 + $0x308] sm:$0xff]
    %v832 = vld [vmem:[%s733 + $0x310] sm:$0xff]
    %v833 = vld [vmem:[%s733 + $0x318] sm:$0xff]
    %v834 = vld [vmem:[%s733 + $0x320] sm:$0xff]
    %v835 = vld [vmem:[%s733 + $0x328] sm:$0xff]
    %v836 = vld [vmem:[%s733 + $0x330] sm:$0xff]
    %v837 = vld [vmem:[%s733 + $0x338] sm:$0xff]
    %v838 = vld [vmem:[%s733 + $0x340] sm:$0xff]
    %v839 = vld [vmem:[%s733 + $0x348] sm:$0xff]
    %v840 = vld [vmem:[%s733 + $0x350] sm:$0xff]
    %v841 = vld [vmem:[%s733 + $0x358] sm:$0xff]
    %v842 = vld [vmem:[%s733 + $0x360] sm:$0xff]
    %v843 = vld [vmem:[%s733 + $0x368] sm:$0xff]
    %v844 = vld [vmem:[%s733 + $0x370] sm:$0xff]
    %v845 = vld [vmem:[%s733 + $0x378] sm:$0xff]
    %v846 = vld [vmem:[%s733 + $0x380] sm:$0xff]
    %v847 = vld [vmem:[%s733 + $0x388] sm:$0xff]
    %v848 = vld [vmem:[%s733 + $0x390] sm:$0xff]
    %v849 = vld [vmem:[%s733 + $0x398] sm:$0xff]
    %v850 = vld [vmem:[%s733 + $0x3a0] sm:$0xff]
    %v851 = vld [vmem:[%s733 + $0x3a8] sm:$0xff]
    %v852 = vld [vmem:[%s733 + $0x3b0] sm:$0xff]
    %v853 = vld [vmem:[%s733 + $0x3b8] sm:$0xff]
    %v854 = vld [vmem:[%s733 + $0x3c0] sm:$0xff]
    %v855 = vld [vmem:[%s733 + $0x3c8] sm:$0xff]
    %v856 = vld [vmem:[%s733 + $0x3d0] sm:$0xff]
    %v857 = vld [vmem:[%s733 + $0x3d8] sm:$0xff]
    %v858 = vld [vmem:[%s733 + $0x3e0] sm:$0xff]
    %v859 = vld [vmem:[%s733 + $0x3e8] sm:$0xff]
    %v860 = vld [vmem:[%s733 + $0x3f0] sm:$0xff]
    %v861 = vld [vmem:[%s733 + $0x3f8] sm:$0xff]
    %s862 = scalar_lea.vmem [#allocation7], 8
    %v863 = vld [vmem:[%s862] sm:$0xf]
    %v865 = vlaneseq
    %v866 = vshrl.u32 %v865, 7
    %v867 = vsub.s32 0, %v866
    %v868 = vrot.slane %v863, %v867
    %v869 = vlaneseq
    %v870 = vshrl.u32 %v869, 7
    %v871 = vsub.s32 1, %v870
    %v872 = vrot.slane %v863, %v871
    %v873 = vlaneseq
    %v874 = vshrl.u32 %v873, 7
    %v875 = vsub.s32 2, %v874
    %v876 = vrot.slane %v863, %v875
    %v877 = vlaneseq
    %v878 = vshrl.u32 %v877, 7
    %v879 = vsub.s32 3, %v878
    %v880 = vrot.slane %v863, %v879
    %885 = vmatprep.subr.mxu0 %v735
    %886 = vmatpush1.msra.mxu0 %v734
    %887 = vmatprep.subr.mxu0 %v739
    %888 = vmatpush1.msra.mxu0 %v738
    %889 = vmatprep.subr.mxu0 %v743
    %890 = vmatpush1.msra.mxu0 %v742
    %891 = vmatprep.subr.mxu0 %v747
    %892 = vmatpush1.msra.mxu0 %v746
    %893 = vmatprep.subr.mxu0 %v751
    %894 = vmatpush1.msra.mxu0 %v750
    %895 = vmatprep.subr.mxu0 %v755
    %896 = vmatpush1.msra.mxu0 %v754
    %897 = vmatprep.subr.mxu0 %v759
    %898 = vmatpush1.msra.mxu0 %v758
    %899 = vmatprep.subr.mxu0 %v763
    %900 = vmatpush1.msra.mxu0 %v762
    %901 = vmatprep.subr.mxu0 %v767
    %902 = vmatpush1.msra.mxu0 %v766
    %903 = vmatprep.subr.mxu0 %v771
    %904 = vmatpush1.msra.mxu0 %v770
    %905 = vmatprep.subr.mxu0 %v775
    %906 = vmatpush1.msra.mxu0 %v774
    %907 = vmatprep.subr.mxu0 %v779
    %908 = vmatpush1.msra.mxu0 %v778
    %909 = vmatprep.subr.mxu0 %v783
    %910 = vmatpush1.msra.mxu0 %v782
    %911 = vmatprep.subr.mxu0 %v787
    %912 = vmatpush1.msra.mxu0 %v786
    %913 = vmatprep.subr.mxu0 %v791
    %914 = vmatpush1.msra.mxu0 %v790
    %915 = vmatprep.subr.mxu0 %v795
    %916 = vmatpush1.msra.mxu0 %v794
    %917 = vmatprep.subr.mxu0 %v799
    %918 = vmatpush1.msra.mxu0 %v798
    %919 = vmatprep.subr.mxu0 %v803
    %920 = vmatpush1.msra.mxu0 %v802
    %921 = vmatprep.subr.mxu0 %v807
    %922 = vmatpush1.msra.mxu0 %v806
    %923 = vmatprep.subr.mxu0 %v811
    %924 = vmatpush1.msra.mxu0 %v810
    %925 = vmatprep.subr.mxu0 %v815
    %926 = vmatpush1.msra.mxu0 %v814
    %927 = vmatprep.subr.mxu0 %v819
    %928 = vmatpush1.msra.mxu0 %v818
    %929 = vmatprep.subr.mxu0 %v823
    %930 = vmatpush1.msra.mxu0 %v822
    %931 = vmatprep.subr.mxu0 %v827
    %932 = vmatpush1.msra.mxu0 %v826
    %933 = vmatprep.subr.mxu0 %v831
    %934 = vmatpush1.msra.mxu0 %v830
    %935 = vmatprep.subr.mxu0 %v835
    %936 = vmatpush1.msra.mxu0 %v834
    %937 = vmatprep.subr.mxu0 %v839
    %938 = vmatpush1.msra.mxu0 %v838
    %939 = vmatprep.subr.mxu0 %v843
    %940 = vmatpush1.msra.mxu0 %v842
    %941 = vmatprep.subr.mxu0 %v847
    %942 = vmatpush1.msra.mxu0 %v846
    %943 = vmatprep.subr.mxu0 %v851
    %944 = vmatpush1.msra.mxu0 %v850
    %945 = vmatprep.subr.mxu0 %v855
    %946 = vmatpush1.msra.mxu0 %v854
    %947 = vmatprep.subr.mxu0 %v859
    %948 = vmatpush1.msra.mxu0 %v858
    %949 = vmatprep.mubr.f32.mxu0 0.0
    %950 = vmatmul.mubr.f32.gmra.mrb[0].mxu0 %v732
    %v951 = vpop.f32.mrb[0].mxu0
    %v952 = vadd.f32 %v868, %v951
    %v953 = vpop.f32.mrb[0].mxu0
    %v954 = vadd.f32 %v872, %v953
    %955 = vdwg.mxu0
    %956 = vmatprep.subr.mxu0 %v737
    %957 = vmatpush1.msra.mxu0 %v736
    %958 = vmatprep.subr.mxu0 %v741
    %959 = vmatpush1.msra.mxu0 %v740
    %960 = vmatprep.subr.mxu0 %v745
    %961 = vmatpush1.msra.mxu0 %v744
    %962 = vmatprep.subr.mxu0 %v749
    %963 = vmatpush1.msra.mxu0 %v748
    %964 = vmatprep.subr.mxu0 %v753
    %965 = vmatpush1.msra.mxu0 %v752
    %966 = vmatprep.subr.mxu0 %v757
    %967 = vmatpush1.msra.mxu0 %v756
    %968 = vmatprep.subr.mxu0 %v761
    %969 = vmatpush1.msra.mxu0 %v760
    %970 = vmatprep.subr.mxu0 %v765
    %971 = vmatpush1.msra.mxu0 %v764
    %972 = vmatprep.subr.mxu0 %v769
    %973 = vmatpush1.msra.mxu0 %v768
    %974 = vmatprep.subr.mxu0 %v773
    %975 = vmatpush1.msra.mxu0 %v772
    %976 = vmatprep.subr.mxu0 %v777
    %977 = vmatpush1.msra.mxu0 %v776
    %978 = vmatprep.subr.mxu0 %v781
    %979 = vmatpush1.msra.mxu0 %v780
    %980 = vmatprep.subr.mxu0 %v785
    %981 = vmatpush1.msra.mxu0 %v784
    %982 = vmatprep.subr.mxu0 %v789
    %983 = vmatpush1.msra.mxu0 %v788
    %984 = vmatprep.subr.mxu0 %v793
    %985 = vmatpush1.msra.mxu0 %v792
    %986 = vmatprep.subr.mxu0 %v797
    %987 = vmatpush1.msra.mxu0 %v796
    %988 = vmatprep.subr.mxu0 %v801
    %989 = vmatpush1.msra.mxu0 %v800
    %990 = vmatprep.subr.mxu0 %v805
    %991 = vmatpush1.msra.mxu0 %v804
    %992 = vmatprep.subr.mxu0 %v809
    %993 = vmatpush1.msra.mxu0 %v808
    %994 = vmatprep.subr.mxu0 %v813
    %995 = vmatpush1.msra.mxu0 %v812
    %996 = vmatprep.subr.mxu0 %v817
    %997 = vmatpush1.msra.mxu0 %v816
    %998 = vmatprep.subr.mxu0 %v821
    %999 = vmatpush1.msra.mxu0 %v820
    %1000 = vmatprep.subr.mxu0 %v825
    %1001 = vmatpush1.msra.mxu0 %v824
    %1002 = vmatprep.subr.mxu0 %v829
    %1003 = vmatpush1.msra.mxu0 %v828
    %1004 = vmatprep.subr.mxu0 %v833
    %1005 = vmatpush1.msra.mxu0 %v832
    %1006 = vmatprep.subr.mxu0 %v837
    %1007 = vmatpush1.msra.mxu0 %v836
    %1008 = vmatprep.subr.mxu0 %v841
    %1009 = vmatpush1.msra.mxu0 %v840
    %1010 = vmatprep.subr.mxu0 %v845
    %1011 = vmatpush1.msra.mxu0 %v844
    %1012 = vmatprep.subr.mxu0 %v849
    %1013 = vmatpush1.msra.mxu0 %v848
    %1014 = vmatprep.subr.mxu0 %v853
    %1015 = vmatpush1.msra.mxu0 %v852
    %1016 = vmatprep.subr.mxu0 %v857
    %1017 = vmatpush1.msra.mxu0 %v856
    %1018 = vmatprep.subr.mxu0 %v861
    %1019 = vmatpush1.msra.mxu0 %v860
    %1020 = vmatprep.mubr.f32.mxu0 0.0
    %1021 = vmatmul.mubr.f32.gmra.mrb[0].mxu0 %v732
    %v1022 = vpop.f32.mrb[0].mxu0
    %v1023 = vadd.f32 %v876, %v1022
    %v1024 = vpop.f32.mrb[0].mxu0
    %v1025 = vadd.f32 %v880, %v1024
    %1026 = vdwg.mxu0
    %v1027 = vxor.u32 %v952, 2147483648
    %v1028 = vmul.f32 %v1027, 1.442695
    %v1029 = vpow.pop %v1028
    %v1030 = vadd.f32 %v1029, 1.0
    %v1031 = vrcp.pop %v1030
    %v1032 = vmul.f32 1.0, %v1031
    %v1033 = vxor.u32 %v954, 2147483648
    %v1034 = vmul.f32 %v1033, 1.442695
    %v1035 = vpow.pop %v1034
    %v1036 = vadd.f32 %v1035, 1.0
    %v1037 = vrcp.pop %v1036
    %v1038 = vmul.f32 1.0, %v1037
    %v1039 = vtanh.pop %v1023
    %v1040 = vxor.u32 %v1025, 2147483648
    %v1041 = vmul.f32 %v1040, 1.442695
    %v1042 = vpow.pop %v1041
    %v1043 = vadd.f32 %v1042, 1.0
    %v1044 = vrcp.pop %v1043
    %v1045 = vmul.f32 1.0, %v1044
    %v1046 = vmul.f32 %v1038, 0.0
    %v1047 = vmul.f32 %v1032, %v1039
    %v1048 = vadd.f32 %v1046, %v1047
    %v1049 = vtanh.pop %v1048
    %v1050 = vmul.f32 %v1045, %v1049
    %s1051 = scalar_lea.vmem [#allocation3], 8
    %v1052 = vld [vmem:[%s1051] sm:$0xff]
    %1053 = vmatprep.subr.mxu0 %v100
    %1054 = vmatpush1.msra.mxu0 %v99
    %1055 = vmatprep.subr.mxu0 %v104
    %1056 = vmatpush1.msra.mxu0 %v103
    %1057 = vmatprep.subr.mxu0 %v108
    %1058 = vmatpush1.msra.mxu0 %v107
    %1059 = vmatprep.subr.mxu0 %v112
    %1060 = vmatpush1.msra.mxu0 %v111
    %1061 = vmatprep.subr.mxu0 %v116
    %1062 = vmatpush1.msra.mxu0 %v115
    %1063 = vmatprep.subr.mxu0 %v120
    %1064 = vmatpush1.msra.mxu0 %v119
    %1065 = vmatprep.subr.mxu0 %v124
    %1066 = vmatpush1.msra.mxu0 %v123
    %1067 = vmatprep.subr.mxu0 %v128
    %1068 = vmatpush1.msra.mxu0 %v127
    %1069 = vmatprep.subr.mxu0 %v132
    %1070 = vmatpush1.msra.mxu0 %v131
    %1071 = vmatprep.subr.mxu0 %v136
    %1072 = vmatpush1.msra.mxu0 %v135
    %1073 = vmatprep.subr.mxu0 %v140
    %1074 = vmatpush1.msra.mxu0 %v139
    %1075 = vmatprep.subr.mxu0 %v144
    %1076 = vmatpush1.msra.mxu0 %v143
    %1077 = vmatprep.subr.mxu0 %v148
    %1078 = vmatpush1.msra.mxu0 %v147
    %1079 = vmatprep.subr.mxu0 %v152
    %1080 = vmatpush1.msra.mxu0 %v151
    %1081 = vmatprep.subr.mxu0 %v156
    %1082 = vmatpush1.msra.mxu0 %v155
    %1083 = vmatprep.subr.mxu0 %v160
    %1084 = vmatpush1.msra.mxu0 %v159
    %1085 = vmatprep.subr.mxu0 %v164
    %1086 = vmatpush1.msra.mxu0 %v163
    %1087 = vmatprep.subr.mxu0 %v168
    %1088 = vmatpush1.msra.mxu0 %v167
    %1089 = vmatprep.subr.mxu0 %v172
    %1090 = vmatpush1.msra.mxu0 %v171
    %1091 = vmatprep.subr.mxu0 %v176
    %1092 = vmatpush1.msra.mxu0 %v175
    %1093 = vmatprep.subr.mxu0 %v180
    %1094 = vmatpush1.msra.mxu0 %v179
    %1095 = vmatprep.subr.mxu0 %v184
    %1096 = vmatpush1.msra.mxu0 %v183
    %1097 = vmatprep.subr.mxu0 %v188
    %1098 = vmatpush1.msra.mxu0 %v187
    %1099 = vmatprep.subr.mxu0 %v192
    %1100 = vmatpush1.msra.mxu0 %v191
    %1101 = vmatprep.subr.mxu0 %v196
    %1102 = vmatpush1.msra.mxu0 %v195
    %1103 = vmatprep.subr.mxu0 %v200
    %1104 = vmatpush1.msra.mxu0 %v199
    %1105 = vmatprep.subr.mxu0 %v204
    %1106 = vmatpush1.msra.mxu0 %v203
    %1107 = vmatprep.subr.mxu0 %v208
    %1108 = vmatpush1.msra.mxu0 %v207
    %1109 = vmatprep.subr.mxu0 %v212
    %1110 = vmatpush1.msra.mxu0 %v211
    %1111 = vmatprep.subr.mxu0 %v216
    %1112 = vmatpush1.msra.mxu0 %v215
    %1113 = vmatprep.subr.mxu0 %v220
    %1114 = vmatpush1.msra.mxu0 %v219
    %1115 = vmatprep.subr.mxu0 %v224
    %1116 = vmatpush1.msra.mxu0 %v223
    %1117 = vmatprep.mubr.f32.mxu0 %v414
    %1118 = vmatmul.mubr.f32.gmra.mrb[0].mxu0 %v1052
    %v1119 = vpop.f32.mrb[0].mxu0
    %v1120 = vadd.f32 %v232, %v1119
    %v1121 = vpop.f32.mrb[0].mxu0
    %v1122 = vadd.f32 %v236, %v1121
    %1123 = vdwg.mxu0
    %1124 = vmatprep.subr.mxu0 %v102
    %1125 = vmatpush1.msra.mxu0 %v101
    %1126 = vmatprep.subr.mxu0 %v106
    %1127 = vmatpush1.msra.mxu0 %v105
    %1128 = vmatprep.subr.mxu0 %v110
    %1129 = vmatpush1.msra.mxu0 %v109
    %1130 = vmatprep.subr.mxu0 %v114
    %1131 = vmatpush1.msra.mxu0 %v113
    %1132 = vmatprep.subr.mxu0 %v118
    %1133 = vmatpush1.msra.mxu0 %v117
    %1134 = vmatprep.subr.mxu0 %v122
    %1135 = vmatpush1.msra.mxu0 %v121
    %1136 = vmatprep.subr.mxu0 %v126
    %1137 = vmatpush1.msra.mxu0 %v125
    %1138 = vmatprep.subr.mxu0 %v130
    %1139 = vmatpush1.msra.mxu0 %v129
    %1140 = vmatprep.subr.mxu0 %v134
    %1141 = vmatpush1.msra.mxu0 %v133
    %1142 = vmatprep.subr.mxu0 %v138
    %1143 = vmatpush1.msra.mxu0 %v137
    %1144 = vmatprep.subr.mxu0 %v142
    %1145 = vmatpush1.msra.mxu0 %v141
    %1146 = vmatprep.subr.mxu0 %v146
    %1147 = vmatpush1.msra.mxu0 %v145
    %1148 = vmatprep.subr.mxu0 %v150
    %1149 = vmatpush1.msra.mxu0 %v149
    %1150 = vmatprep.subr.mxu0 %v154
    %1151 = vmatpush1.msra.mxu0 %v153
    %1152 = vmatprep.subr.mxu0 %v158
    %1153 = vmatpush1.msra.mxu0 %v157
    %1154 = vmatprep.subr.mxu0 %v162
    %1155 = vmatpush1.msra.mxu0 %v161
    %1156 = vmatprep.subr.mxu0 %v166
    %1157 = vmatpush1.msra.mxu0 %v165
    %1158 = vmatprep.subr.mxu0 %v170
    %1159 = vmatpush1.msra.mxu0 %v169
    %1160 = vmatprep.subr.mxu0 %v174
    %1161 = vmatpush1.msra.mxu0 %v173
    %1162 = vmatprep.subr.mxu0 %v178
    %1163 = vmatpush1.msra.mxu0 %v177
    %1164 = vmatprep.subr.mxu0 %v182
    %1165 = vmatpush1.msra.mxu0 %v181
    %1166 = vmatprep.subr.mxu0 %v186
    %1167 = vmatpush1.msra.mxu0 %v185
    %1168 = vmatprep.subr.mxu0 %v190
    %1169 = vmatpush1.msra.mxu0 %v189
    %1170 = vmatprep.subr.mxu0 %v194
    %1171 = vmatpush1.msra.mxu0 %v193
    %1172 = vmatprep.subr.mxu0 %v198
    %1173 = vmatpush1.msra.mxu0 %v197
    %1174 = vmatprep.subr.mxu0 %v202
    %1175 = vmatpush1.msra.mxu0 %v201
    %1176 = vmatprep.subr.mxu0 %v206
    %1177 = vmatpush1.msra.mxu0 %v205
    %1178 = vmatprep.subr.mxu0 %v210
    %1179 = vmatpush1.msra.mxu0 %v209
    %1180 = vmatprep.subr.mxu0 %v214
    %1181 = vmatpush1.msra.mxu0 %v213
    %1182 = vmatprep.subr.mxu0 %v218
    %1183 = vmatpush1.msra.mxu0 %v217
    %1184 = vmatprep.subr.mxu0 %v222
    %1185 = vmatpush1.msra.mxu0 %v221
    %1186 = vmatprep.subr.mxu0 %v226
    %1187 = vmatpush1.msra.mxu0 %v225
    %1188 = vmatprep.mubr.f32.mxu0 %v414
    %1189 = vmatmul.mubr.f32.gmra.mrb[0].mxu0 %v1052
    %v1190 = vpop.f32.mrb[0].mxu0
    %v1191 = vadd.f32 %v240, %v1190
    %v1192 = vpop.f32.mrb[0].mxu0
    %v1193 = vadd.f32 %v244, %v1192
    %1194 = vdwg.mxu0
    %v1195 = vxor.u32 %v1120, 2147483648
    %v1196 = vmul.f32 %v1195, 1.442695
    %v1197 = vpow.pop %v1196
    %v1198 = vadd.f32 %v1197, 1.0
    %v1199 = vrcp.pop %v1198
    %v1200 = vmul.f32 1.0, %v1199
    %v1201 = vxor.u32 %v1122, 2147483648
    %v1202 = vmul.f32 %v1201, 1.442695
    %v1203 = vpow.pop %v1202
    %v1204 = vadd.f32 %v1203, 1.0
    %v1205 = vrcp.pop %v1204
    %v1206 = vmul.f32 1.0, %v1205
    %v1207 = vtanh.pop %v1191
    %v1208 = vxor.u32 %v1193, 2147483648
    %v1209 = vmul.f32 %v1208, 1.442695
    %v1210 = vpow.pop %v1209
    %v1211 = vadd.f32 %v1210, 1.0
    %v1212 = vrcp.pop %v1211
    %v1213 = vmul.f32 1.0, %v1212
    %v1214 = vmul.f32 %v1206, %v412
    %v1215 = vmul.f32 %v1200, %v1207
    %v1216 = vadd.f32 %v1214, %v1215
    %v1217 = vtanh.pop %v1216
    %v1218 = vmul.f32 %v1213, %v1217
    %1219 = vmatprep.subr.mxu0 %v417
    %1220 = vmatpush1.msra.mxu0 %v416
    %1221 = vmatprep.subr.mxu0 %v421
    %1222 = vmatpush1.msra.mxu0 %v420
    %1223 = vmatprep.subr.mxu0 %v425
    %1224 = vmatpush1.msra.mxu0 %v424
    %1225 = vmatprep.subr.mxu0 %v429
    %1226 = vmatpush1.msra.mxu0 %v428
    %1227 = vmatprep.subr.mxu0 %v433
    %1228 = vmatpush1.msra.mxu0 %v432
    %1229 = vmatprep.subr.mxu0 %v437
    %1230 = vmatpush1.msra.mxu0 %v436
    %1231 = vmatprep.subr.mxu0 %v441
    %1232 = vmatpush1.msra.mxu0 %v440
    %1233 = vmatprep.subr.mxu0 %v445
    %1234 = vmatpush1.msra.mxu0 %v444
    %1235 = vmatprep.subr.mxu0 %v449
    %1236 = vmatpush1.msra.mxu0 %v448
    %1237 = vmatprep.subr.mxu0 %v453
    %1238 = vmatpush1.msra.mxu0 %v452
    %1239 = vmatprep.subr.mxu0 %v457
    %1240 = vmatpush1.msra.mxu0 %v456
    %1241 = vmatprep.subr.mxu0 %v461
    %1242 = vmatpush1.msra.mxu0 %v460
    %1243 = vmatprep.subr.mxu0 %v465
    %1244 = vmatpush1.msra.mxu0 %v464
    %1245 = vmatprep.subr.mxu0 %v469
    %1246 = vmatpush1.msra.mxu0 %v468
    %1247 = vmatprep.subr.mxu0 %v473
    %1248 = vmatpush1.msra.mxu0 %v472
    %1249 = vmatprep.subr.mxu0 %v477
    %1250 = vmatpush1.msra.mxu0 %v476
    %1251 = vmatprep.subr.mxu0 %v481
    %1252 = vmatpush1.msra.mxu0 %v480
    %1253 = vmatprep.subr.mxu0 %v485
    %1254 = vmatpush1.msra.mxu0 %v484
    %1255 = vmatprep.subr.mxu0 %v489
    %1256 = vmatpush1.msra.mxu0 %v488
    %1257 = vmatprep.subr.mxu0 %v493
    %1258 = vmatpush1.msra.mxu0 %v492
    %1259 = vmatprep.subr.mxu0 %v497
    %1260 = vmatpush1.msra.mxu0 %v496
    %1261 = vmatprep.subr.mxu0 %v501
    %1262 = vmatpush1.msra.mxu0 %v500
    %1263 = vmatprep.subr.mxu0 %v505
    %1264 = vmatpush1.msra.mxu0 %v504
    %1265 = vmatprep.subr.mxu0 %v509
    %1266 = vmatpush1.msra.mxu0 %v508
    %1267 = vmatprep.subr.mxu0 %v513
    %1268 = vmatpush1.msra.mxu0 %v512
    %1269 = vmatprep.subr.mxu0 %v517
    %1270 = vmatpush1.msra.mxu0 %v516
    %1271 = vmatprep.subr.mxu0 %v521
    %1272 = vmatpush1.msra.mxu0 %v520
    %1273 = vmatprep.subr.mxu0 %v525
    %1274 = vmatpush1.msra.mxu0 %v524
    %1275 = vmatprep.subr.mxu0 %v529
    %1276 = vmatpush1.msra.mxu0 %v528
    %1277 = vmatprep.subr.mxu0 %v533
    %1278 = vmatpush1.msra.mxu0 %v532
    %1279 = vmatprep.subr.mxu0 %v537
    %1280 = vmatpush1.msra.mxu0 %v536
    %1281 = vmatprep.subr.mxu0 %v541
    %1282 = vmatpush1.msra.mxu0 %v540
    %1283 = vmatprep.mubr.f32.mxu0 %v732
    %1284 = vmatmul.mubr.f32.gmra.mrb[0].mxu0 %v1218
    %v1285 = vpop.f32.mrb[0].mxu0
    %v1286 = vadd.f32 %v550, %v1285
    %v1287 = vpop.f32.mrb[0].mxu0
    %v1288 = vadd.f32 %v554, %v1287
    %1289 = vdwg.mxu0
    %1290 = vmatprep.subr.mxu0 %v419
    %1291 = vmatpush1.msra.mxu0 %v418
    %1292 = vmatprep.subr.mxu0 %v423
    %1293 = vmatpush1.msra.mxu0 %v422
    %1294 = vmatprep.subr.mxu0 %v427
    %1295 = vmatpush1.msra.mxu0 %v426
    %1296 = vmatprep.subr.mxu0 %v431
    %1297 = vmatpush1.msra.mxu0 %v430
    %1298 = vmatprep.subr.mxu0 %v435
    %1299 = vmatpush1.msra.mxu0 %v434
    %1300 = vmatprep.subr.mxu0 %v439
    %1301 = vmatpush1.msra.mxu0 %v438
    %1302 = vmatprep.subr.mxu0 %v443
    %1303 = vmatpush1.msra.mxu0 %v442
    %1304 = vmatprep.subr.mxu0 %v447
    %1305 = vmatpush1.msra.mxu0 %v446
    %1306 = vmatprep.subr.mxu0 %v451
    %1307 = vmatpush1.msra.mxu0 %v450
    %1308 = vmatprep.subr.mxu0 %v455
    %1309 = vmatpush1.msra.mxu0 %v454
    %1310 = vmatprep.subr.mxu0 %v459
    %1311 = vmatpush1.msra.mxu0 %v458
    %1312 = vmatprep.subr.mxu0 %v463
    %1313 = vmatpush1.msra.mxu0 %v462
    %1314 = vmatprep.subr.mxu0 %v467
    %1315 = vmatpush1.msra.mxu0 %v466
    %1316 = vmatprep.subr.mxu0 %v471
    %1317 = vmatpush1.msra.mxu0 %v470
    %1318 = vmatprep.subr.mxu0 %v475
    %1319 = vmatpush1.msra.mxu0 %v474
    %1320 = vmatprep.subr.mxu0 %v479
    %1321 = vmatpush1.msra.mxu0 %v478
    %1322 = vmatprep.subr.mxu0 %v483
    %1323 = vmatpush1.msra.mxu0 %v482
    %1324 = vmatprep.subr.mxu0 %v487
    %1325 = vmatpush1.msra.mxu0 %v486
    %1326 = vmatprep.subr.mxu0 %v491
    %1327 = vmatpush1.msra.mxu0 %v490
    %1328 = vmatprep.subr.mxu0 %v495
    %1329 = vmatpush1.msra.mxu0 %v494
    %1330 = vmatprep.subr.mxu0 %v499
    %1331 = vmatpush1.msra.mxu0 %v498
    %1332 = vmatprep.subr.mxu0 %v503
    %1333 = vmatpush1.msra.mxu0 %v502
    %1334 = vmatprep.subr.mxu0 %v507
    %1335 = vmatpush1.msra.mxu0 %v506
    %1336 = vmatprep.subr.mxu0 %v511
    %1337 = vmatpush1.msra.mxu0 %v510
    %1338 = vmatprep.subr.mxu0 %v515
    %1339 = vmatpush1.msra.mxu0 %v514
    %1340 = vmatprep.subr.mxu0 %v519
    %1341 = vmatpush1.msra.mxu0 %v518
    %1342 = vmatprep.subr.mxu0 %v523
    %1343 = vmatpush1.msra.mxu0 %v522
    %1344 = vmatprep.subr.mxu0 %v527
    %1345 = vmatpush1.msra.mxu0 %v526
    %1346 = vmatprep.subr.mxu0 %v531
    %1347 = vmatpush1.msra.mxu0 %v530
    %1348 = vmatprep.subr.mxu0 %v535
    %1349 = vmatpush1.msra.mxu0 %v534
    %1350 = vmatprep.subr.mxu0 %v539
    %1351 = vmatpush1.msra.mxu0 %v538
    %1352 = vmatprep.subr.mxu0 %v543
    %1353 = vmatpush1.msra.mxu0 %v542
    %1354 = vmatprep.mubr.f32.mxu0 %v732
    %1355 = vmatmul.mubr.f32.gmra.mrb[0].mxu0 %v1218
    %v1356 = vpop.f32.mrb[0].mxu0
    %v1357 = vadd.f32 %v558, %v1356
    %v1358 = vpop.f32.mrb[0].mxu0
    %v1359 = vadd.f32 %v562, %v1358
    %1360 = vdwg.mxu0
    %v1361 = vxor.u32 %v1286, 2147483648
    %v1362 = vmul.f32 %v1361, 1.442695
    %v1363 = vpow.pop %v1362
    %v1364 = vadd.f32 %v1363, 1.0
    %v1365 = vrcp.pop %v1364
    %v1366 = vmul.f32 1.0, %v1365
    %v1367 = vxor.u32 %v1288, 2147483648
    %v1368 = vmul.f32 %v1367, 1.442695
    %v1369 = vpow.pop %v1368
    %v1370 = vadd.f32 %v1369, 1.0
    %v1371 = vrcp.pop %v1370
    %v1372 = vmul.f32 1.0, %v1371
    %v1373 = vtanh.pop %v1357
    %v1374 = vxor.u32 %v1359, 2147483648
    %v1375 = vmul.f32 %v1374, 1.442695
    %v1376 = vpow.pop %v1375
    %v1377 = vadd.f32 %v1376, 1.0
    %v1378 = vrcp.pop %v1377
    %v1379 = vmul.f32 1.0, %v1378
    %v1380 = vmul.f32 %v1372, %v730
    %v1381 = vmul.f32 %v1366, %v1373
    %v1382 = vadd.f32 %v1380, %v1381
    %v1383 = vtanh.pop %v1382
    %v1384 = vmul.f32 %v1379, %v1383
    %1385 = vmatprep.subr.mxu0 %v735
    %1386 = vmatpush1.msra.mxu0 %v734
    %1387 = vmatprep.subr.mxu0 %v739
    %1388 = vmatpush1.msra.mxu0 %v738
    %1389 = vmatprep.subr.mxu0 %v743
    %1390 = vmatpush1.msra.mxu0 %v742
    %1391 = vmatprep.subr.mxu0 %v747
    %1392 = vmatpush1.msra.mxu0 %v746
    %1393 = vmatprep.subr.mxu0 %v751
    %1394 = vmatpush1.msra.mxu0 %v750
    %1395 = vmatprep.subr.mxu0 %v755
    %1396 = vmatpush1.msra.mxu0 %v754
    %1397 = vmatprep.subr.mxu0 %v759
    %1398 = vmatpush1.msra.mxu0 %v758
    %1399 = vmatprep.subr.mxu0 %v763
    %1400 = vmatpush1.msra.mxu0 %v762
    %1401 = vmatprep.subr.mxu0 %v767
    %1402 = vmatpush1.msra.mxu0 %v766
    %1403 = vmatprep.subr.mxu0 %v771
    %1404 = vmatpush1.msra.mxu0 %v770
    %1405 = vmatprep.subr.mxu0 %v775
    %1406 = vmatpush1.msra.mxu0 %v774
    %1407 = vmatprep.subr.mxu0 %v779
    %1408 = vmatpush1.msra.mxu0 %v778
    %1409 = vmatprep.subr.mxu0 %v783
    %1410 = vmatpush1.msra.mxu0 %v782
    %1411 = vmatprep.subr.mxu0 %v787
    %1412 = vmatpush1.msra.mxu0 %v786
    %1413 = vmatprep.subr.mxu0 %v791
    %1414 = vmatpush1.msra.mxu0 %v790
    %1415 = vmatprep.subr.mxu0 %v795
    %1416 = vmatpush1.msra.mxu0 %v794
    %1417 = vmatprep.subr.mxu0 %v799
    %1418 = vmatpush1.msra.mxu0 %v798
    %1419 = vmatprep.subr.mxu0 %v803
    %1420 = vmatpush1.msra.mxu0 %v802
    %1421 = vmatprep.subr.mxu0 %v807
    %1422 = vmatpush1.msra.mxu0 %v806
    %1423 = vmatprep.subr.mxu0 %v811
    %1424 = vmatpush1.msra.mxu0 %v810
    %1425 = vmatprep.subr.mxu0 %v815
    %1426 = vmatpush1.msra.mxu0 %v814
    %1427 = vmatprep.subr.mxu0 %v819
    %1428 = vmatpush1.msra.mxu0 %v818
    %1429 = vmatprep.subr.mxu0 %v823
    %1430 = vmatpush1.msra.mxu0 %v822
    %1431 = vmatprep.subr.mxu0 %v827
    %1432 = vmatpush1.msra.mxu0 %v826
    %1433 = vmatprep.subr.mxu0 %v831
    %1434 = vmatpush1.msra.mxu0 %v830
    %1435 = vmatprep.subr.mxu0 %v835
    %1436 = vmatpush1.msra.mxu0 %v834
    %1437 = vmatprep.subr.mxu0 %v839
    %1438 = vmatpush1.msra.mxu0 %v838
    %1439 = vmatprep.subr.mxu0 %v843
    %1440 = vmatpush1.msra.mxu0 %v842
    %1441 = vmatprep.subr.mxu0 %v847
    %1442 = vmatpush1.msra.mxu0 %v846
    %1443 = vmatprep.subr.mxu0 %v851
    %1444 = vmatpush1.msra.mxu0 %v850
    %1445 = vmatprep.subr.mxu0 %v855
    %1446 = vmatpush1.msra.mxu0 %v854
    %1447 = vmatprep.subr.mxu0 %v859
    %1448 = vmatpush1.msra.mxu0 %v858
    %1449 = vmatprep.mubr.f32.mxu0 %v1050
    %1450 = vmatmul.mubr.f32.gmra.mrb[0].mxu0 %v1384
    %v1451 = vpop.f32.mrb[0].mxu0
    %v1452 = vadd.f32 %v868, %v1451
    %v1453 = vpop.f32.mrb[0].mxu0
    %v1454 = vadd.f32 %v872, %v1453
    %1455 = vdwg.mxu0
    %1456 = vmatprep.subr.mxu0 %v737
    %1457 = vmatpush1.msra.mxu0 %v736
    %1458 = vmatprep.subr.mxu0 %v741
    %1459 = vmatpush1.msra.mxu0 %v740
    %1460 = vmatprep.subr.mxu0 %v745
    %1461 = vmatpush1.msra.mxu0 %v744
    %1462 = vmatprep.subr.mxu0 %v749
    %1463 = vmatpush1.msra.mxu0 %v748
    %1464 = vmatprep.subr.mxu0 %v753
    %1465 = vmatpush1.msra.mxu0 %v752
    %1466 = vmatprep.subr.mxu0 %v757
    %1467 = vmatpush1.msra.mxu0 %v756
    %1468 = vmatprep.subr.mxu0 %v761
    %1469 = vmatpush1.msra.mxu0 %v760
    %1470 = vmatprep.subr.mxu0 %v765
    %1471 = vmatpush1.msra.mxu0 %v764
    %1472 = vmatprep.subr.mxu0 %v769
    %1473 = vmatpush1.msra.mxu0 %v768
    %1474 = vmatprep.subr.mxu0 %v773
    %1475 = vmatpush1.msra.mxu0 %v772
    %1476 = vmatprep.subr.mxu0 %v777
    %1477 = vmatpush1.msra.mxu0 %v776
    %1478 = vmatprep.subr.mxu0 %v781
    %1479 = vmatpush1.msra.mxu0 %v780
    %1480 = vmatprep.subr.mxu0 %v785
    %1481 = vmatpush1.msra.mxu0 %v784
    %1482 = vmatprep.subr.mxu0 %v789
    %1483 = vmatpush1.msra.mxu0 %v788
    %1484 = vmatprep.subr.mxu0 %v793
    %1485 = vmatpush1.msra.mxu0 %v792
    %1486 = vmatprep.subr.mxu0 %v797
    %1487 = vmatpush1.msra.mxu0 %v796
    %1488 = vmatprep.subr.mxu0 %v801
    %1489 = vmatpush1.msra.mxu0 %v800
    %1490 = vmatprep.subr.mxu0 %v805
    %1491 = vmatpush1.msra.mxu0 %v804
    %1492 = vmatprep.subr.mxu0 %v809
    %1493 = vmatpush1.msra.mxu0 %v808
    %1494 = vmatprep.subr.mxu0 %v813
    %1495 = vmatpush1.msra.mxu0 %v812
    %1496 = vmatprep.subr.mxu0 %v817
    %1497 = vmatpush1.msra.mxu0 %v816
    %1498 = vmatprep.subr.mxu0 %v821
    %1499 = vmatpush1.msra.mxu0 %v820
    %1500 = vmatprep.subr.mxu0 %v825
    %1501 = vmatpush1.msra.mxu0 %v824
    %1502 = vmatprep.subr.mxu0 %v829
    %1503 = vmatpush1.msra.mxu0 %v828
    %1504 = vmatprep.subr.mxu0 %v833
    %1505 = vmatpush1.msra.mxu0 %v832
    %1506 = vmatprep.subr.mxu0 %v837
    %1507 = vmatpush1.msra.mxu0 %v836
    %1508 = vmatprep.subr.mxu0 %v841
    %1509 = vmatpush1.msra.mxu0 %v840
    %1510 = vmatprep.subr.mxu0 %v845
    %1511 = vmatpush1.msra.mxu0 %v844
    %1512 = vmatprep.subr.mxu0 %v849
    %1513 = vmatpush1.msra.mxu0 %v848
    %1514 = vmatprep.subr.mxu0 %v853
    %1515 = vmatpush1.msra.mxu0 %v852
    %1516 = vmatprep.subr.mxu0 %v857
    %1517 = vmatpush1.msra.mxu0 %v856
    %1518 = vmatprep.subr.mxu0 %v861
    %1519 = vmatpush1.msra.mxu0 %v860
    %1520 = vmatprep.mubr.f32.mxu0 %v1050
    %1521 = vmatmul.mubr.f32.gmra.mrb[0].mxu0 %v1384
    %v1522 = vpop.f32.mrb[0].mxu0
    %v1523 = vadd.f32 %v876, %v1522
    %v1524 = vpop.f32.mrb[0].mxu0
    %v1525 = vadd.f32 %v880, %v1524
    %1526 = vdwg.mxu0
    %v1527 = vxor.u32 %v1452, 2147483648
    %v1528 = vmul.f32 %v1527, 1.442695
    %v1529 = vpow.pop %v1528
    %v1530 = vadd.f32 %v1529, 1.0
    %v1531 = vrcp.pop %v1530
    %v1532 = vmul.f32 1.0, %v1531
    %v1533 = vxor.u32 %v1454, 2147483648
    %v1534 = vmul.f32 %v1533, 1.442695
    %v1535 = vpow.pop %v1534
    %v1536 = vadd.f32 %v1535, 1.0
    %v1537 = vrcp.pop %v1536
    %v1538 = vmul.f32 1.0, %v1537
    %v1539 = vtanh.pop %v1523
    %v1540 = vxor.u32 %v1525, 2147483648
    %v1541 = vmul.f32 %v1540, 1.442695
    %v1542 = vpow.pop %v1541
    %v1543 = vadd.f32 %v1542, 1.0
    %v1544 = vrcp.pop %v1543
    %v1545 = vmul.f32 1.0, %v1544
    %v1546 = vmul.f32 %v1538, %v1048
    %v1547 = vmul.f32 %v1532, %v1539
    %v1548 = vadd.f32 %v1546, %v1547
    %v1549 = vtanh.pop %v1548
    %v1550 = vmul.f32 %v1545, %v1549
    %s1551 = scalar_lea.vmem [#allocation3], 16
    %v1552 = vld [vmem:[%s1551] sm:$0xff]
    %1553 = vmatprep.subr.mxu0 %v100
    %1554 = vmatpush1.msra.mxu0 %v99
    %1555 = vmatprep.subr.mxu0 %v104
    %1556 = vmatpush1.msra.mxu0 %v103
    %1557 = vmatprep.subr.mxu0 %v108
    %1558 = vmatpush1.msra.mxu0 %v107
    %1559 = vmatprep.subr.mxu0 %v112
    %1560 = vmatpush1.msra.mxu0 %v111
    %1561 = vmatprep.subr.mxu0 %v116
    %1562 = vmatpush1.msra.mxu0 %v115
    %1563 = vmatprep.subr.mxu0 %v120
    %1564 = vmatpush1.msra.mxu0 %v119
    %1565 = vmatprep.subr.mxu0 %v124
    %1566 = vmatpush1.msra.mxu0 %v123
    %1567 = vmatprep.subr.mxu0 %v128
    %1568 = vmatpush1.msra.mxu0 %v127
    %1569 = vmatprep.subr.mxu0 %v132
    %1570 = vmatpush1.msra.mxu0 %v131
    %1571 = vmatprep.subr.mxu0 %v136
    %1572 = vmatpush1.msra.mxu0 %v135
    %1573 = vmatprep.subr.mxu0 %v140
    %1574 = vmatpush1.msra.mxu0 %v139
    %1575 = vmatprep.subr.mxu0 %v144
    %1576 = vmatpush1.msra.mxu0 %v143
    %1577 = vmatprep.subr.mxu0 %v148
    %1578 = vmatpush1.msra.mxu0 %v147
    %1579 = vmatprep.subr.mxu0 %v152
    %1580 = vmatpush1.msra.mxu0 %v151
    %1581 = vmatprep.subr.mxu0 %v156
    %1582 = vmatpush1.msra.mxu0 %v155
    %1583 = vmatprep.subr.mxu0 %v160
    %1584 = vmatpush1.msra.mxu0 %v159
    %1585 = vmatprep.subr.mxu0 %v164
    %1586 = vmatpush1.msra.mxu0 %v163
    %1587 = vmatprep.subr.mxu0 %v168
    %1588 = vmatpush1.msra.mxu0 %v167
    %1589 = vmatprep.subr.mxu0 %v172
    %1590 = vmatpush1.msra.mxu0 %v171
    %1591 = vmatprep.subr.mxu0 %v176
    %1592 = vmatpush1.msra.mxu0 %v175
    %1593 = vmatprep.subr.mxu0 %v180
    %1594 = vmatpush1.msra.mxu0 %v179
    %1595 = vmatprep.subr.mxu0 %v184
    %1596 = vmatpush1.msra.mxu0 %v183
    %1597 = vmatprep.subr.mxu0 %v188
    %1598 = vmatpush1.msra.mxu0 %v187
    %1599 = vmatprep.subr.mxu0 %v192
    %1600 = vmatpush1.msra.mxu0 %v191
    %1601 = vmatprep.subr.mxu0 %v196
    %1602 = vmatpush1.msra.mxu0 %v195
    %1603 = vmatprep.subr.mxu0 %v200
    %1604 = vmatpush1.msra.mxu0 %v199
    %1605 = vmatprep.subr.mxu0 %v204
    %1606 = vmatpush1.msra.mxu0 %v203
    %1607 = vmatprep.subr.mxu0 %v208
    %1608 = vmatpush1.msra.mxu0 %v207
    %1609 = vmatprep.subr.mxu0 %v212
    %1610 = vmatpush1.msra.mxu0 %v211
    %1611 = vmatprep.subr.mxu0 %v216
    %1612 = vmatpush1.msra.mxu0 %v215
    %1613 = vmatprep.subr.mxu0 %v220
    %1614 = vmatpush1.msra.mxu0 %v219
    %1615 = vmatprep.subr.mxu0 %v224
    %1616 = vmatpush1.msra.mxu0 %v223
    %1617 = vmatprep.mubr.f32.mxu0 %v1218
    %1618 = vmatmul.mubr.f32.gmra.mrb[0].mxu0 %v1552
    %v1619 = vpop.f32.mrb[0].mxu0
    %v1620 = vadd.f32 %v232, %v1619
    %v1621 = vpop.f32.mrb[0].mxu0
    %v1622 = vadd.f32 %v236, %v1621
    %1623 = vdwg.mxu0
    %1624 = vmatprep.subr.mxu0 %v102
    %1625 = vmatpush1.msra.mxu0 %v101
    %1626 = vmatprep.subr.mxu0 %v106
    %1627 = vmatpush1.msra.mxu0 %v105
    %1628 = vmatprep.subr.mxu0 %v110
    %1629 = vmatpush1.msra.mxu0 %v109
    %1630 = vmatprep.subr.mxu0 %v114
    %1631 = vmatpush1.msra.mxu0 %v113
    %1632 = vmatprep.subr.mxu0 %v118
    %1633 = vmatpush1.msra.mxu0 %v117
    %1634 = vmatprep.subr.mxu0 %v122
    %1635 = vmatpush1.msra.mxu0 %v121
    %1636 = vmatprep.subr.mxu0 %v126
    %1637 = vmatpush1.msra.mxu0 %v125
    %1638 = vmatprep.subr.mxu0 %v130
    %1639 = vmatpush1.msra.mxu0 %v129
    %1640 = vmatprep.subr.mxu0 %v134
    %1641 = vmatpush1.msra.mxu0 %v133
    %1642 = vmatprep.subr.mxu0 %v138
    %1643 = vmatpush1.msra.mxu0 %v137
    %1644 = vmatprep.subr.mxu0 %v142
    %1645 = vmatpush1.msra.mxu0 %v141
    %1646 = vmatprep.subr.mxu0 %v146
    %1647 = vmatpush1.msra.mxu0 %v145
    %1648 = vmatprep.subr.mxu0 %v150
    %1649 = vmatpush1.msra.mxu0 %v149
    %1650 = vmatprep.subr.mxu0 %v154
    %1651 = vmatpush1.msra.mxu0 %v153
    %1652 = vmatprep.subr.mxu0 %v158
    %1653 = vmatpush1.msra.mxu0 %v157
    %1654 = vmatprep.subr.mxu0 %v162
    %1655 = vmatpush1.msra.mxu0 %v161
    %1656 = vmatprep.subr.mxu0 %v166
    %1657 = vmatpush1.msra.mxu0 %v165
    %1658 = vmatprep.subr.mxu0 %v170
    %1659 = vmatpush1.msra.mxu0 %v169
    %1660 = vmatprep.subr.mxu0 %v174
    %1661 = vmatpush1.msra.mxu0 %v173
    %1662 = vmatprep.subr.mxu0 %v178
    %1663 = vmatpush1.msra.mxu0 %v177
    %1664 = vmatprep.subr.mxu0 %v182
    %1665 = vmatpush1.msra.mxu0 %v181
    %1666 = vmatprep.subr.mxu0 %v186
    %1667 = vmatpush1.msra.mxu0 %v185
    %1668 = vmatprep.subr.mxu0 %v190
    %1669 = vmatpush1.msra.mxu0 %v189
    %1670 = vmatprep.subr.mxu0 %v194
    %1671 = vmatpush1.msra.mxu0 %v193
    %1672 = vmatprep.subr.mxu0 %v198
    %1673 = vmatpush1.msra.mxu0 %v197
    %1674 = vmatprep.subr.mxu0 %v202
    %1675 = vmatpush1.msra.mxu0 %v201
    %1676 = vmatprep.subr.mxu0 %v206
    %1677 = vmatpush1.msra.mxu0 %v205
    %1678 = vmatprep.subr.mxu0 %v210
    %1679 = vmatpush1.msra.mxu0 %v209
    %1680 = vmatprep.subr.mxu0 %v214
    %1681 = vmatpush1.msra.mxu0 %v213
    %1682 = vmatprep.subr.mxu0 %v218
    %1683 = vmatpush1.msra.mxu0 %v217
    %1684 = vmatprep.subr.mxu0 %v222
    %1685 = vmatpush1.msra.mxu0 %v221
    %1686 = vmatprep.subr.mxu0 %v226
    %1687 = vmatpush1.msra.mxu0 %v225
    %1688 = vmatprep.mubr.f32.mxu0 %v1218
    %1689 = vmatmul.mubr.f32.gmra.mrb[0].mxu0 %v1552
    %v1690 = vpop.f32.mrb[0].mxu0
    %v1691 = vadd.f32 %v240, %v1690
    %v1692 = vpop.f32.mrb[0].mxu0
    %v1693 = vadd.f32 %v244, %v1692
    %1694 = vdwg.mxu0
    %v1695 = vxor.u32 %v1620, 2147483648
    %v1696 = vmul.f32 %v1695, 1.442695
    %v1697 = vpow.pop %v1696
    %v1698 = vadd.f32 %v1697, 1.0
    %v1699 = vrcp.pop %v1698
    %v1700 = vmul.f32 1.0, %v1699
    %v1701 = vxor.u32 %v1622, 2147483648
    %v1702 = vmul.f32 %v1701, 1.442695
    %v1703 = vpow.pop %v1702
    %v1704 = vadd.f32 %v1703, 1.0
    %v1705 = vrcp.pop %v1704
    %v1706 = vmul.f32 1.0, %v1705
    %v1707 = vtanh.pop %v1691
    %v1708 = vxor.u32 %v1693, 2147483648
    %v1709 = vmul.f32 %v1708, 1.442695
    %v1710 = vpow.pop %v1709
    %v1711 = vadd.f32 %v1710, 1.0
    %v1712 = vrcp.pop %v1711
    %v1713 = vmul.f32 1.0, %v1712
    %v1714 = vmul.f32 %v1706, %v1216
    %v1715 = vmul.f32 %v1700, %v1707
    %v1716 = vadd.f32 %v1714, %v1715
    %v1717 = vtanh.pop %v1716
    %v1718 = vmul.f32 %v1713, %v1717
    %1719 = vmatprep.subr.mxu0 %v417
    %1720 = vmatpush1.msra.mxu0 %v416
    %1721 = vmatprep.subr.mxu0 %v421
    %1722 = vmatpush1.msra.mxu0 %v420
    %1723 = vmatprep.subr.mxu0 %v425
    %1724 = vmatpush1.msra.mxu0 %v424
    %1725 = vmatprep.subr.mxu0 %v429
    %1726 = vmatpush1.msra.mxu0 %v428
    %1727 = vmatprep.subr.mxu0 %v433
    %1728 = vmatpush1.msra.mxu0 %v432
    %1729 = vmatprep.subr.mxu0 %v437
    %1730 = vmatpush1.msra.mxu0 %v436
    %1731 = vmatprep.subr.mxu0 %v441
    %1732 = vmatpush1.msra.mxu0 %v440
    %1733 = vmatprep.subr.mxu0 %v445
    %1734 = vmatpush1.msra.mxu0 %v444
    %1735 = vmatprep.subr.mxu0 %v449
    %1736 = vmatpush1.msra.mxu0 %v448
    %1737 = vmatprep.subr.mxu0 %v453
    %1738 = vmatpush1.msra.mxu0 %v452
    %1739 = vmatprep.subr.mxu0 %v457
    %1740 = vmatpush1.msra.mxu0 %v456
    %1741 = vmatprep.subr.mxu0 %v461
    %1742 = vmatpush1.msra.mxu0 %v460
    %1743 = vmatprep.subr.mxu0 %v465
    %1744 = vmatpush1.msra.mxu0 %v464
    %1745 = vmatprep.subr.mxu0 %v469
    %1746 = vmatpush1.msra.mxu0 %v468
    %1747 = vmatprep.subr.mxu0 %v473
    %1748 = vmatpush1.msra.mxu0 %v472
    %1749 = vmatprep.subr.mxu0 %v477
    %1750 = vmatpush1.msra.mxu0 %v476
    %1751 = vmatprep.subr.mxu0 %v481
    %1752 = vmatpush1.msra.mxu0 %v480
    %1753 = vmatprep.subr.mxu0 %v485
    %1754 = vmatpush1.msra.mxu0 %v484
    %1755 = vmatprep.subr.mxu0 %v489
    %1756 = vmatpush1.msra.mxu0 %v488
    %1757 = vmatprep.subr.mxu0 %v493
    %1758 = vmatpush1.msra.mxu0 %v492
    %1759 = vmatprep.subr.mxu0 %v497
    %1760 = vmatpush1.msra.mxu0 %v496
    %1761 = vmatprep.subr.mxu0 %v501
    %1762 = vmatpush1.msra.mxu0 %v500
    %1763 = vmatprep.subr.mxu0 %v505
    %1764 = vmatpush1.msra.mxu0 %v504
    %1765 = vmatprep.subr.mxu0 %v509
    %1766 = vmatpush1.msra.mxu0 %v508
    %1767 = vmatprep.subr.mxu0 %v513
    %1768 = vmatpush1.msra.mxu0 %v512
    %1769 = vmatprep.subr.mxu0 %v517
    %1770 = vmatpush1.msra.mxu0 %v516
    %1771 = vmatprep.subr.mxu0 %v521
    %1772 = vmatpush1.msra.mxu0 %v520
    %1773 = vmatprep.subr.mxu0 %v525
    %1774 = vmatpush1.msra.mxu0 %v524
    %1775 = vmatprep.subr.mxu0 %v529
    %1776 = vmatpush1.msra.mxu0 %v528
    %1777 = vmatprep.subr.mxu0 %v533
    %1778 = vmatpush1.msra.mxu0 %v532
    %1779 = vmatprep.subr.mxu0 %v537
    %1780 = vmatpush1.msra.mxu0 %v536
    %1781 = vmatprep.subr.mxu0 %v541
    %1782 = vmatpush1.msra.mxu0 %v540
    %1783 = vmatprep.mubr.f32.mxu0 %v1384
    %1784 = vmatmul.mubr.f32.gmra.mrb[0].mxu0 %v1718
    %v1785 = vpop.f32.mrb[0].mxu0
    %v1786 = vadd.f32 %v550, %v1785
    %v1787 = vpop.f32.mrb[0].mxu0
    %v1788 = vadd.f32 %v554, %v1787
    %1789 = vdwg.mxu0
    %1790 = vmatprep.subr.mxu0 %v419
    %1791 = vmatpush1.msra.mxu0 %v418
    %1792 = vmatprep.subr.mxu0 %v423
    %1793 = vmatpush1.msra.mxu0 %v422
    %1794 = vmatprep.subr.mxu0 %v427
    %1795 = vmatpush1.msra.mxu0 %v426
    %1796 = vmatprep.subr.mxu0 %v431
    %1797 = vmatpush1.msra.mxu0 %v430
    %1798 = vmatprep.subr.mxu0 %v435
    %1799 = vmatpush1.msra.mxu0 %v434
    %1800 = vmatprep.subr.mxu0 %v439
    %1801 = vmatpush1.msra.mxu0 %v438
    %1802 = vmatprep.subr.mxu0 %v443
    %1803 = vmatpush1.msra.mxu0 %v442
    %1804 = vmatprep.subr.mxu0 %v447
    %1805 = vmatpush1.msra.mxu0 %v446
    %1806 = vmatprep.subr.mxu0 %v451
    %1807 = vmatpush1.msra.mxu0 %v450
    %1808 = vmatprep.subr.mxu0 %v455
    %1809 = vmatpush1.msra.mxu0 %v454
    %1810 = vmatprep.subr.mxu0 %v459
    %1811 = vmatpush1.msra.mxu0 %v458
    %1812 = vmatprep.subr.mxu0 %v463
    %1813 = vmatpush1.msra.mxu0 %v462
    %1814 = vmatprep.subr.mxu0 %v467
    %1815 = vmatpush1.msra.mxu0 %v466
    %1816 = vmatprep.subr.mxu0 %v471
    %1817 = vmatpush1.msra.mxu0 %v470
    %1818 = vmatprep.subr.mxu0 %v475
    %1819 = vmatpush1.msra.mxu0 %v474
    %1820 = vmatprep.subr.mxu0 %v479
    %1821 = vmatpush1.msra.mxu0 %v478
    %1822 = vmatprep.subr.mxu0 %v483
    %1823 = vmatpush1.msra.mxu0 %v482
    %1824 = vmatprep.subr.mxu0 %v487
    %1825 = vmatpush1.msra.mxu0 %v486
    %1826 = vmatprep.subr.mxu0 %v491
    %1827 = vmatpush1.msra.mxu0 %v490
    %1828 = vmatprep.subr.mxu0 %v495
    %1829 = vmatpush1.msra.mxu0 %v494
    %1830 = vmatprep.subr.mxu0 %v499
    %1831 = vmatpush1.msra.mxu0 %v498
    %1832 = vmatprep.subr.mxu0 %v503
    %1833 = vmatpush1.msra.mxu0 %v502
    %1834 = vmatprep.subr.mxu0 %v507
    %1835 = vmatpush1.msra.mxu0 %v506
    %1836 = vmatprep.subr.mxu0 %v511
    %1837 = vmatpush1.msra.mxu0 %v510
    %1838 = vmatprep.subr.mxu0 %v515
    %1839 = vmatpush1.msra.mxu0 %v514
    %1840 = vmatprep.subr.mxu0 %v519
    %1841 = vmatpush1.msra.mxu0 %v518
    %1842 = vmatprep.subr.mxu0 %v523
    %1843 = vmatpush1.msra.mxu0 %v522
    %1844 = vmatprep.subr.mxu0 %v527
    %1845 = vmatpush1.msra.mxu0 %v526
    %1846 = vmatprep.subr.mxu0 %v531
    %1847 = vmatpush1.msra.mxu0 %v530
    %1848 = vmatprep.subr.mxu0 %v535
    %1849 = vmatpush1.msra.mxu0 %v534
    %1850 = vmatprep.subr.mxu0 %v539
    %1851 = vmatpush1.msra.mxu0 %v538
    %1852 = vmatprep.subr.mxu0 %v543
    %1853 = vmatpush1.msra.mxu0 %v542
    %1854 = vmatprep.mubr.f32.mxu0 %v1384
    %1855 = vmatmul.mubr.f32.gmra.mrb[0].mxu0 %v1718
    %v1856 = vpop.f32.mrb[0].mxu0
    %v1857 = vadd.f32 %v558, %v1856
    %v1858 = vpop.f32.mrb[0].mxu0
    %v1859 = vadd.f32 %v562, %v1858
    %1860 = vdwg.mxu0
    %v1861 = vxor.u32 %v1786, 2147483648
    %v1862 = vmul.f32 %v1861, 1.442695
    %v1863 = vpow.pop %v1862
    %v1864 = vadd.f32 %v1863, 1.0
    %v1865 = vrcp.pop %v1864
    %v1866 = vmul.f32 1.0, %v1865
    %v1867 = vxor.u32 %v1788, 2147483648
    %v1868 = vmul.f32 %v1867, 1.442695
    %v1869 = vpow.pop %v1868
    %v1870 = vadd.f32 %v1869, 1.0
    %v1871 = vrcp.pop %v1870
    %v1872 = vmul.f32 1.0, %v1871
    %v1873 = vtanh.pop %v1857
    %v1874 = vxor.u32 %v1859, 2147483648
    %v1875 = vmul.f32 %v1874, 1.442695
    %v1876 = vpow.pop %v1875
    %v1877 = vadd.f32 %v1876, 1.0
    %v1878 = vrcp.pop %v1877
    %v1879 = vmul.f32 1.0, %v1878
    %v1880 = vmul.f32 %v1872, %v1382
    %v1881 = vmul.f32 %v1866, %v1873
    %v1882 = vadd.f32 %v1880, %v1881
    %v1883 = vtanh.pop %v1882
    %v1884 = vmul.f32 %v1879, %v1883
    %1885 = vmatprep.subr.mxu0 %v735
    %1886 = vmatpush1.msra.mxu0 %v734
    %1887 = vmatprep.subr.mxu0 %v739
    %1888 = vmatpush1.msra.mxu0 %v738
    %1889 = vmatprep.subr.mxu0 %v743
    %1890 = vmatpush1.msra.mxu0 %v742
    %1891 = vmatprep.subr.mxu0 %v747
    %1892 = vmatpush1.msra.mxu0 %v746
    %1893 = vmatprep.subr.mxu0 %v751
    %1894 = vmatpush1.msra.mxu0 %v750
    %1895 = vmatprep.subr.mxu0 %v755
    %1896 = vmatpush1.msra.mxu0 %v754
    %1897 = vmatprep.subr.mxu0 %v759
    %1898 = vmatpush1.msra.mxu0 %v758
    %1899 = vmatprep.subr.mxu0 %v763
    %1900 = vmatpush1.msra.mxu0 %v762
    %1901 = vmatprep.subr.mxu0 %v767
    %1902 = vmatpush1.msra.mxu0 %v766
    %1903 = vmatprep.subr.mxu0 %v771
    %1904 = vmatpush1.msra.mxu0 %v770
    %1905 = vmatprep.subr.mxu0 %v775
    %1906 = vmatpush1.msra.mxu0 %v774
    %1907 = vmatprep.subr.mxu0 %v779
    %1908 = vmatpush1.msra.mxu0 %v778
    %1909 = vmatprep.subr.mxu0 %v783
    %1910 = vmatpush1.msra.mxu0 %v782
    %1911 = vmatprep.subr.mxu0 %v787
    %1912 = vmatpush1.msra.mxu0 %v786
    %1913 = vmatprep.subr.mxu0 %v791
    %1914 = vmatpush1.msra.mxu0 %v790
    %1915 = vmatprep.subr.mxu0 %v795
    %1916 = vmatpush1.msra.mxu0 %v794
    %1917 = vmatprep.subr.mxu0 %v799
    %1918 = vmatpush1.msra.mxu0 %v798
    %1919 = vmatprep.subr.mxu0 %v803
    %1920 = vmatpush1.msra.mxu0 %v802
    %1921 = vmatprep.subr.mxu0 %v807
    %1922 = vmatpush1.msra.mxu0 %v806
    %1923 = vmatprep.subr.mxu0 %v811
    %1924 = vmatpush1.msra.mxu0 %v810
    %1925 = vmatprep.subr.mxu0 %v815
    %1926 = vmatpush1.msra.mxu0 %v814
    %1927 = vmatprep.subr.mxu0 %v819
    %1928 = vmatpush1.msra.mxu0 %v818
    %1929 = vmatprep.subr.mxu0 %v823
    %1930 = vmatpush1.msra.mxu0 %v822
    %1931 = vmatprep.subr.mxu0 %v827
    %1932 = vmatpush1.msra.mxu0 %v826
    %1933 = vmatprep.subr.mxu0 %v831
    %1934 = vmatpush1.msra.mxu0 %v830
    %1935 = vmatprep.subr.mxu0 %v835
    %1936 = vmatpush1.msra.mxu0 %v834
    %1937 = vmatprep.subr.mxu0 %v839
    %1938 = vmatpush1.msra.mxu0 %v838
    %1939 = vmatprep.subr.mxu0 %v843
    %1940 = vmatpush1.msra.mxu0 %v842
    %1941 = vmatprep.subr.mxu0 %v847
    %1942 = vmatpush1.msra.mxu0 %v846
    %1943 = vmatprep.subr.mxu0 %v851
    %1944 = vmatpush1.msra.mxu0 %v850
    %1945 = vmatprep.subr.mxu0 %v855
    %1946 = vmatpush1.msra.mxu0 %v854
    %1947 = vmatprep.subr.mxu0 %v859
    %1948 = vmatpush1.msra.mxu0 %v858
    %1949 = vmatprep.mubr.f32.mxu0 %v1550
    %1950 = vmatmul.mubr.f32.gmra.mrb[0].mxu0 %v1884
    %v1951 = vpop.f32.mrb[0].mxu0
    %v1952 = vadd.f32 %v868, %v1951
    %v1953 = vpop.f32.mrb[0].mxu0
    %v1954 = vadd.f32 %v872, %v1953
    %1955 = vdwg.mxu0
    %1956 = vmatprep.subr.mxu0 %v737
    %1957 = vmatpush1.msra.mxu0 %v736
    %1958 = vmatprep.subr.mxu0 %v741
    %1959 = vmatpush1.msra.mxu0 %v740
    %1960 = vmatprep.subr.mxu0 %v745
    %1961 = vmatpush1.msra.mxu0 %v744
    %1962 = vmatprep.subr.mxu0 %v749
    %1963 = vmatpush1.msra.mxu0 %v748
    %1964 = vmatprep.subr.mxu0 %v753
    %1965 = vmatpush1.msra.mxu0 %v752
    %1966 = vmatprep.subr.mxu0 %v757
    %1967 = vmatpush1.msra.mxu0 %v756
    %1968 = vmatprep.subr.mxu0 %v761
    %1969 = vmatpush1.msra.mxu0 %v760
    %1970 = vmatprep.subr.mxu0 %v765
    %1971 = vmatpush1.msra.mxu0 %v764
    %1972 = vmatprep.subr.mxu0 %v769
    %1973 = vmatpush1.msra.mxu0 %v768
    %1974 = vmatprep.subr.mxu0 %v773
    %1975 = vmatpush1.msra.mxu0 %v772
    %1976 = vmatprep.subr.mxu0 %v777
    %1977 = vmatpush1.msra.mxu0 %v776
    %1978 = vmatprep.subr.mxu0 %v781
    %1979 = vmatpush1.msra.mxu0 %v780
    %1980 = vmatprep.subr.mxu0 %v785
    %1981 = vmatpush1.msra.mxu0 %v784
    %1982 = vmatprep.subr.mxu0 %v789
    %1983 = vmatpush1.msra.mxu0 %v788
    %1984 = vmatprep.subr.mxu0 %v793
    %1985 = vmatpush1.msra.mxu0 %v792
    %1986 = vmatprep.subr.mxu0 %v797
    %1987 = vmatpush1.msra.mxu0 %v796
    %1988 = vmatprep.subr.mxu0 %v801
    %1989 = vmatpush1.msra.mxu0 %v800
    %1990 = vmatprep.subr.mxu0 %v805
    %1991 = vmatpush1.msra.mxu0 %v804
    %1992 = vmatprep.subr.mxu0 %v809
    %1993 = vmatpush1.msra.mxu0 %v808
    %1994 = vmatprep.subr.mxu0 %v813
    %1995 = vmatpush1.msra.mxu0 %v812
    %1996 = vmatprep.subr.mxu0 %v817
    %1997 = vmatpush1.msra.mxu0 %v816
    %1998 = vmatprep.subr.mxu0 %v821
    %1999 = vmatpush1.msra.mxu0 %v820
    %2000 = vmatprep.subr.mxu0 %v825
    %2001 = vmatpush1.msra.mxu0 %v824
    %2002 = vmatprep.subr.mxu0 %v829
    %2003 = vmatpush1.msra.mxu0 %v828
    %2004 = vmatprep.subr.mxu0 %v833
    %2005 = vmatpush1.msra.mxu0 %v832
    %2006 = vmatprep.subr.mxu0 %v837
    %2007 = vmatpush1.msra.mxu0 %v836
    %2008 = vmatprep.subr.mxu0 %v841
    %2009 = vmatpush1.msra.mxu0 %v840
    %2010 = vmatprep.subr.mxu0 %v845
    %2011 = vmatpush1.msra.mxu0 %v844
    %2012 = vmatprep.subr.mxu0 %v849
    %2013 = vmatpush1.msra.mxu0 %v848
    %2014 = vmatprep.subr.mxu0 %v853
    %2015 = vmatpush1.msra.mxu0 %v852
    %2016 = vmatprep.subr.mxu0 %v857
    %2017 = vmatpush1.msra.mxu0 %v856
    %2018 = vmatprep.subr.mxu0 %v861
    %2019 = vmatpush1.msra.mxu0 %v860
    %2020 = vmatprep.mubr.f32.mxu0 %v1550
    %2021 = vmatmul.mubr.f32.gmra.mrb[0].mxu0 %v1884
    %v2022 = vpop.f32.mrb[0].mxu0
    %v2023 = vadd.f32 %v876, %v2022
    %v2024 = vpop.f32.mrb[0].mxu0
    %v2025 = vadd.f32 %v880, %v2024
    %2026 = vdwg.mxu0
    %v2027 = vxor.u32 %v1952, 2147483648
    %v2028 = vmul.f32 %v2027, 1.442695
    %v2029 = vpow.pop %v2028
    %v2030 = vadd.f32 %v2029, 1.0
    %v2031 = vrcp.pop %v2030
    %v2032 = vmul.f32 1.0, %v2031
    %v2033 = vxor.u32 %v1954, 2147483648
    %v2034 = vmul.f32 %v2033, 1.442695
    %v2035 = vpow.pop %v2034
    %v2036 = vadd.f32 %v2035, 1.0
    %v2037 = vrcp.pop %v2036
    %v2038 = vmul.f32 1.0, %v2037
    %v2039 = vtanh.pop %v2023
    %v2040 = vxor.u32 %v2025, 2147483648
    %v2041 = vmul.f32 %v2040, 1.442695
    %v2042 = vpow.pop %v2041
    %v2043 = vadd.f32 %v2042, 1.0
    %v2044 = vrcp.pop %v2043
    %v2045 = vmul.f32 1.0, %v2044
    %v2046 = vmul.f32 %v2038, %v1548
    %v2047 = vmul.f32 %v2032, %v2039
    %v2048 = vadd.f32 %v2046, %v2047
    %v2049 = vtanh.pop %v2048
    %v2050 = vmul.f32 %v2045, %v2049
    %s2051 = scalar_lea.vmem [#allocation3], 24
    %v2052 = vld [vmem:[%s2051] sm:$0xff]
    %2053 = vmatprep.subr.mxu0 %v100
    %2054 = vmatpush1.msra.mxu0 %v99
    %2055 = vmatprep.subr.mxu0 %v104
    %2056 = vmatpush1.msra.mxu0 %v103
    %2057 = vmatprep.subr.mxu0 %v108
    %2058 = vmatpush1.msra.mxu0 %v107
    %2059 = vmatprep.subr.mxu0 %v112
    %2060 = vmatpush1.msra.mxu0 %v111
    %2061 = vmatprep.subr.mxu0 %v116
    %2062 = vmatpush1.msra.mxu0 %v115
    %2063 = vmatprep.subr.mxu0 %v120
    %2064 = vmatpush1.msra.mxu0 %v119
    %2065 = vmatprep.subr.mxu0 %v124
    %2066 = vmatpush1.msra.mxu0 %v123
    %2067 = vmatprep.subr.mxu0 %v128
    %2068 = vmatpush1.msra.mxu0 %v127
    %2069 = vmatprep.subr.mxu0 %v132
    %2070 = vmatpush1.msra.mxu0 %v131
    %2071 = vmatprep.subr.mxu0 %v136
    %2072 = vmatpush1.msra.mxu0 %v135
    %2073 = vmatprep.subr.mxu0 %v140
    %2074 = vmatpush1.msra.mxu0 %v139
    %2075 = vmatprep.subr.mxu0 %v144
    %2076 = vmatpush1.msra.mxu0 %v143
    %2077 = vmatprep.subr.mxu0 %v148
    %2078 = vmatpush1.msra.mxu0 %v147
    %2079 = vmatprep.subr.mxu0 %v152
    %2080 = vmatpush1.msra.mxu0 %v151
    %2081 = vmatprep.subr.mxu0 %v156
    %2082 = vmatpush1.msra.mxu0 %v155
    %2083 = vmatprep.subr.mxu0 %v160
    %2084 = vmatpush1.msra.mxu0 %v159
    %2085 = vmatprep.subr.mxu0 %v164
    %2086 = vmatpush1.msra.mxu0 %v163
    %2087 = vmatprep.subr.mxu0 %v168
    %2088 = vmatpush1.msra.mxu0 %v167
    %2089 = vmatprep.subr.mxu0 %v172
    %2090 = vmatpush1.msra.mxu0 %v171
    %2091 = vmatprep.subr.mxu0 %v176
    %2092 = vmatpush1.msra.mxu0 %v175
    %2093 = vmatprep.subr.mxu0 %v180
    %2094 = vmatpush1.msra.mxu0 %v179
    %2095 = vmatprep.subr.mxu0 %v184
    %2096 = vmatpush1.msra.mxu0 %v183
    %2097 = vmatprep.subr.mxu0 %v188
    %2098 = vmatpush1.msra.mxu0 %v187
    %2099 = vmatprep.subr.mxu0 %v192
    %2100 = vmatpush1.msra.mxu0 %v191
    %2101 = vmatprep.subr.mxu0 %v196
    %2102 = vmatpush1.msra.mxu0 %v195
    %2103 = vmatprep.subr.mxu0 %v200
    %2104 = vmatpush1.msra.mxu0 %v199
    %2105 = vmatprep.subr.mxu0 %v204
    %2106 = vmatpush1.msra.mxu0 %v203
    %2107 = vmatprep.subr.mxu0 %v208
    %2108 = vmatpush1.msra.mxu0 %v207
    %2109 = vmatprep.subr.mxu0 %v212
    %2110 = vmatpush1.msra.mxu0 %v211
    %2111 = vmatprep.subr.mxu0 %v216
    %2112 = vmatpush1.msra.mxu0 %v215
    %2113 = vmatprep.subr.mxu0 %v220
    %2114 = vmatpush1.msra.mxu0 %v219
    %2115 = vmatprep.subr.mxu0 %v224
    %2116 = vmatpush1.msra.mxu0 %v223
    %2117 = vmatprep.mubr.f32.mxu0 %v1718
    %2118 = vmatmul.mubr.f32.gmra.mrb[0].mxu0 %v2052
    %v2119 = vpop.f32.mrb[0].mxu0
    %v2120 = vadd.f32 %v232, %v2119
    %v2121 = vpop.f32.mrb[0].mxu0
    %v2122 = vadd.f32 %v236, %v2121
    %2123 = vdwg.mxu0
    %2124 = vmatprep.subr.mxu0 %v102
    %2125 = vmatpush1.msra.mxu0 %v101
    %2126 = vmatprep.subr.mxu0 %v106
    %2127 = vmatpush1.msra.mxu0 %v105
    %2128 = vmatprep.subr.mxu0 %v110
    %2129 = vmatpush1.msra.mxu0 %v109
    %2130 = vmatprep.subr.mxu0 %v114
    %2131 = vmatpush1.msra.mxu0 %v113
    %2132 = vmatprep.subr.mxu0 %v118
    %2133 = vmatpush1.msra.mxu0 %v117
    %2134 = vmatprep.subr.mxu0 %v122
    %2135 = vmatpush1.msra.mxu0 %v121
    %2136 = vmatprep.subr.mxu0 %v126
    %2137 = vmatpush1.msra.mxu0 %v125
    %2138 = vmatprep.subr.mxu0 %v130
    %2139 = vmatpush1.msra.mxu0 %v129
    %2140 = vmatprep.subr.mxu0 %v134
    %2141 = vmatpush1.msra.mxu0 %v133
    %2142 = vmatprep.subr.mxu0 %v138
    %2143 = vmatpush1.msra.mxu0 %v137
    %2144 = vmatprep.subr.mxu0 %v142
    %2145 = vmatpush1.msra.mxu0 %v141
    %2146 = vmatprep.subr.mxu0 %v146
    %2147 = vmatpush1.msra.mxu0 %v145
    %2148 = vmatprep.subr.mxu0 %v150
    %2149 = vmatpush1.msra.mxu0 %v149
    %2150 = vmatprep.subr.mxu0 %v154
    %2151 = vmatpush1.msra.mxu0 %v153
    %2152 = vmatprep.subr.mxu0 %v158
    %2153 = vmatpush1.msra.mxu0 %v157
    %2154 = vmatprep.subr.mxu0 %v162
    %2155 = vmatpush1.msra.mxu0 %v161
    %2156 = vmatprep.subr.mxu0 %v166
    %2157 = vmatpush1.msra.mxu0 %v165
    %2158 = vmatprep.subr.mxu0 %v170
    %2159 = vmatpush1.msra.mxu0 %v169
    %2160 = vmatprep.subr.mxu0 %v174
    %2161 = vmatpush1.msra.mxu0 %v173
    %2162 = vmatprep.subr.mxu0 %v178
    %2163 = vmatpush1.msra.mxu0 %v177
    %2164 = vmatprep.subr.mxu0 %v182
    %2165 = vmatpush1.msra.mxu0 %v181
    %2166 = vmatprep.subr.mxu0 %v186
    %2167 = vmatpush1.msra.mxu0 %v185
    %2168 = vmatprep.subr.mxu0 %v190
    %2169 = vmatpush1.msra.mxu0 %v189
    %2170 = vmatprep.subr.mxu0 %v194
    %2171 = vmatpush1.msra.mxu0 %v193
    %2172 = vmatprep.subr.mxu0 %v198
    %2173 = vmatpush1.msra.mxu0 %v197
    %2174 = vmatprep.subr.mxu0 %v202
    %2175 = vmatpush1.msra.mxu0 %v201
    %2176 = vmatprep.subr.mxu0 %v206
    %2177 = vmatpush1.msra.mxu0 %v205
    %2178 = vmatprep.subr.mxu0 %v210
    %2179 = vmatpush1.msra.mxu0 %v209
    %2180 = vmatprep.subr.mxu0 %v214
    %2181 = vmatpush1.msra.mxu0 %v213
    %2182 = vmatprep.subr.mxu0 %v218
    %2183 = vmatpush1.msra.mxu0 %v217
    %2184 = vmatprep.subr.mxu0 %v222
    %2185 = vmatpush1.msra.mxu0 %v221
    %2186 = vmatprep.subr.mxu0 %v226
    %2187 = vmatpush1.msra.mxu0 %v225
    %2188 = vmatprep.mubr.f32.mxu0 %v1718
    %2189 = vmatmul.mubr.f32.gmra.mrb[0].mxu0 %v2052
    %v2190 = vpop.f32.mrb[0].mxu0
    %v2191 = vadd.f32 %v240, %v2190
    %v2192 = vpop.f32.mrb[0].mxu0
    %v2193 = vadd.f32 %v244, %v2192
    %2194 = vdwg.mxu0
    %v2195 = vxor.u32 %v2120, 2147483648
    %v2196 = vmul.f32 %v2195, 1.442695
    %v2197 = vpow.pop %v2196
    %v2198 = vadd.f32 %v2197, 1.0
    %v2199 = vrcp.pop %v2198
    %v2200 = vmul.f32 1.0, %v2199
    %v2201 = vxor.u32 %v2122, 2147483648
    %v2202 = vmul.f32 %v2201, 1.442695
    %v2203 = vpow.pop %v2202
    %v2204 = vadd.f32 %v2203, 1.0
    %v2205 = vrcp.pop %v2204
    %v2206 = vmul.f32 1.0, %v2205
    %v2207 = vtanh.pop %v2191
    %v2208 = vxor.u32 %v2193, 2147483648
    %v2209 = vmul.f32 %v2208, 1.442695
    %v2210 = vpow.pop %v2209
    %v2211 = vadd.f32 %v2210, 1.0
    %v2212 = vrcp.pop %v2211
    %v2213 = vmul.f32 1.0, %v2212
    %v2214 = vmul.f32 %v2206, %v1716
    %v2215 = vmul.f32 %v2200, %v2207
    %v2216 = vadd.f32 %v2214, %v2215
    %v2217 = vtanh.pop %v2216
    %v2218 = vmul.f32 %v2213, %v2217
    %2219 = vmatprep.subr.mxu0 %v417
    %2220 = vmatpush1.msra.mxu0 %v416
    %2221 = vmatprep.subr.mxu0 %v421
    %2222 = vmatpush1.msra.mxu0 %v420
    %2223 = vmatprep.subr.mxu0 %v425
    %2224 = vmatpush1.msra.mxu0 %v424
    %2225 = vmatprep.subr.mxu0 %v429
    %2226 = vmatpush1.msra.mxu0 %v428
    %2227 = vmatprep.subr.mxu0 %v433
    %2228 = vmatpush1.msra.mxu0 %v432
    %2229 = vmatprep.subr.mxu0 %v437
    %2230 = vmatpush1.msra.mxu0 %v436
    %2231 = vmatprep.subr.mxu0 %v441
    %2232 = vmatpush1.msra.mxu0 %v440
    %2233 = vmatprep.subr.mxu0 %v445
    %2234 = vmatpush1.msra.mxu0 %v444
    %2235 = vmatprep.subr.mxu0 %v449
    %2236 = vmatpush1.msra.mxu0 %v448
    %2237 = vmatprep.subr.mxu0 %v453
    %2238 = vmatpush1.msra.mxu0 %v452
    %2239 = vmatprep.subr.mxu0 %v457
    %2240 = vmatpush1.msra.mxu0 %v456
    %2241 = vmatprep.subr.mxu0 %v461
    %2242 = vmatpush1.msra.mxu0 %v460
    %2243 = vmatprep.subr.mxu0 %v465
    %2244 = vmatpush1.msra.mxu0 %v464
    %2245 = vmatprep.subr.mxu0 %v469
    %2246 = vmatpush1.msra.mxu0 %v468
    %2247 = vmatprep.subr.mxu0 %v473
    %2248 = vmatpush1.msra.mxu0 %v472
    %2249 = vmatprep.subr.mxu0 %v477
    %2250 = vmatpush1.msra.mxu0 %v476
    %2251 = vmatprep.subr.mxu0 %v481
    %2252 = vmatpush1.msra.mxu0 %v480
    %2253 = vmatprep.subr.mxu0 %v485
    %2254 = vmatpush1.msra.mxu0 %v484
    %2255 = vmatprep.subr.mxu0 %v489
    %2256 = vmatpush1.msra.mxu0 %v488
    %2257 = vmatprep.subr.mxu0 %v493
    %2258 = vmatpush1.msra.mxu0 %v492
    %2259 = vmatprep.subr.mxu0 %v497
    %2260 = vmatpush1.msra.mxu0 %v496
    %2261 = vmatprep.subr.mxu0 %v501
    %2262 = vmatpush1.msra.mxu0 %v500
    %2263 = vmatprep.subr.mxu0 %v505
    %2264 = vmatpush1.msra.mxu0 %v504
    %2265 = vmatprep.subr.mxu0 %v509
    %2266 = vmatpush1.msra.mxu0 %v508
    %2267 = vmatprep.subr.mxu0 %v513
    %2268 = vmatpush1.msra.mxu0 %v512
    %2269 = vmatprep.subr.mxu0 %v517
    %2270 = vmatpush1.msra.mxu0 %v516
    %2271 = vmatprep.subr.mxu0 %v521
    %2272 = vmatpush1.msra.mxu0 %v520
    %2273 = vmatprep.subr.mxu0 %v525
    %2274 = vmatpush1.msra.mxu0 %v524
    %2275 = vmatprep.subr.mxu0 %v529
    %2276 = vmatpush1.msra.mxu0 %v528
    %2277 = vmatprep.subr.mxu0 %v533
    %2278 = vmatpush1.msra.mxu0 %v532
    %2279 = vmatprep.subr.mxu0 %v537
    %2280 = vmatpush1.msra.mxu0 %v536
    %2281 = vmatprep.subr.mxu0 %v541
    %2282 = vmatpush1.msra.mxu0 %v540
    %2283 = vmatprep.mubr.f32.mxu0 %v1884
    %2284 = vmatmul.mubr.f32.gmra.mrb[0].mxu0 %v2218
    %v2285 = vpop.f32.mrb[0].mxu0
    %v2286 = vadd.f32 %v550, %v2285
    %v2287 = vpop.f32.mrb[0].mxu0
    %v2288 = vadd.f32 %v554, %v2287
    %2289 = vdwg.mxu0
    %2290 = vmatprep.subr.mxu0 %v419
    %2291 = vmatpush1.msra.mxu0 %v418
    %2292 = vmatprep.subr.mxu0 %v423
    %2293 = vmatpush1.msra.mxu0 %v422
    %2294 = vmatprep.subr.mxu0 %v427
    %2295 = vmatpush1.msra.mxu0 %v426
    %2296 = vmatprep.subr.mxu0 %v431
    %2297 = vmatpush1.msra.mxu0 %v430
    %2298 = vmatprep.subr.mxu0 %v435
    %2299 = vmatpush1.msra.mxu0 %v434
    %2300 = vmatprep.subr.mxu0 %v439
    %2301 = vmatpush1.msra.mxu0 %v438
    %2302 = vmatprep.subr.mxu0 %v443
    %2303 = vmatpush1.msra.mxu0 %v442
    %2304 = vmatprep.subr.mxu0 %v447
    %2305 = vmatpush1.msra.mxu0 %v446
    %2306 = vmatprep.subr.mxu0 %v451
    %2307 = vmatpush1.msra.mxu0 %v450
    %2308 = vmatprep.subr.mxu0 %v455
    %2309 = vmatpush1.msra.mxu0 %v454
    %2310 = vmatprep.subr.mxu0 %v459
    %2311 = vmatpush1.msra.mxu0 %v458
    %2312 = vmatprep.subr.mxu0 %v463
    %2313 = vmatpush1.msra.mxu0 %v462
    %2314 = vmatprep.subr.mxu0 %v467
    %2315 = vmatpush1.msra.mxu0 %v466
    %2316 = vmatprep.subr.mxu0 %v471
    %2317 = vmatpush1.msra.mxu0 %v470
    %2318 = vmatprep.subr.mxu0 %v475
    %2319 = vmatpush1.msra.mxu0 %v474
    %2320 = vmatprep.subr.mxu0 %v479
    %2321 = vmatpush1.msra.mxu0 %v478
    %2322 = vmatprep.subr.mxu0 %v483
    %2323 = vmatpush1.msra.mxu0 %v482
    %2324 = vmatprep.subr.mxu0 %v487
    %2325 = vmatpush1.msra.mxu0 %v486
    %2326 = vmatprep.subr.mxu0 %v491
    %2327 = vmatpush1.msra.mxu0 %v490
    %2328 = vmatprep.subr.mxu0 %v495
    %2329 = vmatpush1.msra.mxu0 %v494
    %2330 = vmatprep.subr.mxu0 %v499
    %2331 = vmatpush1.msra.mxu0 %v498
    %2332 = vmatprep.subr.mxu0 %v503
    %2333 = vmatpush1.msra.mxu0 %v502
    %2334 = vmatprep.subr.mxu0 %v507
    %2335 = vmatpush1.msra.mxu0 %v506
    %2336 = vmatprep.subr.mxu0 %v511
    %2337 = vmatpush1.msra.mxu0 %v510
    %2338 = vmatprep.subr.mxu0 %v515
    %2339 = vmatpush1.msra.mxu0 %v514
    %2340 = vmatprep.subr.mxu0 %v519
    %2341 = vmatpush1.msra.mxu0 %v518
    %2342 = vmatprep.subr.mxu0 %v523
    %2343 = vmatpush1.msra.mxu0 %v522
    %2344 = vmatprep.subr.mxu0 %v527
    %2345 = vmatpush1.msra.mxu0 %v526
    %2346 = vmatprep.subr.mxu0 %v531
    %2347 = vmatpush1.msra.mxu0 %v530
    %2348 = vmatprep.subr.mxu0 %v535
    %2349 = vmatpush1.msra.mxu0 %v534
    %2350 = vmatprep.subr.mxu0 %v539
    %2351 = vmatpush1.msra.mxu0 %v538
    %2352 = vmatprep.subr.mxu0 %v543
    %2353 = vmatpush1.msra.mxu0 %v542
    %2354 = vmatprep.mubr.f32.mxu0 %v1884
    %2355 = vmatmul.mubr.f32.gmra.mrb[0].mxu0 %v2218
    %v2356 = vpop.f32.mrb[0].mxu0
    %v2357 = vadd.f32 %v558, %v2356
    %v2358 = vpop.f32.mrb[0].mxu0
    %v2359 = vadd.f32 %v562, %v2358
    %2360 = vdwg.mxu0
    %v2361 = vxor.u32 %v2286, 2147483648
    %v2362 = vmul.f32 %v2361, 1.442695
    %v2363 = vpow.pop %v2362
    %v2364 = vadd.f32 %v2363, 1.0
    %v2365 = vrcp.pop %v2364
    %v2366 = vmul.f32 1.0, %v2365
    %v2367 = vxor.u32 %v2288, 2147483648
    %v2368 = vmul.f32 %v2367, 1.442695
    %v2369 = vpow.pop %v2368
    %v2370 = vadd.f32 %v2369, 1.0
    %v2371 = vrcp.pop %v2370
    %v2372 = vmul.f32 1.0, %v2371
    %v2373 = vtanh.pop %v2357
    %v2374 = vxor.u32 %v2359, 2147483648
    %v2375 = vmul.f32 %v2374, 1.442695
    %v2376 = vpow.pop %v2375
    %v2377 = vadd.f32 %v2376, 1.0
    %v2378 = vrcp.pop %v2377
    %v2379 = vmul.f32 1.0, %v2378
    %v2380 = vmul.f32 %v2372, %v1882
    %v2381 = vmul.f32 %v2366, %v2373
    %v2382 = vadd.f32 %v2380, %v2381
    %v2383 = vtanh.pop %v2382
    %v2384 = vmul.f32 %v2379, %v2383
    %2385 = vmatprep.subr.mxu0 %v735
    %2386 = vmatpush1.msra.mxu0 %v734
    %2387 = vmatprep.subr.mxu0 %v739
    %2388 = vmatpush1.msra.mxu0 %v738
    %2389 = vmatprep.subr.mxu0 %v743
    %2390 = vmatpush1.msra.mxu0 %v742
    %2391 = vmatprep.subr.mxu0 %v747
    %2392 = vmatpush1.msra.mxu0 %v746
    %2393 = vmatprep.subr.mxu0 %v751
    %2394 = vmatpush1.msra.mxu0 %v750
    %2395 = vmatprep.subr.mxu0 %v755
    %2396 = vmatpush1.msra.mxu0 %v754
    %2397 = vmatprep.subr.mxu0 %v759
    %2398 = vmatpush1.msra.mxu0 %v758
    %2399 = vmatprep.subr.mxu0 %v763
    %2400 = vmatpush1.msra.mxu0 %v762
    %2401 = vmatprep.subr.mxu0 %v767
    %2402 = vmatpush1.msra.mxu0 %v766
    %2403 = vmatprep.subr.mxu0 %v771
    %2404 = vmatpush1.msra.mxu0 %v770
    %2405 = vmatprep.subr.mxu0 %v775
    %2406 = vmatpush1.msra.mxu0 %v774
    %2407 = vmatprep.subr.mxu0 %v779
    %2408 = vmatpush1.msra.mxu0 %v778
    %2409 = vmatprep.subr.mxu0 %v783
    %2410 = vmatpush1.msra.mxu0 %v782
    %2411 = vmatprep.subr.mxu0 %v787
    %2412 = vmatpush1.msra.mxu0 %v786
    %2413 = vmatprep.subr.mxu0 %v791
    %2414 = vmatpush1.msra.mxu0 %v790
    %2415 = vmatprep.subr.mxu0 %v795
    %2416 = vmatpush1.msra.mxu0 %v794
    %2417 = vmatprep.subr.mxu0 %v799
    %2418 = vmatpush1.msra.mxu0 %v798
    %2419 = vmatprep.subr.mxu0 %v803
    %2420 = vmatpush1.msra.mxu0 %v802
    %2421 = vmatprep.subr.mxu0 %v807
    %2422 = vmatpush1.msra.mxu0 %v806
    %2423 = vmatprep.subr.mxu0 %v811
    %2424 = vmatpush1.msra.mxu0 %v810
    %2425 = vmatprep.subr.mxu0 %v815
    %2426 = vmatpush1.msra.mxu0 %v814
    %2427 = vmatprep.subr.mxu0 %v819
    %2428 = vmatpush1.msra.mxu0 %v818
    %2429 = vmatprep.subr.mxu0 %v823
    %2430 = vmatpush1.msra.mxu0 %v822
    %2431 = vmatprep.subr.mxu0 %v827
    %2432 = vmatpush1.msra.mxu0 %v826
    %2433 = vmatprep.subr.mxu0 %v831
    %2434 = vmatpush1.msra.mxu0 %v830
    %2435 = vmatprep.subr.mxu0 %v835
    %2436 = vmatpush1.msra.mxu0 %v834
    %2437 = vmatprep.subr.mxu0 %v839
    %2438 = vmatpush1.msra.mxu0 %v838
    %2439 = vmatprep.subr.mxu0 %v843
    %2440 = vmatpush1.msra.mxu0 %v842
    %2441 = vmatprep.subr.mxu0 %v847
    %2442 = vmatpush1.msra.mxu0 %v846
    %2443 = vmatprep.subr.mxu0 %v851
    %2444 = vmatpush1.msra.mxu0 %v850
    %2445 = vmatprep.subr.mxu0 %v855
    %2446 = vmatpush1.msra.mxu0 %v854
    %2447 = vmatprep.subr.mxu0 %v859
    %2448 = vmatpush1.msra.mxu0 %v858
    %2449 = vmatprep.mubr.f32.mxu0 %v2050
    %2450 = vmatmul.mubr.f32.gmra.mrb[0].mxu0 %v2384
    %v2451 = vpop.f32.mrb[0].mxu0
    %v2452 = vadd.f32 %v868, %v2451
    %v2453 = vpop.f32.mrb[0].mxu0
    %v2454 = vadd.f32 %v872, %v2453
    %2455 = vdwg.mxu0
    %2456 = vmatprep.subr.mxu0 %v737
    %2457 = vmatpush1.msra.mxu0 %v736
    %2458 = vmatprep.subr.mxu0 %v741
    %2459 = vmatpush1.msra.mxu0 %v740
    %2460 = vmatprep.subr.mxu0 %v745
    %2461 = vmatpush1.msra.mxu0 %v744
    %2462 = vmatprep.subr.mxu0 %v749
    %2463 = vmatpush1.msra.mxu0 %v748
    %2464 = vmatprep.subr.mxu0 %v753
    %2465 = vmatpush1.msra.mxu0 %v752
    %2466 = vmatprep.subr.mxu0 %v757
    %2467 = vmatpush1.msra.mxu0 %v756
    %2468 = vmatprep.subr.mxu0 %v761
    %2469 = vmatpush1.msra.mxu0 %v760
    %2470 = vmatprep.subr.mxu0 %v765
    %2471 = vmatpush1.msra.mxu0 %v764
    %2472 = vmatprep.subr.mxu0 %v769
    %2473 = vmatpush1.msra.mxu0 %v768
    %2474 = vmatprep.subr.mxu0 %v773
    %2475 = vmatpush1.msra.mxu0 %v772
    %2476 = vmatprep.subr.mxu0 %v777
    %2477 = vmatpush1.msra.mxu0 %v776
    %2478 = vmatprep.subr.mxu0 %v781
    %2479 = vmatpush1.msra.mxu0 %v780
    %2480 = vmatprep.subr.mxu0 %v785
    %2481 = vmatpush1.msra.mxu0 %v784
    %2482 = vmatprep.subr.mxu0 %v789
    %2483 = vmatpush1.msra.mxu0 %v788
    %2484 = vmatprep.subr.mxu0 %v793
    %2485 = vmatpush1.msra.mxu0 %v792
    %2486 = vmatprep.subr.mxu0 %v797
    %2487 = vmatpush1.msra.mxu0 %v796
    %2488 = vmatprep.subr.mxu0 %v801
    %2489 = vmatpush1.msra.mxu0 %v800
    %2490 = vmatprep.subr.mxu0 %v805
    %2491 = vmatpush1.msra.mxu0 %v804
    %2492 = vmatprep.subr.mxu0 %v809
    %2493 = vmatpush1.msra.mxu0 %v808
    %2494 = vmatprep.subr.mxu0 %v813
    %2495 = vmatpush1.msra.mxu0 %v812
    %2496 = vmatprep.subr.mxu0 %v817
    %2497 = vmatpush1.msra.mxu0 %v816
    %2498 = vmatprep.subr.mxu0 %v821
    %2499 = vmatpush1.msra.mxu0 %v820
    %2500 = vmatprep.subr.mxu0 %v825
    %2501 = vmatpush1.msra.mxu0 %v824
    %2502 = vmatprep.subr.mxu0 %v829
    %2503 = vmatpush1.msra.mxu0 %v828
    %2504 = vmatprep.subr.mxu0 %v833
    %2505 = vmatpush1.msra.mxu0 %v832
    %2506 = vmatprep.subr.mxu0 %v837
    %2507 = vmatpush1.msra.mxu0 %v836
    %2508 = vmatprep.subr.mxu0 %v841
    %2509 = vmatpush1.msra.mxu0 %v840
    %2510 = vmatprep.subr.mxu0 %v845
    %2511 = vmatpush1.msra.mxu0 %v844
    %2512 = vmatprep.subr.mxu0 %v849
    %2513 = vmatpush1.msra.mxu0 %v848
    %2514 = vmatprep.subr.mxu0 %v853
    %2515 = vmatpush1.msra.mxu0 %v852
    %2516 = vmatprep.subr.mxu0 %v857
    %2517 = vmatpush1.msra.mxu0 %v856
    %2518 = vmatprep.subr.mxu0 %v861
    %2519 = vmatpush1.msra.mxu0 %v860
    %2520 = vmatprep.mubr.f32.mxu0 %v2050
    %2521 = vmatmul.mubr.f32.gmra.mrb[0].mxu0 %v2384
    %v2522 = vpop.f32.mrb[0].mxu0
    %v2523 = vadd.f32 %v876, %v2522
    %v2524 = vpop.f32.mrb[0].mxu0
    %v2525 = vadd.f32 %v880, %v2524
    %2526 = vdwg.mxu0
    %v2527 = vxor.u32 %v2452, 2147483648
    %v2528 = vmul.f32 %v2527, 1.442695
    %v2529 = vpow.pop %v2528
    %v2530 = vadd.f32 %v2529, 1.0
    %v2531 = vrcp.pop %v2530
    %v2532 = vmul.f32 1.0, %v2531
    %v2533 = vxor.u32 %v2454, 2147483648
    %v2534 = vmul.f32 %v2533, 1.442695
    %v2535 = vpow.pop %v2534
    %v2536 = vadd.f32 %v2535, 1.0
    %v2537 = vrcp.pop %v2536
    %v2538 = vmul.f32 1.0, %v2537
    %v2539 = vtanh.pop %v2523
    %v2540 = vxor.u32 %v2525, 2147483648
    %v2541 = vmul.f32 %v2540, 1.442695
    %v2542 = vpow.pop %v2541
    %v2543 = vadd.f32 %v2542, 1.0
    %v2544 = vrcp.pop %v2543
    %v2545 = vmul.f32 1.0, %v2544
    %v2546 = vmul.f32 %v2538, %v2048
    %v2547 = vmul.f32 %v2532, %v2539
    %v2548 = vadd.f32 %v2546, %v2547
    %v2549 = vtanh.pop %v2548
    %v2550 = vmul.f32 %v2545, %v2549
    %s2551 = scalar_lea.vmem [#allocation3], 32
    %v2552 = vld [vmem:[%s2551] sm:$0xff]
    %2553 = vmatprep.subr.mxu0 %v100
    %2554 = vmatpush1.msra.mxu0 %v99
    %2555 = vmatprep.subr.mxu0 %v104
    %2556 = vmatpush1.msra.mxu0 %v103
    %2557 = vmatprep.subr.mxu0 %v108
    %2558 = vmatpush1.msra.mxu0 %v107
    %2559 = vmatprep.subr.mxu0 %v112
    %2560 = vmatpush1.msra.mxu0 %v111
    %2561 = vmatprep.subr.mxu0 %v116
    %2562 = vmatpush1.msra.mxu0 %v115
    %2563 = vmatprep.subr.mxu0 %v120
    %2564 = vmatpush1.msra.mxu0 %v119
    %2565 = vmatprep.subr.mxu0 %v124
    %2566 = vmatpush1.msra.mxu0 %v123
    %2567 = vmatprep.subr.mxu0 %v128
    %2568 = vmatpush1.msra.mxu0 %v127
    %2569 = vmatprep.subr.mxu0 %v132
    %2570 = vmatpush1.msra.mxu0 %v131
    %2571 = vmatprep.subr.mxu0 %v136
    %2572 = vmatpush1.msra.mxu0 %v135
    %2573 = vmatprep.subr.mxu0 %v140
    %2574 = vmatpush1.msra.mxu0 %v139
    %2575 = vmatprep.subr.mxu0 %v144
    %2576 = vmatpush1.msra.mxu0 %v143
    %2577 = vmatprep.subr.mxu0 %v148
    %2578 = vmatpush1.msra.mxu0 %v147
    %2579 = vmatprep.subr.mxu0 %v152
    %2580 = vmatpush1.msra.mxu0 %v151
    %2581 = vmatprep.subr.mxu0 %v156
    %2582 = vmatpush1.msra.mxu0 %v155
    %2583 = vmatprep.subr.mxu0 %v160
    %2584 = vmatpush1.msra.mxu0 %v159
    %2585 = vmatprep.subr.mxu0 %v164
    %2586 = vmatpush1.msra.mxu0 %v163
    %2587 = vmatprep.subr.mxu0 %v168
    %2588 = vmatpush1.msra.mxu0 %v167
    %2589 = vmatprep.subr.mxu0 %v172
    %2590 = vmatpush1.msra.mxu0 %v171
    %2591 = vmatprep.subr.mxu0 %v176
    %2592 = vmatpush1.msra.mxu0 %v175
    %2593 = vmatprep.subr.mxu0 %v180
    %2594 = vmatpush1.msra.mxu0 %v179
    %2595 = vmatprep.subr.mxu0 %v184
    %2596 = vmatpush1.msra.mxu0 %v183
    %2597 = vmatprep.subr.mxu0 %v188
    %2598 = vmatpush1.msra.mxu0 %v187
    %2599 = vmatprep.subr.mxu0 %v192
    %2600 = vmatpush1.msra.mxu0 %v191
    %2601 = vmatprep.subr.mxu0 %v196
    %2602 = vmatpush1.msra.mxu0 %v195
    %2603 = vmatprep.subr.mxu0 %v200
    %2604 = vmatpush1.msra.mxu0 %v199
    %2605 = vmatprep.subr.mxu0 %v204
    %2606 = vmatpush1.msra.mxu0 %v203
    %2607 = vmatprep.subr.mxu0 %v208
    %2608 = vmatpush1.msra.mxu0 %v207
    %2609 = vmatprep.subr.mxu0 %v212
    %2610 = vmatpush1.msra.mxu0 %v211
    %2611 = vmatprep.subr.mxu0 %v216
    %2612 = vmatpush1.msra.mxu0 %v215
    %2613 = vmatprep.subr.mxu0 %v220
    %2614 = vmatpush1.msra.mxu0 %v219
    %2615 = vmatprep.subr.mxu0 %v224
    %2616 = vmatpush1.msra.mxu0 %v223
    %2617 = vmatprep.mubr.f32.mxu0 %v2218
    %2618 = vmatmul.mubr.f32.gmra.mrb[0].mxu0 %v2552
    %v2619 = vpop.f32.mrb[0].mxu0
    %v2620 = vadd.f32 %v232, %v2619
    %v2621 = vpop.f32.mrb[0].mxu0
    %v2622 = vadd.f32 %v236, %v2621
    %2623 = vdwg.mxu0
    %2624 = vmatprep.subr.mxu0 %v102
    %2625 = vmatpush1.msra.mxu0 %v101
    %2626 = vmatprep.subr.mxu0 %v106
    %2627 = vmatpush1.msra.mxu0 %v105
    %2628 = vmatprep.subr.mxu0 %v110
    %2629 = vmatpush1.msra.mxu0 %v109
    %2630 = vmatprep.subr.mxu0 %v114
    %2631 = vmatpush1.msra.mxu0 %v113
    %2632 = vmatprep.subr.mxu0 %v118
    %2633 = vmatpush1.msra.mxu0 %v117
    %2634 = vmatprep.subr.mxu0 %v122
    %2635 = vmatpush1.msra.mxu0 %v121
    %2636 = vmatprep.subr.mxu0 %v126
    %2637 = vmatpush1.msra.mxu0 %v125
    %2638 = vmatprep.subr.mxu0 %v130
    %2639 = vmatpush1.msra.mxu0 %v129
    %2640 = vmatprep.subr.mxu0 %v134
    %2641 = vmatpush1.msra.mxu0 %v133
    %2642 = vmatprep.subr.mxu0 %v138
    %2643 = vmatpush1.msra.mxu0 %v137
    %2644 = vmatprep.subr.mxu0 %v142
    %2645 = vmatpush1.msra.mxu0 %v141
    %2646 = vmatprep.subr.mxu0 %v146
    %2647 = vmatpush1.msra.mxu0 %v145
    %2648 = vmatprep.subr.mxu0 %v150
    %2649 = vmatpush1.msra.mxu0 %v149
    %2650 = vmatprep.subr.mxu0 %v154
    %2651 = vmatpush1.msra.mxu0 %v153
    %2652 = vmatprep.subr.mxu0 %v158
    %2653 = vmatpush1.msra.mxu0 %v157
    %2654 = vmatprep.subr.mxu0 %v162
    %2655 = vmatpush1.msra.mxu0 %v161
    %2656 = vmatprep.subr.mxu0 %v166
    %2657 = vmatpush1.msra.mxu0 %v165
    %2658 = vmatprep.subr.mxu0 %v170
    %2659 = vmatpush1.msra.mxu0 %v169
    %2660 = vmatprep.subr.mxu0 %v174
    %2661 = vmatpush1.msra.mxu0 %v173
    %2662 = vmatprep.subr.mxu0 %v178
    %2663 = vmatpush1.msra.mxu0 %v177
    %2664 = vmatprep.subr.mxu0 %v182
    %2665 = vmatpush1.msra.mxu0 %v181
    %2666 = vmatprep.subr.mxu0 %v186
    %2667 = vmatpush1.msra.mxu0 %v185
    %2668 = vmatprep.subr.mxu0 %v190
    %2669 = vmatpush1.msra.mxu0 %v189
    %2670 = vmatprep.subr.mxu0 %v194
    %2671 = vmatpush1.msra.mxu0 %v193
    %2672 = vmatprep.subr.mxu0 %v198
    %2673 = vmatpush1.msra.mxu0 %v197
    %2674 = vmatprep.subr.mxu0 %v202
    %2675 = vmatpush1.msra.mxu0 %v201
    %2676 = vmatprep.subr.mxu0 %v206
    %2677 = vmatpush1.msra.mxu0 %v205
    %2678 = vmatprep.subr.mxu0 %v210
    %2679 = vmatpush1.msra.mxu0 %v209
    %2680 = vmatprep.subr.mxu0 %v214
    %2681 = vmatpush1.msra.mxu0 %v213
    %2682 = vmatprep.subr.mxu0 %v218
    %2683 = vmatpush1.msra.mxu0 %v217
    %2684 = vmatprep.subr.mxu0 %v222
    %2685 = vmatpush1.msra.mxu0 %v221
    %2686 = vmatprep.subr.mxu0 %v226
    %2687 = vmatpush1.msra.mxu0 %v225
    %2688 = vmatprep.mubr.f32.mxu0 %v2218
    %2689 = vmatmul.mubr.f32.gmra.mrb[0].mxu0 %v2552
    %v2690 = vpop.f32.mrb[0].mxu0
    %v2691 = vadd.f32 %v240, %v2690
    %v2692 = vpop.f32.mrb[0].mxu0
    %v2693 = vadd.f32 %v244, %v2692
    %2694 = vdwg.mxu0
    %v2695 = vxor.u32 %v2620, 2147483648
    %v2696 = vmul.f32 %v2695, 1.442695
    %v2697 = vpow.pop %v2696
    %v2698 = vadd.f32 %v2697, 1.0
    %v2699 = vrcp.pop %v2698
    %v2700 = vmul.f32 1.0, %v2699
    %v2701 = vxor.u32 %v2622, 2147483648
    %v2702 = vmul.f32 %v2701, 1.442695
    %v2703 = vpow.pop %v2702
    %v2704 = vadd.f32 %v2703, 1.0
    %v2705 = vrcp.pop %v2704
    %v2706 = vmul.f32 1.0, %v2705
    %v2707 = vtanh.pop %v2691
    %v2708 = vxor.u32 %v2693, 2147483648
    %v2709 = vmul.f32 %v2708, 1.442695
    %v2710 = vpow.pop %v2709
    %v2711 = vadd.f32 %v2710, 1.0
    %v2712 = vrcp.pop %v2711
    %v2713 = vmul.f32 1.0, %v2712
    %v2714 = vmul.f32 %v2706, %v2216
    %v2715 = vmul.f32 %v2700, %v2707
    %v2716 = vadd.f32 %v2714, %v2715
    %v2717 = vtanh.pop %v2716
    %v2718 = vmul.f32 %v2713, %v2717
    %2719 = vmatprep.subr.mxu0 %v417
    %2720 = vmatpush1.msra.mxu0 %v416
    %2721 = vmatprep.subr.mxu0 %v421
    %2722 = vmatpush1.msra.mxu0 %v420
    %2723 = vmatprep.subr.mxu0 %v425
    %2724 = vmatpush1.msra.mxu0 %v424
    %2725 = vmatprep.subr.mxu0 %v429
    %2726 = vmatpush1.msra.mxu0 %v428
    %2727 = vmatprep.subr.mxu0 %v433
    %2728 = vmatpush1.msra.mxu0 %v432
    %2729 = vmatprep.subr.mxu0 %v437
    %2730 = vmatpush1.msra.mxu0 %v436
    %2731 = vmatprep.subr.mxu0 %v441
    %2732 = vmatpush1.msra.mxu0 %v440
    %2733 = vmatprep.subr.mxu0 %v445
    %2734 = vmatpush1.msra.mxu0 %v444
    %2735 = vmatprep.subr.mxu0 %v449
    %2736 = vmatpush1.msra.mxu0 %v448
    %2737 = vmatprep.subr.mxu0 %v453
    %2738 = vmatpush1.msra.mxu0 %v452
    %2739 = vmatprep.subr.mxu0 %v457
    %2740 = vmatpush1.msra.mxu0 %v456
    %2741 = vmatprep.subr.mxu0 %v461
    %2742 = vmatpush1.msra.mxu0 %v460
    %2743 = vmatprep.subr.mxu0 %v465
    %2744 = vmatpush1.msra.mxu0 %v464
    %2745 = vmatprep.subr.mxu0 %v469
    %2746 = vmatpush1.msra.mxu0 %v468
    %2747 = vmatprep.subr.mxu0 %v473
    %2748 = vmatpush1.msra.mxu0 %v472
    %2749 = vmatprep.subr.mxu0 %v477
    %2750 = vmatpush1.msra.mxu0 %v476
    %2751 = vmatprep.subr.mxu0 %v481
    %2752 = vmatpush1.msra.mxu0 %v480
    %2753 = vmatprep.subr.mxu0 %v485
    %2754 = vmatpush1.msra.mxu0 %v484
    %2755 = vmatprep.subr.mxu0 %v489
    %2756 = vmatpush1.msra.mxu0 %v488
    %2757 = vmatprep.subr.mxu0 %v493
    %2758 = vmatpush1.msra.mxu0 %v492
    %2759 = vmatprep.subr.mxu0 %v497
    %2760 = vmatpush1.msra.mxu0 %v496
    %2761 = vmatprep.subr.mxu0 %v501
    %2762 = vmatpush1.msra.mxu0 %v500
    %2763 = vmatprep.subr.mxu0 %v505
    %2764 = vmatpush1.msra.mxu0 %v504
    %2765 = vmatprep.subr.mxu0 %v509
    %2766 = vmatpush1.msra.mxu0 %v508
    %2767 = vmatprep.subr.mxu0 %v513
    %2768 = vmatpush1.msra.mxu0 %v512
    %2769 = vmatprep.subr.mxu0 %v517
    %2770 = vmatpush1.msra.mxu0 %v516
    %2771 = vmatprep.subr.mxu0 %v521
    %2772 = vmatpush1.msra.mxu0 %v520
    %2773 = vmatprep.subr.mxu0 %v525
    %2774 = vmatpush1.msra.mxu0 %v524
    %2775 = vmatprep.subr.mxu0 %v529
    %2776 = vmatpush1.msra.mxu0 %v528
    %2777 = vmatprep.subr.mxu0 %v533
    %2778 = vmatpush1.msra.mxu0 %v532
    %2779 = vmatprep.subr.mxu0 %v537
    %2780 = vmatpush1.msra.mxu0 %v536
    %2781 = vmatprep.subr.mxu0 %v541
    %2782 = vmatpush1.msra.mxu0 %v540
    %2783 = vmatprep.mubr.f32.mxu0 %v2384
    %2784 = vmatmul.mubr.f32.gmra.mrb[0].mxu0 %v2718
    %v2785 = vpop.f32.mrb[0].mxu0
    %v2786 = vadd.f32 %v550, %v2785
    %v2787 = vpop.f32.mrb[0].mxu0
    %v2788 = vadd.f32 %v554, %v2787
    %2789 = vdwg.mxu0
    %2790 = vmatprep.subr.mxu0 %v419
    %2791 = vmatpush1.msra.mxu0 %v418
    %2792 = vmatprep.subr.mxu0 %v423
    %2793 = vmatpush1.msra.mxu0 %v422
    %2794 = vmatprep.subr.mxu0 %v427
    %2795 = vmatpush1.msra.mxu0 %v426
    %2796 = vmatprep.subr.mxu0 %v431
    %2797 = vmatpush1.msra.mxu0 %v430
    %2798 = vmatprep.subr.mxu0 %v435
    %2799 = vmatpush1.msra.mxu0 %v434
    %2800 = vmatprep.subr.mxu0 %v439
    %2801 = vmatpush1.msra.mxu0 %v438
    %2802 = vmatprep.subr.mxu0 %v443
    %2803 = vmatpush1.msra.mxu0 %v442
    %2804 = vmatprep.subr.mxu0 %v447
    %2805 = vmatpush1.msra.mxu0 %v446
    %2806 = vmatprep.subr.mxu0 %v451
    %2807 = vmatpush1.msra.mxu0 %v450
    %2808 = vmatprep.subr.mxu0 %v455
    %2809 = vmatpush1.msra.mxu0 %v454
    %2810 = vmatprep.subr.mxu0 %v459
    %2811 = vmatpush1.msra.mxu0 %v458
    %2812 = vmatprep.subr.mxu0 %v463
    %2813 = vmatpush1.msra.mxu0 %v462
    %2814 = vmatprep.subr.mxu0 %v467
    %2815 = vmatpush1.msra.mxu0 %v466
    %2816 = vmatprep.subr.mxu0 %v471
    %2817 = vmatpush1.msra.mxu0 %v470
    %2818 = vmatprep.subr.mxu0 %v475
    %2819 = vmatpush1.msra.mxu0 %v474
    %2820 = vmatprep.subr.mxu0 %v479
    %2821 = vmatpush1.msra.mxu0 %v478
    %2822 = vmatprep.subr.mxu0 %v483
    %2823 = vmatpush1.msra.mxu0 %v482
    %2824 = vmatprep.subr.mxu0 %v487
    %2825 = vmatpush1.msra.mxu0 %v486
    %2826 = vmatprep.subr.mxu0 %v491
    %2827 = vmatpush1.msra.mxu0 %v490
    %2828 = vmatprep.subr.mxu0 %v495
    %2829 = vmatpush1.msra.mxu0 %v494
    %2830 = vmatprep.subr.mxu0 %v499
    %2831 = vmatpush1.msra.mxu0 %v498
    %2832 = vmatprep.subr.mxu0 %v503
    %2833 = vmatpush1.msra.mxu0 %v502
    %2834 = vmatprep.subr.mxu0 %v507
    %2835 = vmatpush1.msra.mxu0 %v506
    %2836 = vmatprep.subr.mxu0 %v511
    %2837 = vmatpush1.msra.mxu0 %v510
    %2838 = vmatprep.subr.mxu0 %v515
    %2839 = vmatpush1.msra.mxu0 %v514
    %2840 = vmatprep.subr.mxu0 %v519
    %2841 = vmatpush1.msra.mxu0 %v518
    %2842 = vmatprep.subr.mxu0 %v523
    %2843 = vmatpush1.msra.mxu0 %v522
    %2844 = vmatprep.subr.mxu0 %v527
    %2845 = vmatpush1.msra.mxu0 %v526
    %2846 = vmatprep.subr.mxu0 %v531
    %2847 = vmatpush1.msra.mxu0 %v530
    %2848 = vmatprep.subr.mxu0 %v535
    %2849 = vmatpush1.msra.mxu0 %v534
    %2850 = vmatprep.subr.mxu0 %v539
    %2851 = vmatpush1.msra.mxu0 %v538
    %2852 = vmatprep.subr.mxu0 %v543
    %2853 = vmatpush1.msra.mxu0 %v542
    %2854 = vmatprep.mubr.f32.mxu0 %v2384
    %2855 = vmatmul.mubr.f32.gmra.mrb[0].mxu0 %v2718
    %v2856 = vpop.f32.mrb[0].mxu0
    %v2857 = vadd.f32 %v558, %v2856
    %v2858 = vpop.f32.mrb[0].mxu0
    %v2859 = vadd.f32 %v562, %v2858
    %2860 = vdwg.mxu0
    %v2861 = vxor.u32 %v2786, 2147483648
    %v2862 = vmul.f32 %v2861, 1.442695
    %v2863 = vpow.pop %v2862
    %v2864 = vadd.f32 %v2863, 1.0
    %v2865 = vrcp.pop %v2864
    %v2866 = vmul.f32 1.0, %v2865
    %v2867 = vxor.u32 %v2788, 2147483648
    %v2868 = vmul.f32 %v2867, 1.442695
    %v2869 = vpow.pop %v2868
    %v2870 = vadd.f32 %v2869, 1.0
    %v2871 = vrcp.pop %v2870
    %v2872 = vmul.f32 1.0, %v2871
    %v2873 = vtanh.pop %v2857
    %v2874 = vxor.u32 %v2859, 2147483648
    %v2875 = vmul.f32 %v2874, 1.442695
    %v2876 = vpow.pop %v2875
    %v2877 = vadd.f32 %v2876, 1.0
    %v2878 = vrcp.pop %v2877
    %v2879 = vmul.f32 1.0, %v2878
    %v2880 = vmul.f32 %v2872, %v2382
    %v2881 = vmul.f32 %v2866, %v2873
    %v2882 = vadd.f32 %v2880, %v2881
    %v2883 = vtanh.pop %v2882
    %v2884 = vmul.f32 %v2879, %v2883
    %2885 = vmatprep.subr.mxu0 %v735
    %2886 = vmatpush1.msra.mxu0 %v734
    %2887 = vmatprep.subr.mxu0 %v739
    %2888 = vmatpush1.msra.mxu0 %v738
    %2889 = vmatprep.subr.mxu0 %v743
    %2890 = vmatpush1.msra.mxu0 %v742
    %2891 = vmatprep.subr.mxu0 %v747
    %2892 = vmatpush1.msra.mxu0 %v746
    %2893 = vmatprep.subr.mxu0 %v751
    %2894 = vmatpush1.msra.mxu0 %v750
    %2895 = vmatprep.subr.mxu0 %v755
    %2896 = vmatpush1.msra.mxu0 %v754
    %2897 = vmatprep.subr.mxu0 %v759
    %2898 = vmatpush1.msra.mxu0 %v758
    %2899 = vmatprep.subr.mxu0 %v763
    %2900 = vmatpush1.msra.mxu0 %v762
    %2901 = vmatprep.subr.mxu0 %v767
    %2902 = vmatpush1.msra.mxu0 %v766
    %2903 = vmatprep.subr.mxu0 %v771
    %2904 = vmatpush1.msra.mxu0 %v770
    %2905 = vmatprep.subr.mxu0 %v775
    %2906 = vmatpush1.msra.mxu0 %v774
    %2907 = vmatprep.subr.mxu0 %v779
    %2908 = vmatpush1.msra.mxu0 %v778
    %2909 = vmatprep.subr.mxu0 %v783
    %2910 = vmatpush1.msra.mxu0 %v782
    %2911 = vmatprep.subr.mxu0 %v787
    %2912 = vmatpush1.msra.mxu0 %v786
    %2913 = vmatprep.subr.mxu0 %v791
    %2914 = vmatpush1.msra.mxu0 %v790
    %2915 = vmatprep.subr.mxu0 %v795
    %2916 = vmatpush1.msra.mxu0 %v794
    %2917 = vmatprep.subr.mxu0 %v799
    %2918 = vmatpush1.msra.mxu0 %v798
    %2919 = vmatprep.subr.mxu0 %v803
    %2920 = vmatpush1.msra.mxu0 %v802
    %2921 = vmatprep.subr.mxu0 %v807
    %2922 = vmatpush1.msra.mxu0 %v806
    %2923 = vmatprep.subr.mxu0 %v811
    %2924 = vmatpush1.msra.mxu0 %v810
    %2925 = vmatprep.subr.mxu0 %v815
    %2926 = vmatpush1.msra.mxu0 %v814
    %2927 = vmatprep.subr.mxu0 %v819
    %2928 = vmatpush1.msra.mxu0 %v818
    %2929 = vmatprep.subr.mxu0 %v823
    %2930 = vmatpush1.msra.mxu0 %v822
    %2931 = vmatprep.subr.mxu0 %v827
    %2932 = vmatpush1.msra.mxu0 %v826
    %2933 = vmatprep.subr.mxu0 %v831
    %2934 = vmatpush1.msra.mxu0 %v830
    %2935 = vmatprep.subr.mxu0 %v835
    %2936 = vmatpush1.msra.mxu0 %v834
    %2937 = vmatprep.subr.mxu0 %v839
    %2938 = vmatpush1.msra.mxu0 %v838
    %2939 = vmatprep.subr.mxu0 %v843
    %2940 = vmatpush1.msra.mxu0 %v842
    %2941 = vmatprep.subr.mxu0 %v847
    %2942 = vmatpush1.msra.mxu0 %v846
    %2943 = vmatprep.subr.mxu0 %v851
    %2944 = vmatpush1.msra.mxu0 %v850
    %2945 = vmatprep.subr.mxu0 %v855
    %2946 = vmatpush1.msra.mxu0 %v854
    %2947 = vmatprep.subr.mxu0 %v859
    %2948 = vmatpush1.msra.mxu0 %v858
    %2949 = vmatprep.mubr.f32.mxu0 %v2550
    %2950 = vmatmul.mubr.f32.gmra.mrb[0].mxu0 %v2884
    %v2951 = vpop.f32.mrb[0].mxu0
    %v2952 = vadd.f32 %v868, %v2951
    %v2953 = vpop.f32.mrb[0].mxu0
    %v2954 = vadd.f32 %v872, %v2953
    %2955 = vdwg.mxu0
    %2956 = vmatprep.subr.mxu0 %v737
    %2957 = vmatpush1.msra.mxu0 %v736
    %2958 = vmatprep.subr.mxu0 %v741
    %2959 = vmatpush1.msra.mxu0 %v740
    %2960 = vmatprep.subr.mxu0 %v745
    %2961 = vmatpush1.msra.mxu0 %v744
    %2962 = vmatprep.subr.mxu0 %v749
    %2963 = vmatpush1.msra.mxu0 %v748
    %2964 = vmatprep.subr.mxu0 %v753
    %2965 = vmatpush1.msra.mxu0 %v752
    %2966 = vmatprep.subr.mxu0 %v757
    %2967 = vmatpush1.msra.mxu0 %v756
    %2968 = vmatprep.subr.mxu0 %v761
    %2969 = vmatpush1.msra.mxu0 %v760
    %2970 = vmatprep.subr.mxu0 %v765
    %2971 = vmatpush1.msra.mxu0 %v764
    %2972 = vmatprep.subr.mxu0 %v769
    %2973 = vmatpush1.msra.mxu0 %v768
    %2974 = vmatprep.subr.mxu0 %v773
    %2975 = vmatpush1.msra.mxu0 %v772
    %2976 = vmatprep.subr.mxu0 %v777
    %2977 = vmatpush1.msra.mxu0 %v776
    %2978 = vmatprep.subr.mxu0 %v781
    %2979 = vmatpush1.msra.mxu0 %v780
    %2980 = vmatprep.subr.mxu0 %v785
    %2981 = vmatpush1.msra.mxu0 %v784
    %2982 = vmatprep.subr.mxu0 %v789
    %2983 = vmatpush1.msra.mxu0 %v788
    %2984 = vmatprep.subr.mxu0 %v793
    %2985 = vmatpush1.msra.mxu0 %v792
    %2986 = vmatprep.subr.mxu0 %v797
    %2987 = vmatpush1.msra.mxu0 %v796
    %2988 = vmatprep.subr.mxu0 %v801
    %2989 = vmatpush1.msra.mxu0 %v800
    %2990 = vmatprep.subr.mxu0 %v805
    %2991 = vmatpush1.msra.mxu0 %v804
    %2992 = vmatprep.subr.mxu0 %v809
    %2993 = vmatpush1.msra.mxu0 %v808
    %2994 = vmatprep.subr.mxu0 %v813
    %2995 = vmatpush1.msra.mxu0 %v812
    %2996 = vmatprep.subr.mxu0 %v817
    %2997 = vmatpush1.msra.mxu0 %v816
    %2998 = vmatprep.subr.mxu0 %v821
    %2999 = vmatpush1.msra.mxu0 %v820
    %3000 = vmatprep.subr.mxu0 %v825
    %3001 = vmatpush1.msra.mxu0 %v824
    %3002 = vmatprep.subr.mxu0 %v829
    %3003 = vmatpush1.msra.mxu0 %v828
    %3004 = vmatprep.subr.mxu0 %v833
    %3005 = vmatpush1.msra.mxu0 %v832
    %3006 = vmatprep.subr.mxu0 %v837
    %3007 = vmatpush1.msra.mxu0 %v836
    %3008 = vmatprep.subr.mxu0 %v841
    %3009 = vmatpush1.msra.mxu0 %v840
    %3010 = vmatprep.subr.mxu0 %v845
    %3011 = vmatpush1.msra.mxu0 %v844
    %3012 = vmatprep.subr.mxu0 %v849
    %3013 = vmatpush1.msra.mxu0 %v848
    %3014 = vmatprep.subr.mxu0 %v853
    %3015 = vmatpush1.msra.mxu0 %v852
    %3016 = vmatprep.subr.mxu0 %v857
    %3017 = vmatpush1.msra.mxu0 %v856
    %3018 = vmatprep.subr.mxu0 %v861
    %3019 = vmatpush1.msra.mxu0 %v860
    %3020 = vmatprep.mubr.f32.mxu0 %v2550
    %3021 = vmatmul.mubr.f32.gmra.mrb[0].mxu0 %v2884
    %v3022 = vpop.f32.mrb[0].mxu0
    %v3023 = vadd.f32 %v876, %v3022
    %v3024 = vpop.f32.mrb[0].mxu0
    %v3025 = vadd.f32 %v880, %v3024
    %3026 = vdwg.mxu0
    %v3027 = vxor.u32 %v2952, 2147483648
    %v3028 = vmul.f32 %v3027, 1.442695
    %v3029 = vpow.pop %v3028
    %v3030 = vadd.f32 %v3029, 1.0
    %v3031 = vrcp.pop %v3030
    %v3032 = vmul.f32 1.0, %v3031
    %v3033 = vxor.u32 %v2954, 2147483648
    %v3034 = vmul.f32 %v3033, 1.442695
    %v3035 = vpow.pop %v3034
    %v3036 = vadd.f32 %v3035, 1.0
    %v3037 = vrcp.pop %v3036
    %v3038 = vmul.f32 1.0, %v3037
    %v3039 = vtanh.pop %v3023
    %v3040 = vxor.u32 %v3025, 2147483648
    %v3041 = vmul.f32 %v3040, 1.442695
    %v3042 = vpow.pop %v3041
    %v3043 = vadd.f32 %v3042, 1.0
    %v3044 = vrcp.pop %v3043
    %v3045 = vmul.f32 1.0, %v3044
    %v3046 = vmul.f32 %v3038, %v2548
    %v3047 = vmul.f32 %v3032, %v3039
    %v3048 = vadd.f32 %v3046, %v3047
    %v3049 = vtanh.pop %v3048
    %v3050 = vmul.f32 %v3045, %v3049
    %s3051 = scalar_lea.vmem [#allocation3], 40
    %v3052 = vld [vmem:[%s3051] sm:$0xff]
    %3053 = vmatprep.subr.mxu0 %v100
    %3054 = vmatpush1.msra.mxu0 %v99
    %3055 = vmatprep.subr.mxu0 %v104
    %3056 = vmatpush1.msra.mxu0 %v103
    %3057 = vmatprep.subr.mxu0 %v108
    %3058 = vmatpush1.msra.mxu0 %v107
    %3059 = vmatprep.subr.mxu0 %v112
    %3060 = vmatpush1.msra.mxu0 %v111
    %3061 = vmatprep.subr.mxu0 %v116
    %3062 = vmatpush1.msra.mxu0 %v115
    %3063 = vmatprep.subr.mxu0 %v120
    %3064 = vmatpush1.msra.mxu0 %v119
    %3065 = vmatprep.subr.mxu0 %v124
    %3066 = vmatpush1.msra.mxu0 %v123
    %3067 = vmatprep.subr.mxu0 %v128
    %3068 = vmatpush1.msra.mxu0 %v127
    %3069 = vmatprep.subr.mxu0 %v132
    %3070 = vmatpush1.msra.mxu0 %v131
    %3071 = vmatprep.subr.mxu0 %v136
    %3072 = vmatpush1.msra.mxu0 %v135
    %3073 = vmatprep.subr.mxu0 %v140
    %3074 = vmatpush1.msra.mxu0 %v139
    %3075 = vmatprep.subr.mxu0 %v144
    %3076 = vmatpush1.msra.mxu0 %v143
    %3077 = vmatprep.subr.mxu0 %v148
    %3078 = vmatpush1.msra.mxu0 %v147
    %3079 = vmatprep.subr.mxu0 %v152
    %3080 = vmatpush1.msra.mxu0 %v151
    %3081 = vmatprep.subr.mxu0 %v156
    %3082 = vmatpush1.msra.mxu0 %v155
    %3083 = vmatprep.subr.mxu0 %v160
    %3084 = vmatpush1.msra.mxu0 %v159
    %3085 = vmatprep.subr.mxu0 %v164
    %3086 = vmatpush1.msra.mxu0 %v163
    %3087 = vmatprep.subr.mxu0 %v168
    %3088 = vmatpush1.msra.mxu0 %v167
    %3089 = vmatprep.subr.mxu0 %v172
    %3090 = vmatpush1.msra.mxu0 %v171
    %3091 = vmatprep.subr.mxu0 %v176
    %3092 = vmatpush1.msra.mxu0 %v175
    %3093 = vmatprep.subr.mxu0 %v180
    %3094 = vmatpush1.msra.mxu0 %v179
    %3095 = vmatprep.subr.mxu0 %v184
    %3096 = vmatpush1.msra.mxu0 %v183
    %3097 = vmatprep.subr.mxu0 %v188
    %3098 = vmatpush1.msra.mxu0 %v187
    %3099 = vmatprep.subr.mxu0 %v192
    %3100 = vmatpush1.msra.mxu0 %v191
    %3101 = vmatprep.subr.mxu0 %v196
    %3102 = vmatpush1.msra.mxu0 %v195
    %3103 = vmatprep.subr.mxu0 %v200
    %3104 = vmatpush1.msra.mxu0 %v199
    %3105 = vmatprep.subr.mxu0 %v204
    %3106 = vmatpush1.msra.mxu0 %v203
    %3107 = vmatprep.subr.mxu0 %v208
    %3108 = vmatpush1.msra.mxu0 %v207
    %3109 = vmatprep.subr.mxu0 %v212
    %3110 = vmatpush1.msra.mxu0 %v211
    %3111 = vmatprep.subr.mxu0 %v216
    %3112 = vmatpush1.msra.mxu0 %v215
    %3113 = vmatprep.subr.mxu0 %v220
    %3114 = vmatpush1.msra.mxu0 %v219
    %3115 = vmatprep.subr.mxu0 %v224
    %3116 = vmatpush1.msra.mxu0 %v223
    %3117 = vmatprep.mubr.f32.mxu0 %v2718
    %3118 = vmatmul.mubr.f32.gmra.mrb[0].mxu0 %v3052
    %v3119 = vpop.f32.mrb[0].mxu0
    %v3120 = vadd.f32 %v232, %v3119
    %v3121 = vpop.f32.mrb[0].mxu0
    %v3122 = vadd.f32 %v236, %v3121
    %3123 = vdwg.mxu0
    %3124 = vmatprep.subr.mxu0 %v102
    %3125 = vmatpush1.msra.mxu0 %v101
    %3126 = vmatprep.subr.mxu0 %v106
    %3127 = vmatpush1.msra.mxu0 %v105
    %3128 = vmatprep.subr.mxu0 %v110
    %3129 = vmatpush1.msra.mxu0 %v109
    %3130 = vmatprep.subr.mxu0 %v114
    %3131 = vmatpush1.msra.mxu0 %v113
    %3132 = vmatprep.subr.mxu0 %v118
    %3133 = vmatpush1.msra.mxu0 %v117
    %3134 = vmatprep.subr.mxu0 %v122
    %3135 = vmatpush1.msra.mxu0 %v121
    %3136 = vmatprep.subr.mxu0 %v126
    %3137 = vmatpush1.msra.mxu0 %v125
    %3138 = vmatprep.subr.mxu0 %v130
    %3139 = vmatpush1.msra.mxu0 %v129
    %3140 = vmatprep.subr.mxu0 %v134
    %3141 = vmatpush1.msra.mxu0 %v133
    %3142 = vmatprep.subr.mxu0 %v138
    %3143 = vmatpush1.msra.mxu0 %v137
    %3144 = vmatprep.subr.mxu0 %v142
    %3145 = vmatpush1.msra.mxu0 %v141
    %3146 = vmatprep.subr.mxu0 %v146
    %3147 = vmatpush1.msra.mxu0 %v145
    %3148 = vmatprep.subr.mxu0 %v150
    %3149 = vmatpush1.msra.mxu0 %v149
    %3150 = vmatprep.subr.mxu0 %v154
    %3151 = vmatpush1.msra.mxu0 %v153
    %3152 = vmatprep.subr.mxu0 %v158
    %3153 = vmatpush1.msra.mxu0 %v157
    %3154 = vmatprep.subr.mxu0 %v162
    %3155 = vmatpush1.msra.mxu0 %v161
    %3156 = vmatprep.subr.mxu0 %v166
    %3157 = vmatpush1.msra.mxu0 %v165
    %3158 = vmatprep.subr.mxu0 %v170
    %3159 = vmatpush1.msra.mxu0 %v169
    %3160 = vmatprep.subr.mxu0 %v174
    %3161 = vmatpush1.msra.mxu0 %v173
    %3162 = vmatprep.subr.mxu0 %v178
    %3163 = vmatpush1.msra.mxu0 %v177
    %3164 = vmatprep.subr.mxu0 %v182
    %3165 = vmatpush1.msra.mxu0 %v181
    %3166 = vmatprep.subr.mxu0 %v186
    %3167 = vmatpush1.msra.mxu0 %v185
    %3168 = vmatprep.subr.mxu0 %v190
    %3169 = vmatpush1.msra.mxu0 %v189
    %3170 = vmatprep.subr.mxu0 %v194
    %3171 = vmatpush1.msra.mxu0 %v193
    %3172 = vmatprep.subr.mxu0 %v198
    %3173 = vmatpush1.msra.mxu0 %v197
    %3174 = vmatprep.subr.mxu0 %v202
    %3175 = vmatpush1.msra.mxu0 %v201
    %3176 = vmatprep.subr.mxu0 %v206
    %3177 = vmatpush1.msra.mxu0 %v205
    %3178 = vmatprep.subr.mxu0 %v210
    %3179 = vmatpush1.msra.mxu0 %v209
    %3180 = vmatprep.subr.mxu0 %v214
    %3181 = vmatpush1.msra.mxu0 %v213
    %3182 = vmatprep.subr.mxu0 %v218
    %3183 = vmatpush1.msra.mxu0 %v217
    %3184 = vmatprep.subr.mxu0 %v222
    %3185 = vmatpush1.msra.mxu0 %v221
    %3186 = vmatprep.subr.mxu0 %v226
    %3187 = vmatpush1.msra.mxu0 %v225
    %3188 = vmatprep.mubr.f32.mxu0 %v2718
    %3189 = vmatmul.mubr.f32.gmra.mrb[0].mxu0 %v3052
    %v3190 = vpop.f32.mrb[0].mxu0
    %v3191 = vadd.f32 %v240, %v3190
    %v3192 = vpop.f32.mrb[0].mxu0
    %v3193 = vadd.f32 %v244, %v3192
    %3194 = vdwg.mxu0
    %v3195 = vxor.u32 %v3120, 2147483648
    %v3196 = vmul.f32 %v3195, 1.442695
    %v3197 = vpow.pop %v3196
    %v3198 = vadd.f32 %v3197, 1.0
    %v3199 = vrcp.pop %v3198
    %v3200 = vmul.f32 1.0, %v3199
    %v3201 = vxor.u32 %v3122, 2147483648
    %v3202 = vmul.f32 %v3201, 1.442695
    %v3203 = vpow.pop %v3202
    %v3204 = vadd.f32 %v3203, 1.0
    %v3205 = vrcp.pop %v3204
    %v3206 = vmul.f32 1.0, %v3205
    %v3207 = vtanh.pop %v3191
    %v3208 = vxor.u32 %v3193, 2147483648
    %v3209 = vmul.f32 %v3208, 1.442695
    %v3210 = vpow.pop %v3209
    %v3211 = vadd.f32 %v3210, 1.0
    %v3212 = vrcp.pop %v3211
    %v3213 = vmul.f32 1.0, %v3212
    %v3214 = vmul.f32 %v3206, %v2716
    %v3215 = vmul.f32 %v3200, %v3207
    %v3216 = vadd.f32 %v3214, %v3215
    %v3217 = vtanh.pop %v3216
    %v3218 = vmul.f32 %v3213, %v3217
    %3219 = vmatprep.subr.mxu0 %v417
    %3220 = vmatpush1.msra.mxu0 %v416
    %3221 = vmatprep.subr.mxu0 %v421
    %3222 = vmatpush1.msra.mxu0 %v420
    %3223 = vmatprep.subr.mxu0 %v425
    %3224 = vmatpush1.msra.mxu0 %v424
    %3225 = vmatprep.subr.mxu0 %v429
    %3226 = vmatpush1.msra.mxu0 %v428
    %3227 = vmatprep.subr.mxu0 %v433
    %3228 = vmatpush1.msra.mxu0 %v432
    %3229 = vmatprep.subr.mxu0 %v437
    %3230 = vmatpush1.msra.mxu0 %v436
    %3231 = vmatprep.subr.mxu0 %v441
    %3232 = vmatpush1.msra.mxu0 %v440
    %3233 = vmatprep.subr.mxu0 %v445
    %3234 = vmatpush1.msra.mxu0 %v444
    %3235 = vmatprep.subr.mxu0 %v449
    %3236 = vmatpush1.msra.mxu0 %v448
    %3237 = vmatprep.subr.mxu0 %v453
    %3238 = vmatpush1.msra.mxu0 %v452
    %3239 = vmatprep.subr.mxu0 %v457
    %3240 = vmatpush1.msra.mxu0 %v456
    %3241 = vmatprep.subr.mxu0 %v461
    %3242 = vmatpush1.msra.mxu0 %v460
    %3243 = vmatprep.subr.mxu0 %v465
    %3244 = vmatpush1.msra.mxu0 %v464
    %3245 = vmatprep.subr.mxu0 %v469
    %3246 = vmatpush1.msra.mxu0 %v468
    %3247 = vmatprep.subr.mxu0 %v473
    %3248 = vmatpush1.msra.mxu0 %v472
    %3249 = vmatprep.subr.mxu0 %v477
    %3250 = vmatpush1.msra.mxu0 %v476
    %3251 = vmatprep.subr.mxu0 %v481
    %3252 = vmatpush1.msra.mxu0 %v480
    %3253 = vmatprep.subr.mxu0 %v485
    %3254 = vmatpush1.msra.mxu0 %v484
    %3255 = vmatprep.subr.mxu0 %v489
    %3256 = vmatpush1.msra.mxu0 %v488
    %3257 = vmatprep.subr.mxu0 %v493
    %3258 = vmatpush1.msra.mxu0 %v492
    %3259 = vmatprep.subr.mxu0 %v497
    %3260 = vmatpush1.msra.mxu0 %v496
    %3261 = vmatprep.subr.mxu0 %v501
    %3262 = vmatpush1.msra.mxu0 %v500
    %3263 = vmatprep.subr.mxu0 %v505
    %3264 = vmatpush1.msra.mxu0 %v504
    %3265 = vmatprep.subr.mxu0 %v509
    %3266 = vmatpush1.msra.mxu0 %v508
    %3267 = vmatprep.subr.mxu0 %v513
    %3268 = vmatpush1.msra.mxu0 %v512
    %3269 = vmatprep.subr.mxu0 %v517
    %3270 = vmatpush1.msra.mxu0 %v516
    %3271 = vmatprep.subr.mxu0 %v521
    %3272 = vmatpush1.msra.mxu0 %v520
    %3273 = vmatprep.subr.mxu0 %v525
    %3274 = vmatpush1.msra.mxu0 %v524
    %3275 = vmatprep.subr.mxu0 %v529
    %3276 = vmatpush1.msra.mxu0 %v528
    %3277 = vmatprep.subr.mxu0 %v533
    %3278 = vmatpush1.msra.mxu0 %v532
    %3279 = vmatprep.subr.mxu0 %v537
    %3280 = vmatpush1.msra.mxu0 %v536
    %3281 = vmatprep.subr.mxu0 %v541
    %3282 = vmatpush1.msra.mxu0 %v540
    %3283 = vmatprep.mubr.f32.mxu0 %v2884
    %3284 = vmatmul.mubr.f32.gmra.mrb[0].mxu0 %v3218
    %v3285 = vpop.f32.mrb[0].mxu0
    %v3286 = vadd.f32 %v550, %v3285
    %v3287 = vpop.f32.mrb[0].mxu0
    %v3288 = vadd.f32 %v554, %v3287
    %3289 = vdwg.mxu0
    %3290 = vmatprep.subr.mxu0 %v419
    %3291 = vmatpush1.msra.mxu0 %v418
    %3292 = vmatprep.subr.mxu0 %v423
    %3293 = vmatpush1.msra.mxu0 %v422
    %3294 = vmatprep.subr.mxu0 %v427
    %3295 = vmatpush1.msra.mxu0 %v426
    %3296 = vmatprep.subr.mxu0 %v431
    %3297 = vmatpush1.msra.mxu0 %v430
    %3298 = vmatprep.subr.mxu0 %v435
    %3299 = vmatpush1.msra.mxu0 %v434
    %3300 = vmatprep.subr.mxu0 %v439
    %3301 = vmatpush1.msra.mxu0 %v438
    %3302 = vmatprep.subr.mxu0 %v443
    %3303 = vmatpush1.msra.mxu0 %v442
    %3304 = vmatprep.subr.mxu0 %v447
    %3305 = vmatpush1.msra.mxu0 %v446
    %3306 = vmatprep.subr.mxu0 %v451
    %3307 = vmatpush1.msra.mxu0 %v450
    %3308 = vmatprep.subr.mxu0 %v455
    %3309 = vmatpush1.msra.mxu0 %v454
    %3310 = vmatprep.subr.mxu0 %v459
    %3311 = vmatpush1.msra.mxu0 %v458
    %3312 = vmatprep.subr.mxu0 %v463
    %3313 = vmatpush1.msra.mxu0 %v462
    %3314 = vmatprep.subr.mxu0 %v467
    %3315 = vmatpush1.msra.mxu0 %v466
    %3316 = vmatprep.subr.mxu0 %v471
    %3317 = vmatpush1.msra.mxu0 %v470
    %3318 = vmatprep.subr.mxu0 %v475
    %3319 = vmatpush1.msra.mxu0 %v474
    %3320 = vmatprep.subr.mxu0 %v479
    %3321 = vmatpush1.msra.mxu0 %v478
    %3322 = vmatprep.subr.mxu0 %v483
    %3323 = vmatpush1.msra.mxu0 %v482
    %3324 = vmatprep.subr.mxu0 %v487
    %3325 = vmatpush1.msra.mxu0 %v486
    %3326 = vmatprep.subr.mxu0 %v491
    %3327 = vmatpush1.msra.mxu0 %v490
    %3328 = vmatprep.subr.mxu0 %v495
    %3329 = vmatpush1.msra.mxu0 %v494
    %3330 = vmatprep.subr.mxu0 %v499
    %3331 = vmatpush1.msra.mxu0 %v498
    %3332 = vmatprep.subr.mxu0 %v503
    %3333 = vmatpush1.msra.mxu0 %v502
    %3334 = vmatprep.subr.mxu0 %v507
    %3335 = vmatpush1.msra.mxu0 %v506
    %3336 = vmatprep.subr.mxu0 %v511
    %3337 = vmatpush1.msra.mxu0 %v510
    %3338 = vmatprep.subr.mxu0 %v515
    %3339 = vmatpush1.msra.mxu0 %v514
    %3340 = vmatprep.subr.mxu0 %v519
    %3341 = vmatpush1.msra.mxu0 %v518
    %3342 = vmatprep.subr.mxu0 %v523
    %3343 = vmatpush1.msra.mxu0 %v522
    %3344 = vmatprep.subr.mxu0 %v527
    %3345 = vmatpush1.msra.mxu0 %v526
    %3346 = vmatprep.subr.mxu0 %v531
    %3347 = vmatpush1.msra.mxu0 %v530
    %3348 = vmatprep.subr.mxu0 %v535
    %3349 = vmatpush1.msra.mxu0 %v534
    %3350 = vmatprep.subr.mxu0 %v539
    %3351 = vmatpush1.msra.mxu0 %v538
    %3352 = vmatprep.subr.mxu0 %v543
    %3353 = vmatpush1.msra.mxu0 %v542
    %3354 = vmatprep.mubr.f32.mxu0 %v2884
    %3355 = vmatmul.mubr.f32.gmra.mrb[0].mxu0 %v3218
    %v3356 = vpop.f32.mrb[0].mxu0
    %v3357 = vadd.f32 %v558, %v3356
    %v3358 = vpop.f32.mrb[0].mxu0
    %v3359 = vadd.f32 %v562, %v3358
    %3360 = vdwg.mxu0
    %v3361 = vxor.u32 %v3286, 2147483648
    %v3362 = vmul.f32 %v3361, 1.442695
    %v3363 = vpow.pop %v3362
    %v3364 = vadd.f32 %v3363, 1.0
    %v3365 = vrcp.pop %v3364
    %v3366 = vmul.f32 1.0, %v3365
    %v3367 = vxor.u32 %v3288, 2147483648
    %v3368 = vmul.f32 %v3367, 1.442695
    %v3369 = vpow.pop %v3368
    %v3370 = vadd.f32 %v3369, 1.0
    %v3371 = vrcp.pop %v3370
    %v3372 = vmul.f32 1.0, %v3371
    %v3373 = vtanh.pop %v3357
    %v3374 = vxor.u32 %v3359, 2147483648
    %v3375 = vmul.f32 %v3374, 1.442695
    %v3376 = vpow.pop %v3375
    %v3377 = vadd.f32 %v3376, 1.0
    %v3378 = vrcp.pop %v3377
    %v3379 = vmul.f32 1.0, %v3378
    %v3380 = vmul.f32 %v3372, %v2882
    %v3381 = vmul.f32 %v3366, %v3373
    %v3382 = vadd.f32 %v3380, %v3381
    %v3383 = vtanh.pop %v3382
    %v3384 = vmul.f32 %v3379, %v3383
    %3385 = vmatprep.subr.mxu0 %v735
    %3386 = vmatpush1.msra.mxu0 %v734
    %3387 = vmatprep.subr.mxu0 %v739
    %3388 = vmatpush1.msra.mxu0 %v738
    %3389 = vmatprep.subr.mxu0 %v743
    %3390 = vmatpush1.msra.mxu0 %v742
    %3391 = vmatprep.subr.mxu0 %v747
    %3392 = vmatpush1.msra.mxu0 %v746
    %3393 = vmatprep.subr.mxu0 %v751
    %3394 = vmatpush1.msra.mxu0 %v750
    %3395 = vmatprep.subr.mxu0 %v755
    %3396 = vmatpush1.msra.mxu0 %v754
    %3397 = vmatprep.subr.mxu0 %v759
    %3398 = vmatpush1.msra.mxu0 %v758
    %3399 = vmatprep.subr.mxu0 %v763
    %3400 = vmatpush1.msra.mxu0 %v762
    %3401 = vmatprep.subr.mxu0 %v767
    %3402 = vmatpush1.msra.mxu0 %v766
    %3403 = vmatprep.subr.mxu0 %v771
    %3404 = vmatpush1.msra.mxu0 %v770
    %3405 = vmatprep.subr.mxu0 %v775
    %3406 = vmatpush1.msra.mxu0 %v774
    %3407 = vmatprep.subr.mxu0 %v779
    %3408 = vmatpush1.msra.mxu0 %v778
    %3409 = vmatprep.subr.mxu0 %v783
    %3410 = vmatpush1.msra.mxu0 %v782
    %3411 = vmatprep.subr.mxu0 %v787
    %3412 = vmatpush1.msra.mxu0 %v786
    %3413 = vmatprep.subr.mxu0 %v791
    %3414 = vmatpush1.msra.mxu0 %v790
    %3415 = vmatprep.subr.mxu0 %v795
    %3416 = vmatpush1.msra.mxu0 %v794
    %3417 = vmatprep.subr.mxu0 %v799
    %3418 = vmatpush1.msra.mxu0 %v798
    %3419 = vmatprep.subr.mxu0 %v803
    %3420 = vmatpush1.msra.mxu0 %v802
    %3421 = vmatprep.subr.mxu0 %v807
    %3422 = vmatpush1.msra.mxu0 %v806
    %3423 = vmatprep.subr.mxu0 %v811
    %3424 = vmatpush1.msra.mxu0 %v810
    %3425 = vmatprep.subr.mxu0 %v815
    %3426 = vmatpush1.msra.mxu0 %v814
    %3427 = vmatprep.subr.mxu0 %v819
    %3428 = vmatpush1.msra.mxu0 %v818
    %3429 = vmatprep.subr.mxu0 %v823
    %3430 = vmatpush1.msra.mxu0 %v822
    %3431 = vmatprep.subr.mxu0 %v827
    %3432 = vmatpush1.msra.mxu0 %v826
    %3433 = vmatprep.subr.mxu0 %v831
    %3434 = vmatpush1.msra.mxu0 %v830
    %3435 = vmatprep.subr.mxu0 %v835
    %3436 = vmatpush1.msra.mxu0 %v834
    %3437 = vmatprep.subr.mxu0 %v839
    %3438 = vmatpush1.msra.mxu0 %v838
    %3439 = vmatprep.subr.mxu0 %v843
    %3440 = vmatpush1.msra.mxu0 %v842
    %3441 = vmatprep.subr.mxu0 %v847
    %3442 = vmatpush1.msra.mxu0 %v846
    %3443 = vmatprep.subr.mxu0 %v851
    %3444 = vmatpush1.msra.mxu0 %v850
    %3445 = vmatprep.subr.mxu0 %v855
    %3446 = vmatpush1.msra.mxu0 %v854
    %3447 = vmatprep.subr.mxu0 %v859
    %3448 = vmatpush1.msra.mxu0 %v858
    %3449 = vmatprep.mubr.f32.mxu0 %v3050
    %3450 = vmatmul.mubr.f32.gmra.mrb[0].mxu0 %v3384
    %v3451 = vpop.f32.mrb[0].mxu0
    %v3452 = vadd.f32 %v868, %v3451
    %v3453 = vpop.f32.mrb[0].mxu0
    %v3454 = vadd.f32 %v872, %v3453
    %3455 = vdwg.mxu0
    %3456 = vmatprep.subr.mxu0 %v737
    %3457 = vmatpush1.msra.mxu0 %v736
    %3458 = vmatprep.subr.mxu0 %v741
    %3459 = vmatpush1.msra.mxu0 %v740
    %3460 = vmatprep.subr.mxu0 %v745
    %3461 = vmatpush1.msra.mxu0 %v744
    %3462 = vmatprep.subr.mxu0 %v749
    %3463 = vmatpush1.msra.mxu0 %v748
    %3464 = vmatprep.subr.mxu0 %v753
    %3465 = vmatpush1.msra.mxu0 %v752
    %3466 = vmatprep.subr.mxu0 %v757
    %3467 = vmatpush1.msra.mxu0 %v756
    %3468 = vmatprep.subr.mxu0 %v761
    %3469 = vmatpush1.msra.mxu0 %v760
    %3470 = vmatprep.subr.mxu0 %v765
    %3471 = vmatpush1.msra.mxu0 %v764
    %3472 = vmatprep.subr.mxu0 %v769
    %3473 = vmatpush1.msra.mxu0 %v768
    %3474 = vmatprep.subr.mxu0 %v773
    %3475 = vmatpush1.msra.mxu0 %v772
    %3476 = vmatprep.subr.mxu0 %v777
    %3477 = vmatpush1.msra.mxu0 %v776
    %3478 = vmatprep.subr.mxu0 %v781
    %3479 = vmatpush1.msra.mxu0 %v780
    %3480 = vmatprep.subr.mxu0 %v785
    %3481 = vmatpush1.msra.mxu0 %v784
    %3482 = vmatprep.subr.mxu0 %v789
    %3483 = vmatpush1.msra.mxu0 %v788
    %3484 = vmatprep.subr.mxu0 %v793
    %3485 = vmatpush1.msra.mxu0 %v792
    %3486 = vmatprep.subr.mxu0 %v797
    %3487 = vmatpush1.msra.mxu0 %v796
    %3488 = vmatprep.subr.mxu0 %v801
    %3489 = vmatpush1.msra.mxu0 %v800
    %3490 = vmatprep.subr.mxu0 %v805
    %3491 = vmatpush1.msra.mxu0 %v804
    %3492 = vmatprep.subr.mxu0 %v809
    %3493 = vmatpush1.msra.mxu0 %v808
    %3494 = vmatprep.subr.mxu0 %v813
    %3495 = vmatpush1.msra.mxu0 %v812
    %3496 = vmatprep.subr.mxu0 %v817
    %3497 = vmatpush1.msra.mxu0 %v816
    %3498 = vmatprep.subr.mxu0 %v821
    %3499 = vmatpush1.msra.mxu0 %v820
    %3500 = vmatprep.subr.mxu0 %v825
    %3501 = vmatpush1.msra.mxu0 %v824
    %3502 = vmatprep.subr.mxu0 %v829
    %3503 = vmatpush1.msra.mxu0 %v828
    %3504 = vmatprep.subr.mxu0 %v833
    %3505 = vmatpush1.msra.mxu0 %v832
    %3506 = vmatprep.subr.mxu0 %v837
    %3507 = vmatpush1.msra.mxu0 %v836
    %3508 = vmatprep.subr.mxu0 %v841
    %3509 = vmatpush1.msra.mxu0 %v840
    %3510 = vmatprep.subr.mxu0 %v845
    %3511 = vmatpush1.msra.mxu0 %v844
    %3512 = vmatprep.subr.mxu0 %v849
    %3513 = vmatpush1.msra.mxu0 %v848
    %3514 = vmatprep.subr.mxu0 %v853
    %3515 = vmatpush1.msra.mxu0 %v852
    %3516 = vmatprep.subr.mxu0 %v857
    %3517 = vmatpush1.msra.mxu0 %v856
    %3518 = vmatprep.subr.mxu0 %v861
    %3519 = vmatpush1.msra.mxu0 %v860
    %3520 = vmatprep.mubr.f32.mxu0 %v3050
    %3521 = vmatmul.mubr.f32.gmra.mrb[0].mxu0 %v3384
    %v3522 = vpop.f32.mrb[0].mxu0
    %v3523 = vadd.f32 %v876, %v3522
    %v3524 = vpop.f32.mrb[0].mxu0
    %v3525 = vadd.f32 %v880, %v3524
    %3526 = vdwg.mxu0
    %v3527 = vxor.u32 %v3452, 2147483648
    %v3528 = vmul.f32 %v3527, 1.442695
    %v3529 = vpow.pop %v3528
    %v3530 = vadd.f32 %v3529, 1.0
    %v3531 = vrcp.pop %v3530
    %v3532 = vmul.f32 1.0, %v3531
    %v3533 = vxor.u32 %v3454, 2147483648
    %v3534 = vmul.f32 %v3533, 1.442695
    %v3535 = vpow.pop %v3534
    %v3536 = vadd.f32 %v3535, 1.0
    %v3537 = vrcp.pop %v3536
    %v3538 = vmul.f32 1.0, %v3537
    %v3539 = vtanh.pop %v3523
    %v3540 = vxor.u32 %v3525, 2147483648
    %v3541 = vmul.f32 %v3540, 1.442695
    %v3542 = vpow.pop %v3541
    %v3543 = vadd.f32 %v3542, 1.0
    %v3544 = vrcp.pop %v3543
    %v3545 = vmul.f32 1.0, %v3544
    %v3546 = vmul.f32 %v3538, %v3048
    %v3547 = vmul.f32 %v3532, %v3539
    %v3548 = vadd.f32 %v3546, %v3547
    %v3549 = vtanh.pop %v3548
    %v3550 = vmul.f32 %v3545, %v3549
    %s3551 = scalar_lea.vmem [#allocation3], 48
    %v3552 = vld [vmem:[%s3551] sm:$0xff]
    %3553 = vmatprep.subr.mxu0 %v100
    %3554 = vmatpush1.msra.mxu0 %v99
    %3555 = vmatprep.subr.mxu0 %v104
    %3556 = vmatpush1.msra.mxu0 %v103
    %3557 = vmatprep.subr.mxu0 %v108
    %3558 = vmatpush1.msra.mxu0 %v107
    %3559 = vmatprep.subr.mxu0 %v112
    %3560 = vmatpush1.msra.mxu0 %v111
    %3561 = vmatprep.subr.mxu0 %v116
    %3562 = vmatpush1.msra.mxu0 %v115
    %3563 = vmatprep.subr.mxu0 %v120
    %3564 = vmatpush1.msra.mxu0 %v119
    %3565 = vmatprep.subr.mxu0 %v124
    %3566 = vmatpush1.msra.mxu0 %v123
    %3567 = vmatprep.subr.mxu0 %v128
    %3568 = vmatpush1.msra.mxu0 %v127
    %3569 = vmatprep.subr.mxu0 %v132
    %3570 = vmatpush1.msra.mxu0 %v131
    %3571 = vmatprep.subr.mxu0 %v136
    %3572 = vmatpush1.msra.mxu0 %v135
    %3573 = vmatprep.subr.mxu0 %v140
    %3574 = vmatpush1.msra.mxu0 %v139
    %3575 = vmatprep.subr.mxu0 %v144
    %3576 = vmatpush1.msra.mxu0 %v143
    %3577 = vmatprep.subr.mxu0 %v148
    %3578 = vmatpush1.msra.mxu0 %v147
    %3579 = vmatprep.subr.mxu0 %v152
    %3580 = vmatpush1.msra.mxu0 %v151
    %3581 = vmatprep.subr.mxu0 %v156
    %3582 = vmatpush1.msra.mxu0 %v155
    %3583 = vmatprep.subr.mxu0 %v160
    %3584 = vmatpush1.msra.mxu0 %v159
    %3585 = vmatprep.subr.mxu0 %v164
    %3586 = vmatpush1.msra.mxu0 %v163
    %3587 = vmatprep.subr.mxu0 %v168
    %3588 = vmatpush1.msra.mxu0 %v167
    %3589 = vmatprep.subr.mxu0 %v172
    %3590 = vmatpush1.msra.mxu0 %v171
    %3591 = vmatprep.subr.mxu0 %v176
    %3592 = vmatpush1.msra.mxu0 %v175
    %3593 = vmatprep.subr.mxu0 %v180
    %3594 = vmatpush1.msra.mxu0 %v179
    %3595 = vmatprep.subr.mxu0 %v184
    %3596 = vmatpush1.msra.mxu0 %v183
    %3597 = vmatprep.subr.mxu0 %v188
    %3598 = vmatpush1.msra.mxu0 %v187
    %3599 = vmatprep.subr.mxu0 %v192
    %3600 = vmatpush1.msra.mxu0 %v191
    %3601 = vmatprep.subr.mxu0 %v196
    %3602 = vmatpush1.msra.mxu0 %v195
    %3603 = vmatprep.subr.mxu0 %v200
    %3604 = vmatpush1.msra.mxu0 %v199
    %3605 = vmatprep.subr.mxu0 %v204
    %3606 = vmatpush1.msra.mxu0 %v203
    %3607 = vmatprep.subr.mxu0 %v208
    %3608 = vmatpush1.msra.mxu0 %v207
    %3609 = vmatprep.subr.mxu0 %v212
    %3610 = vmatpush1.msra.mxu0 %v211
    %3611 = vmatprep.subr.mxu0 %v216
    %3612 = vmatpush1.msra.mxu0 %v215
    %3613 = vmatprep.subr.mxu0 %v220
    %3614 = vmatpush1.msra.mxu0 %v219
    %3615 = vmatprep.subr.mxu0 %v224
    %3616 = vmatpush1.msra.mxu0 %v223
    %3617 = vmatprep.mubr.f32.mxu0 %v3218
    %3618 = vmatmul.mubr.f32.gmra.mrb[0].mxu0 %v3552
    %v3619 = vpop.f32.mrb[0].mxu0
    %v3620 = vadd.f32 %v232, %v3619
    %v3621 = vpop.f32.mrb[0].mxu0
    %v3622 = vadd.f32 %v236, %v3621
    %3623 = vdwg.mxu0
    %3624 = vmatprep.subr.mxu0 %v102
    %3625 = vmatpush1.msra.mxu0 %v101
    %3626 = vmatprep.subr.mxu0 %v106
    %3627 = vmatpush1.msra.mxu0 %v105
    %3628 = vmatprep.subr.mxu0 %v110
    %3629 = vmatpush1.msra.mxu0 %v109
    %3630 = vmatprep.subr.mxu0 %v114
    %3631 = vmatpush1.msra.mxu0 %v113
    %3632 = vmatprep.subr.mxu0 %v118
    %3633 = vmatpush1.msra.mxu0 %v117
    %3634 = vmatprep.subr.mxu0 %v122
    %3635 = vmatpush1.msra.mxu0 %v121
    %3636 = vmatprep.subr.mxu0 %v126
    %3637 = vmatpush1.msra.mxu0 %v125
    %3638 = vmatprep.subr.mxu0 %v130
    %3639 = vmatpush1.msra.mxu0 %v129
    %3640 = vmatprep.subr.mxu0 %v134
    %3641 = vmatpush1.msra.mxu0 %v133
    %3642 = vmatprep.subr.mxu0 %v138
    %3643 = vmatpush1.msra.mxu0 %v137
    %3644 = vmatprep.subr.mxu0 %v142
    %3645 = vmatpush1.msra.mxu0 %v141
    %3646 = vmatprep.subr.mxu0 %v146
    %3647 = vmatpush1.msra.mxu0 %v145
    %3648 = vmatprep.subr.mxu0 %v150
    %3649 = vmatpush1.msra.mxu0 %v149
    %3650 = vmatprep.subr.mxu0 %v154
    %3651 = vmatpush1.msra.mxu0 %v153
    %3652 = vmatprep.subr.mxu0 %v158
    %3653 = vmatpush1.msra.mxu0 %v157
    %3654 = vmatprep.subr.mxu0 %v162
    %3655 = vmatpush1.msra.mxu0 %v161
    %3656 = vmatprep.subr.mxu0 %v166
    %3657 = vmatpush1.msra.mxu0 %v165
    %3658 = vmatprep.subr.mxu0 %v170
    %3659 = vmatpush1.msra.mxu0 %v169
    %3660 = vmatprep.subr.mxu0 %v174
    %3661 = vmatpush1.msra.mxu0 %v173
    %3662 = vmatprep.subr.mxu0 %v178
    %3663 = vmatpush1.msra.mxu0 %v177
    %3664 = vmatprep.subr.mxu0 %v182
    %3665 = vmatpush1.msra.mxu0 %v181
    %3666 = vmatprep.subr.mxu0 %v186
    %3667 = vmatpush1.msra.mxu0 %v185
    %3668 = vmatprep.subr.mxu0 %v190
    %3669 = vmatpush1.msra.mxu0 %v189
    %3670 = vmatprep.subr.mxu0 %v194
    %3671 = vmatpush1.msra.mxu0 %v193
    %3672 = vmatprep.subr.mxu0 %v198
    %3673 = vmatpush1.msra.mxu0 %v197
    %3674 = vmatprep.subr.mxu0 %v202
    %3675 = vmatpush1.msra.mxu0 %v201
    %3676 = vmatprep.subr.mxu0 %v206
    %3677 = vmatpush1.msra.mxu0 %v205
    %3678 = vmatprep.subr.mxu0 %v210
    %3679 = vmatpush1.msra.mxu0 %v209
    %3680 = vmatprep.subr.mxu0 %v214
    %3681 = vmatpush1.msra.mxu0 %v213
    %3682 = vmatprep.subr.mxu0 %v218
    %3683 = vmatpush1.msra.mxu0 %v217
    %3684 = vmatprep.subr.mxu0 %v222
    %3685 = vmatpush1.msra.mxu0 %v221
    %3686 = vmatprep.subr.mxu0 %v226
    %3687 = vmatpush1.msra.mxu0 %v225
    %3688 = vmatprep.mubr.f32.mxu0 %v3218
    %3689 = vmatmul.mubr.f32.gmra.mrb[0].mxu0 %v3552
    %v3690 = vpop.f32.mrb[0].mxu0
    %v3691 = vadd.f32 %v240, %v3690
    %v3692 = vpop.f32.mrb[0].mxu0
    %v3693 = vadd.f32 %v244, %v3692
    %3694 = vdwg.mxu0
    %v3695 = vxor.u32 %v3620, 2147483648
    %v3696 = vmul.f32 %v3695, 1.442695
    %v3697 = vpow.pop %v3696
    %v3698 = vadd.f32 %v3697, 1.0
    %v3699 = vrcp.pop %v3698
    %v3700 = vmul.f32 1.0, %v3699
    %v3701 = vxor.u32 %v3622, 2147483648
    %v3702 = vmul.f32 %v3701, 1.442695
    %v3703 = vpow.pop %v3702
    %v3704 = vadd.f32 %v3703, 1.0
    %v3705 = vrcp.pop %v3704
    %v3706 = vmul.f32 1.0, %v3705
    %v3707 = vtanh.pop %v3691
    %v3708 = vxor.u32 %v3693, 2147483648
    %v3709 = vmul.f32 %v3708, 1.442695
    %v3710 = vpow.pop %v3709
    %v3711 = vadd.f32 %v3710, 1.0
    %v3712 = vrcp.pop %v3711
    %v3713 = vmul.f32 1.0, %v3712
    %v3714 = vmul.f32 %v3706, %v3216
    %v3715 = vmul.f32 %v3700, %v3707
    %v3716 = vadd.f32 %v3714, %v3715
    %v3717 = vtanh.pop %v3716
    %v3718 = vmul.f32 %v3713, %v3717
    %3719 = vmatprep.subr.mxu0 %v417
    %3720 = vmatpush1.msra.mxu0 %v416
    %3721 = vmatprep.subr.mxu0 %v421
    %3722 = vmatpush1.msra.mxu0 %v420
    %3723 = vmatprep.subr.mxu0 %v425
    %3724 = vmatpush1.msra.mxu0 %v424
    %3725 = vmatprep.subr.mxu0 %v429
    %3726 = vmatpush1.msra.mxu0 %v428
    %3727 = vmatprep.subr.mxu0 %v433
    %3728 = vmatpush1.msra.mxu0 %v432
    %3729 = vmatprep.subr.mxu0 %v437
    %3730 = vmatpush1.msra.mxu0 %v436
    %3731 = vmatprep.subr.mxu0 %v441
    %3732 = vmatpush1.msra.mxu0 %v440
    %3733 = vmatprep.subr.mxu0 %v445
    %3734 = vmatpush1.msra.mxu0 %v444
    %3735 = vmatprep.subr.mxu0 %v449
    %3736 = vmatpush1.msra.mxu0 %v448
    %3737 = vmatprep.subr.mxu0 %v453
    %3738 = vmatpush1.msra.mxu0 %v452
    %3739 = vmatprep.subr.mxu0 %v457
    %3740 = vmatpush1.msra.mxu0 %v456
    %3741 = vmatprep.subr.mxu0 %v461
    %3742 = vmatpush1.msra.mxu0 %v460
    %3743 = vmatprep.subr.mxu0 %v465
    %3744 = vmatpush1.msra.mxu0 %v464
    %3745 = vmatprep.subr.mxu0 %v469
    %3746 = vmatpush1.msra.mxu0 %v468
    %3747 = vmatprep.subr.mxu0 %v473
    %3748 = vmatpush1.msra.mxu0 %v472
    %3749 = vmatprep.subr.mxu0 %v477
    %3750 = vmatpush1.msra.mxu0 %v476
    %3751 = vmatprep.subr.mxu0 %v481
    %3752 = vmatpush1.msra.mxu0 %v480
    %3753 = vmatprep.subr.mxu0 %v485
    %3754 = vmatpush1.msra.mxu0 %v484
    %3755 = vmatprep.subr.mxu0 %v489
    %3756 = vmatpush1.msra.mxu0 %v488
    %3757 = vmatprep.subr.mxu0 %v493
    %3758 = vmatpush1.msra.mxu0 %v492
    %3759 = vmatprep.subr.mxu0 %v497
    %3760 = vmatpush1.msra.mxu0 %v496
    %3761 = vmatprep.subr.mxu0 %v501
    %3762 = vmatpush1.msra.mxu0 %v500
    %3763 = vmatprep.subr.mxu0 %v505
    %3764 = vmatpush1.msra.mxu0 %v504
    %3765 = vmatprep.subr.mxu0 %v509
    %3766 = vmatpush1.msra.mxu0 %v508
    %3767 = vmatprep.subr.mxu0 %v513
    %3768 = vmatpush1.msra.mxu0 %v512
    %3769 = vmatprep.subr.mxu0 %v517
    %3770 = vmatpush1.msra.mxu0 %v516
    %3771 = vmatprep.subr.mxu0 %v521
    %3772 = vmatpush1.msra.mxu0 %v520
    %3773 = vmatprep.subr.mxu0 %v525
    %3774 = vmatpush1.msra.mxu0 %v524
    %3775 = vmatprep.subr.mxu0 %v529
    %3776 = vmatpush1.msra.mxu0 %v528
    %3777 = vmatprep.subr.mxu0 %v533
    %3778 = vmatpush1.msra.mxu0 %v532
    %3779 = vmatprep.subr.mxu0 %v537
    %3780 = vmatpush1.msra.mxu0 %v536
    %3781 = vmatprep.subr.mxu0 %v541
    %3782 = vmatpush1.msra.mxu0 %v540
    %3783 = vmatprep.mubr.f32.mxu0 %v3384
    %3784 = vmatmul.mubr.f32.gmra.mrb[0].mxu0 %v3718
    %v3785 = vpop.f32.mrb[0].mxu0
    %v3786 = vadd.f32 %v550, %v3785
    %v3787 = vpop.f32.mrb[0].mxu0
    %v3788 = vadd.f32 %v554, %v3787
    %3789 = vdwg.mxu0
    %3790 = vmatprep.subr.mxu0 %v419
    %3791 = vmatpush1.msra.mxu0 %v418
    %3792 = vmatprep.subr.mxu0 %v423
    %3793 = vmatpush1.msra.mxu0 %v422
    %3794 = vmatprep.subr.mxu0 %v427
    %3795 = vmatpush1.msra.mxu0 %v426
    %3796 = vmatprep.subr.mxu0 %v431
    %3797 = vmatpush1.msra.mxu0 %v430
    %3798 = vmatprep.subr.mxu0 %v435
    %3799 = vmatpush1.msra.mxu0 %v434
    %3800 = vmatprep.subr.mxu0 %v439
    %3801 = vmatpush1.msra.mxu0 %v438
    %3802 = vmatprep.subr.mxu0 %v443
    %3803 = vmatpush1.msra.mxu0 %v442
    %3804 = vmatprep.subr.mxu0 %v447
    %3805 = vmatpush1.msra.mxu0 %v446
    %3806 = vmatprep.subr.mxu0 %v451
    %3807 = vmatpush1.msra.mxu0 %v450
    %3808 = vmatprep.subr.mxu0 %v455
    %3809 = vmatpush1.msra.mxu0 %v454
    %3810 = vmatprep.subr.mxu0 %v459
    %3811 = vmatpush1.msra.mxu0 %v458
    %3812 = vmatprep.subr.mxu0 %v463
    %3813 = vmatpush1.msra.mxu0 %v462
    %3814 = vmatprep.subr.mxu0 %v467
    %3815 = vmatpush1.msra.mxu0 %v466
    %3816 = vmatprep.subr.mxu0 %v471
    %3817 = vmatpush1.msra.mxu0 %v470
    %3818 = vmatprep.subr.mxu0 %v475
    %3819 = vmatpush1.msra.mxu0 %v474
    %3820 = vmatprep.subr.mxu0 %v479
    %3821 = vmatpush1.msra.mxu0 %v478
    %3822 = vmatprep.subr.mxu0 %v483
    %3823 = vmatpush1.msra.mxu0 %v482
    %3824 = vmatprep.subr.mxu0 %v487
    %3825 = vmatpush1.msra.mxu0 %v486
    %3826 = vmatprep.subr.mxu0 %v491
    %3827 = vmatpush1.msra.mxu0 %v490
    %3828 = vmatprep.subr.mxu0 %v495
    %3829 = vmatpush1.msra.mxu0 %v494
    %3830 = vmatprep.subr.mxu0 %v499
    %3831 = vmatpush1.msra.mxu0 %v498
    %3832 = vmatprep.subr.mxu0 %v503
    %3833 = vmatpush1.msra.mxu0 %v502
    %3834 = vmatprep.subr.mxu0 %v507
    %3835 = vmatpush1.msra.mxu0 %v506
    %3836 = vmatprep.subr.mxu0 %v511
    %3837 = vmatpush1.msra.mxu0 %v510
    %3838 = vmatprep.subr.mxu0 %v515
    %3839 = vmatpush1.msra.mxu0 %v514
    %3840 = vmatprep.subr.mxu0 %v519
    %3841 = vmatpush1.msra.mxu0 %v518
    %3842 = vmatprep.subr.mxu0 %v523
    %3843 = vmatpush1.msra.mxu0 %v522
    %3844 = vmatprep.subr.mxu0 %v527
    %3845 = vmatpush1.msra.mxu0 %v526
    %3846 = vmatprep.subr.mxu0 %v531
    %3847 = vmatpush1.msra.mxu0 %v530
    %3848 = vmatprep.subr.mxu0 %v535
    %3849 = vmatpush1.msra.mxu0 %v534
    %3850 = vmatprep.subr.mxu0 %v539
    %3851 = vmatpush1.msra.mxu0 %v538
    %3852 = vmatprep.subr.mxu0 %v543
    %3853 = vmatpush1.msra.mxu0 %v542
    %3854 = vmatprep.mubr.f32.mxu0 %v3384
    %3855 = vmatmul.mubr.f32.gmra.mrb[0].mxu0 %v3718
    %v3856 = vpop.f32.mrb[0].mxu0
    %v3857 = vadd.f32 %v558, %v3856
    %v3858 = vpop.f32.mrb[0].mxu0
    %v3859 = vadd.f32 %v562, %v3858
    %3860 = vdwg.mxu0
    %v3861 = vxor.u32 %v3786, 2147483648
    %v3862 = vmul.f32 %v3861, 1.442695
    %v3863 = vpow.pop %v3862
    %v3864 = vadd.f32 %v3863, 1.0
    %v3865 = vrcp.pop %v3864
    %v3866 = vmul.f32 1.0, %v3865
    %v3867 = vxor.u32 %v3788, 2147483648
    %v3868 = vmul.f32 %v3867, 1.442695
    %v3869 = vpow.pop %v3868
    %v3870 = vadd.f32 %v3869, 1.0
    %v3871 = vrcp.pop %v3870
    %v3872 = vmul.f32 1.0, %v3871
    %v3873 = vtanh.pop %v3857
    %v3874 = vxor.u32 %v3859, 2147483648
    %v3875 = vmul.f32 %v3874, 1.442695
    %v3876 = vpow.pop %v3875
    %v3877 = vadd.f32 %v3876, 1.0
    %v3878 = vrcp.pop %v3877
    %v3879 = vmul.f32 1.0, %v3878
    %v3880 = vmul.f32 %v3872, %v3382
    %v3881 = vmul.f32 %v3866, %v3873
    %v3882 = vadd.f32 %v3880, %v3881
    %v3883 = vtanh.pop %v3882
    %v3884 = vmul.f32 %v3879, %v3883
    %3885 = vmatprep.subr.mxu0 %v735
    %3886 = vmatpush1.msra.mxu0 %v734
    %3887 = vmatprep.subr.mxu0 %v739
    %3888 = vmatpush1.msra.mxu0 %v738
    %3889 = vmatprep.subr.mxu0 %v743
    %3890 = vmatpush1.msra.mxu0 %v742
    %3891 = vmatprep.subr.mxu0 %v747
    %3892 = vmatpush1.msra.mxu0 %v746
    %3893 = vmatprep.subr.mxu0 %v751
    %3894 = vmatpush1.msra.mxu0 %v750
    %3895 = vmatprep.subr.mxu0 %v755
    %3896 = vmatpush1.msra.mxu0 %v754
    %3897 = vmatprep.subr.mxu0 %v759
    %3898 = vmatpush1.msra.mxu0 %v758
    %3899 = vmatprep.subr.mxu0 %v763
    %3900 = vmatpush1.msra.mxu0 %v762
    %3901 = vmatprep.subr.mxu0 %v767
    %3902 = vmatpush1.msra.mxu0 %v766
    %3903 = vmatprep.subr.mxu0 %v771
    %3904 = vmatpush1.msra.mxu0 %v770
    %3905 = vmatprep.subr.mxu0 %v775
    %3906 = vmatpush1.msra.mxu0 %v774
    %3907 = vmatprep.subr.mxu0 %v779
    %3908 = vmatpush1.msra.mxu0 %v778
    %3909 = vmatprep.subr.mxu0 %v783
    %3910 = vmatpush1.msra.mxu0 %v782
    %3911 = vmatprep.subr.mxu0 %v787
    %3912 = vmatpush1.msra.mxu0 %v786
    %3913 = vmatprep.subr.mxu0 %v791
    %3914 = vmatpush1.msra.mxu0 %v790
    %3915 = vmatprep.subr.mxu0 %v795
    %3916 = vmatpush1.msra.mxu0 %v794
    %3917 = vmatprep.subr.mxu0 %v799
    %3918 = vmatpush1.msra.mxu0 %v798
    %3919 = vmatprep.subr.mxu0 %v803
    %3920 = vmatpush1.msra.mxu0 %v802
    %3921 = vmatprep.subr.mxu0 %v807
    %3922 = vmatpush1.msra.mxu0 %v806
    %3923 = vmatprep.subr.mxu0 %v811
    %3924 = vmatpush1.msra.mxu0 %v810
    %3925 = vmatprep.subr.mxu0 %v815
    %3926 = vmatpush1.msra.mxu0 %v814
    %3927 = vmatprep.subr.mxu0 %v819
    %3928 = vmatpush1.msra.mxu0 %v818
    %3929 = vmatprep.subr.mxu0 %v823
    %3930 = vmatpush1.msra.mxu0 %v822
    %3931 = vmatprep.subr.mxu0 %v827
    %3932 = vmatpush1.msra.mxu0 %v826
    %3933 = vmatprep.subr.mxu0 %v831
    %3934 = vmatpush1.msra.mxu0 %v830
    %3935 = vmatprep.subr.mxu0 %v835
    %3936 = vmatpush1.msra.mxu0 %v834
    %3937 = vmatprep.subr.mxu0 %v839
    %3938 = vmatpush1.msra.mxu0 %v838
    %3939 = vmatprep.subr.mxu0 %v843
    %3940 = vmatpush1.msra.mxu0 %v842
    %3941 = vmatprep.subr.mxu0 %v847
    %3942 = vmatpush1.msra.mxu0 %v846
    %3943 = vmatprep.subr.mxu0 %v851
    %3944 = vmatpush1.msra.mxu0 %v850
    %3945 = vmatprep.subr.mxu0 %v855
    %3946 = vmatpush1.msra.mxu0 %v854
    %3947 = vmatprep.subr.mxu0 %v859
    %3948 = vmatpush1.msra.mxu0 %v858
    %3949 = vmatprep.mubr.f32.mxu0 %v3550
    %3950 = vmatmul.mubr.f32.gmra.mrb[0].mxu0 %v3884
    %v3951 = vpop.f32.mrb[0].mxu0
    %v3952 = vadd.f32 %v868, %v3951
    %v3953 = vpop.f32.mrb[0].mxu0
    %v3954 = vadd.f32 %v872, %v3953
    %3955 = vdwg.mxu0
    %3956 = vmatprep.subr.mxu0 %v737
    %3957 = vmatpush1.msra.mxu0 %v736
    %3958 = vmatprep.subr.mxu0 %v741
    %3959 = vmatpush1.msra.mxu0 %v740
    %3960 = vmatprep.subr.mxu0 %v745
    %3961 = vmatpush1.msra.mxu0 %v744
    %3962 = vmatprep.subr.mxu0 %v749
    %3963 = vmatpush1.msra.mxu0 %v748
    %3964 = vmatprep.subr.mxu0 %v753
    %3965 = vmatpush1.msra.mxu0 %v752
    %3966 = vmatprep.subr.mxu0 %v757
    %3967 = vmatpush1.msra.mxu0 %v756
    %3968 = vmatprep.subr.mxu0 %v761
    %3969 = vmatpush1.msra.mxu0 %v760
    %3970 = vmatprep.subr.mxu0 %v765
    %3971 = vmatpush1.msra.mxu0 %v764
    %3972 = vmatprep.subr.mxu0 %v769
    %3973 = vmatpush1.msra.mxu0 %v768
    %3974 = vmatprep.subr.mxu0 %v773
    %3975 = vmatpush1.msra.mxu0 %v772
    %3976 = vmatprep.subr.mxu0 %v777
    %3977 = vmatpush1.msra.mxu0 %v776
    %3978 = vmatprep.subr.mxu0 %v781
    %3979 = vmatpush1.msra.mxu0 %v780
    %3980 = vmatprep.subr.mxu0 %v785
    %3981 = vmatpush1.msra.mxu0 %v784
    %3982 = vmatprep.subr.mxu0 %v789
    %3983 = vmatpush1.msra.mxu0 %v788
    %3984 = vmatprep.subr.mxu0 %v793
    %3985 = vmatpush1.msra.mxu0 %v792
    %3986 = vmatprep.subr.mxu0 %v797
    %3987 = vmatpush1.msra.mxu0 %v796
    %3988 = vmatprep.subr.mxu0 %v801
    %3989 = vmatpush1.msra.mxu0 %v800
    %3990 = vmatprep.subr.mxu0 %v805
    %3991 = vmatpush1.msra.mxu0 %v804
    %3992 = vmatprep.subr.mxu0 %v809
    %3993 = vmatpush1.msra.mxu0 %v808
    %3994 = vmatprep.subr.mxu0 %v813
    %3995 = vmatpush1.msra.mxu0 %v812
    %3996 = vmatprep.subr.mxu0 %v817
    %3997 = vmatpush1.msra.mxu0 %v816
    %3998 = vmatprep.subr.mxu0 %v821
    %3999 = vmatpush1.msra.mxu0 %v820
    %4000 = vmatprep.subr.mxu0 %v825
    %4001 = vmatpush1.msra.mxu0 %v824
    %4002 = vmatprep.subr.mxu0 %v829
    %4003 = vmatpush1.msra.mxu0 %v828
    %4004 = vmatprep.subr.mxu0 %v833
    %4005 = vmatpush1.msra.mxu0 %v832
    %4006 = vmatprep.subr.mxu0 %v837
    %4007 = vmatpush1.msra.mxu0 %v836
    %4008 = vmatprep.subr.mxu0 %v841
    %4009 = vmatpush1.msra.mxu0 %v840
    %4010 = vmatprep.subr.mxu0 %v845
    %4011 = vmatpush1.msra.mxu0 %v844
    %4012 = vmatprep.subr.mxu0 %v849
    %4013 = vmatpush1.msra.mxu0 %v848
    %4014 = vmatprep.subr.mxu0 %v853
    %4015 = vmatpush1.msra.mxu0 %v852
    %4016 = vmatprep.subr.mxu0 %v857
    %4017 = vmatpush1.msra.mxu0 %v856
    %4018 = vmatprep.subr.mxu0 %v861
    %4019 = vmatpush1.msra.mxu0 %v860
    %4020 = vmatprep.mubr.f32.mxu0 %v3550
    %4021 = vmatmul.mubr.f32.gmra.mrb[0].mxu0 %v3884
    %v4022 = vpop.f32.mrb[0].mxu0
    %v4023 = vadd.f32 %v876, %v4022
    %v4024 = vpop.f32.mrb[0].mxu0
    %v4025 = vadd.f32 %v880, %v4024
    %4026 = vdwg.mxu0
    %v4027 = vxor.u32 %v3952, 2147483648
    %v4028 = vmul.f32 %v4027, 1.442695
    %v4029 = vpow.pop %v4028
    %v4030 = vadd.f32 %v4029, 1.0
    %v4031 = vrcp.pop %v4030
    %v4032 = vmul.f32 1.0, %v4031
    %v4033 = vxor.u32 %v3954, 2147483648
    %v4034 = vmul.f32 %v4033, 1.442695
    %v4035 = vpow.pop %v4034
    %v4036 = vadd.f32 %v4035, 1.0
    %v4037 = vrcp.pop %v4036
    %v4038 = vmul.f32 1.0, %v4037
    %v4039 = vtanh.pop %v4023
    %v4040 = vxor.u32 %v4025, 2147483648
    %v4041 = vmul.f32 %v4040, 1.442695
    %v4042 = vpow.pop %v4041
    %v4043 = vadd.f32 %v4042, 1.0
    %v4044 = vrcp.pop %v4043
    %v4045 = vmul.f32 1.0, %v4044
    %v4046 = vmul.f32 %v4038, %v3548
    %v4047 = vmul.f32 %v4032, %v4039
    %v4048 = vadd.f32 %v4046, %v4047
    %v4049 = vtanh.pop %v4048
    %v4050 = vmul.f32 %v4045, %v4049
    %s4051 = scalar_lea.vmem [#allocation3], 56
    %v4052 = vld [vmem:[%s4051] sm:$0xff]
    %4053 = vmatprep.subr.mxu0 %v100
    %4054 = vmatpush1.msra.mxu0 %v99
    %4055 = vmatprep.subr.mxu0 %v104
    %4056 = vmatpush1.msra.mxu0 %v103
    %4057 = vmatprep.subr.mxu0 %v108
    %4058 = vmatpush1.msra.mxu0 %v107
    %4059 = vmatprep.subr.mxu0 %v112
    %4060 = vmatpush1.msra.mxu0 %v111
    %4061 = vmatprep.subr.mxu0 %v116
    %4062 = vmatpush1.msra.mxu0 %v115
    %4063 = vmatprep.subr.mxu0 %v120
    %4064 = vmatpush1.msra.mxu0 %v119
    %4065 = vmatprep.subr.mxu0 %v124
    %4066 = vmatpush1.msra.mxu0 %v123
    %4067 = vmatprep.subr.mxu0 %v128
    %4068 = vmatpush1.msra.mxu0 %v127
    %4069 = vmatprep.subr.mxu0 %v132
    %4070 = vmatpush1.msra.mxu0 %v131
    %4071 = vmatprep.subr.mxu0 %v136
    %4072 = vmatpush1.msra.mxu0 %v135
    %4073 = vmatprep.subr.mxu0 %v140
    %4074 = vmatpush1.msra.mxu0 %v139
    %4075 = vmatprep.subr.mxu0 %v144
    %4076 = vmatpush1.msra.mxu0 %v143
    %4077 = vmatprep.subr.mxu0 %v148
    %4078 = vmatpush1.msra.mxu0 %v147
    %4079 = vmatprep.subr.mxu0 %v152
    %4080 = vmatpush1.msra.mxu0 %v151
    %4081 = vmatprep.subr.mxu0 %v156
    %4082 = vmatpush1.msra.mxu0 %v155
    %4083 = vmatprep.subr.mxu0 %v160
    %4084 = vmatpush1.msra.mxu0 %v159
    %4085 = vmatprep.subr.mxu0 %v164
    %4086 = vmatpush1.msra.mxu0 %v163
    %4087 = vmatprep.subr.mxu0 %v168
    %4088 = vmatpush1.msra.mxu0 %v167
    %4089 = vmatprep.subr.mxu0 %v172
    %4090 = vmatpush1.msra.mxu0 %v171
    %4091 = vmatprep.subr.mxu0 %v176
    %4092 = vmatpush1.msra.mxu0 %v175
    %4093 = vmatprep.subr.mxu0 %v180
    %4094 = vmatpush1.msra.mxu0 %v179
    %4095 = vmatprep.subr.mxu0 %v184
    %4096 = vmatpush1.msra.mxu0 %v183
    %4097 = vmatprep.subr.mxu0 %v188
    %4098 = vmatpush1.msra.mxu0 %v187
    %4099 = vmatprep.subr.mxu0 %v192
    %4100 = vmatpush1.msra.mxu0 %v191
    %4101 = vmatprep.subr.mxu0 %v196
    %4102 = vmatpush1.msra.mxu0 %v195
    %4103 = vmatprep.subr.mxu0 %v200
    %4104 = vmatpush1.msra.mxu0 %v199
    %4105 = vmatprep.subr.mxu0 %v204
    %4106 = vmatpush1.msra.mxu0 %v203
    %4107 = vmatprep.subr.mxu0 %v208
    %4108 = vmatpush1.msra.mxu0 %v207
    %4109 = vmatprep.subr.mxu0 %v212
    %4110 = vmatpush1.msra.mxu0 %v211
    %4111 = vmatprep.subr.mxu0 %v216
    %4112 = vmatpush1.msra.mxu0 %v215
    %4113 = vmatprep.subr.mxu0 %v220
    %4114 = vmatpush1.msra.mxu0 %v219
    %4115 = vmatprep.subr.mxu0 %v224
    %4116 = vmatpush1.msra.mxu0 %v223
    %4117 = vmatprep.mubr.f32.mxu0 %v3718
    %4118 = vmatmul.mubr.f32.gmra.mrb[0].mxu0 %v4052
    %v4119 = vpop.f32.mrb[0].mxu0
    %v4120 = vadd.f32 %v232, %v4119
    %v4121 = vpop.f32.mrb[0].mxu0
    %v4122 = vadd.f32 %v236, %v4121
    %4123 = vdwg.mxu0
    %4124 = vmatprep.subr.mxu0 %v102
    %4125 = vmatpush1.msra.mxu0 %v101
    %4126 = vmatprep.subr.mxu0 %v106
    %4127 = vmatpush1.msra.mxu0 %v105
    %4128 = vmatprep.subr.mxu0 %v110
    %4129 = vmatpush1.msra.mxu0 %v109
    %4130 = vmatprep.subr.mxu0 %v114
    %4131 = vmatpush1.msra.mxu0 %v113
    %4132 = vmatprep.subr.mxu0 %v118
    %4133 = vmatpush1.msra.mxu0 %v117
    %4134 = vmatprep.subr.mxu0 %v122
    %4135 = vmatpush1.msra.mxu0 %v121
    %4136 = vmatprep.subr.mxu0 %v126
    %4137 = vmatpush1.msra.mxu0 %v125
    %4138 = vmatprep.subr.mxu0 %v130
    %4139 = vmatpush1.msra.mxu0 %v129
    %4140 = vmatprep.subr.mxu0 %v134
    %4141 = vmatpush1.msra.mxu0 %v133
    %4142 = vmatprep.subr.mxu0 %v138
    %4143 = vmatpush1.msra.mxu0 %v137
    %4144 = vmatprep.subr.mxu0 %v142
    %4145 = vmatpush1.msra.mxu0 %v141
    %4146 = vmatprep.subr.mxu0 %v146
    %4147 = vmatpush1.msra.mxu0 %v145
    %4148 = vmatprep.subr.mxu0 %v150
    %4149 = vmatpush1.msra.mxu0 %v149
    %4150 = vmatprep.subr.mxu0 %v154
    %4151 = vmatpush1.msra.mxu0 %v153
    %4152 = vmatprep.subr.mxu0 %v158
    %4153 = vmatpush1.msra.mxu0 %v157
    %4154 = vmatprep.subr.mxu0 %v162
    %4155 = vmatpush1.msra.mxu0 %v161
    %4156 = vmatprep.subr.mxu0 %v166
    %4157 = vmatpush1.msra.mxu0 %v165
    %4158 = vmatprep.subr.mxu0 %v170
    %4159 = vmatpush1.msra.mxu0 %v169
    %4160 = vmatprep.subr.mxu0 %v174
    %4161 = vmatpush1.msra.mxu0 %v173
    %4162 = vmatprep.subr.mxu0 %v178
    %4163 = vmatpush1.msra.mxu0 %v177
    %4164 = vmatprep.subr.mxu0 %v182
    %4165 = vmatpush1.msra.mxu0 %v181
    %4166 = vmatprep.subr.mxu0 %v186
    %4167 = vmatpush1.msra.mxu0 %v185
    %4168 = vmatprep.subr.mxu0 %v190
    %4169 = vmatpush1.msra.mxu0 %v189
    %4170 = vmatprep.subr.mxu0 %v194
    %4171 = vmatpush1.msra.mxu0 %v193
    %4172 = vmatprep.subr.mxu0 %v198
    %4173 = vmatpush1.msra.mxu0 %v197
    %4174 = vmatprep.subr.mxu0 %v202
    %4175 = vmatpush1.msra.mxu0 %v201
    %4176 = vmatprep.subr.mxu0 %v206
    %4177 = vmatpush1.msra.mxu0 %v205
    %4178 = vmatprep.subr.mxu0 %v210
    %4179 = vmatpush1.msra.mxu0 %v209
    %4180 = vmatprep.subr.mxu0 %v214
    %4181 = vmatpush1.msra.mxu0 %v213
    %4182 = vmatprep.subr.mxu0 %v218
    %4183 = vmatpush1.msra.mxu0 %v217
    %4184 = vmatprep.subr.mxu0 %v222
    %4185 = vmatpush1.msra.mxu0 %v221
    %4186 = vmatprep.subr.mxu0 %v226
    %4187 = vmatpush1.msra.mxu0 %v225
    %4188 = vmatprep.mubr.f32.mxu0 %v3718
    %4189 = vmatmul.mubr.f32.gmra.mrb[0].mxu0 %v4052
    %v4190 = vpop.f32.mrb[0].mxu0
    %v4191 = vadd.f32 %v240, %v4190
    %v4192 = vpop.f32.mrb[0].mxu0
    %v4193 = vadd.f32 %v244, %v4192
    %4194 = vdwg.mxu0
    %v4195 = vxor.u32 %v4120, 2147483648
    %v4196 = vmul.f32 %v4195, 1.442695
    %v4197 = vpow.pop %v4196
    %v4198 = vadd.f32 %v4197, 1.0
    %v4199 = vrcp.pop %v4198
    %v4200 = vmul.f32 1.0, %v4199
    %v4201 = vxor.u32 %v4122, 2147483648
    %v4202 = vmul.f32 %v4201, 1.442695
    %v4203 = vpow.pop %v4202
    %v4204 = vadd.f32 %v4203, 1.0
    %v4205 = vrcp.pop %v4204
    %v4206 = vmul.f32 1.0, %v4205
    %v4207 = vtanh.pop %v4191
    %v4208 = vxor.u32 %v4193, 2147483648
    %v4209 = vmul.f32 %v4208, 1.442695
    %v4210 = vpow.pop %v4209
    %v4211 = vadd.f32 %v4210, 1.0
    %v4212 = vrcp.pop %v4211
    %v4213 = vmul.f32 1.0, %v4212
    %v4214 = vmul.f32 %v4206, %v3716
    %v4215 = vmul.f32 %v4200, %v4207
    %v4216 = vadd.f32 %v4214, %v4215
    %v4217 = vtanh.pop %v4216
    %v4218 = vmul.f32 %v4213, %v4217
    %4219 = vmatprep.subr.mxu0 %v417
    %4220 = vmatpush1.msra.mxu0 %v416
    %4221 = vmatprep.subr.mxu0 %v421
    %4222 = vmatpush1.msra.mxu0 %v420
    %4223 = vmatprep.subr.mxu0 %v425
    %4224 = vmatpush1.msra.mxu0 %v424
    %4225 = vmatprep.subr.mxu0 %v429
    %4226 = vmatpush1.msra.mxu0 %v428
    %4227 = vmatprep.subr.mxu0 %v433
    %4228 = vmatpush1.msra.mxu0 %v432
    %4229 = vmatprep.subr.mxu0 %v437
    %4230 = vmatpush1.msra.mxu0 %v436
    %4231 = vmatprep.subr.mxu0 %v441
    %4232 = vmatpush1.msra.mxu0 %v440
    %4233 = vmatprep.subr.mxu0 %v445
    %4234 = vmatpush1.msra.mxu0 %v444
    %4235 = vmatprep.subr.mxu0 %v449
    %4236 = vmatpush1.msra.mxu0 %v448
    %4237 = vmatprep.subr.mxu0 %v453
    %4238 = vmatpush1.msra.mxu0 %v452
    %4239 = vmatprep.subr.mxu0 %v457
    %4240 = vmatpush1.msra.mxu0 %v456
    %4241 = vmatprep.subr.mxu0 %v461
    %4242 = vmatpush1.msra.mxu0 %v460
    %4243 = vmatprep.subr.mxu0 %v465
    %4244 = vmatpush1.msra.mxu0 %v464
    %4245 = vmatprep.subr.mxu0 %v469
    %4246 = vmatpush1.msra.mxu0 %v468
    %4247 = vmatprep.subr.mxu0 %v473
    %4248 = vmatpush1.msra.mxu0 %v472
    %4249 = vmatprep.subr.mxu0 %v477
    %4250 = vmatpush1.msra.mxu0 %v476
    %4251 = vmatprep.subr.mxu0 %v481
    %4252 = vmatpush1.msra.mxu0 %v480
    %4253 = vmatprep.subr.mxu0 %v485
    %4254 = vmatpush1.msra.mxu0 %v484
    %4255 = vmatprep.subr.mxu0 %v489
    %4256 = vmatpush1.msra.mxu0 %v488
    %4257 = vmatprep.subr.mxu0 %v493
    %4258 = vmatpush1.msra.mxu0 %v492
    %4259 = vmatprep.subr.mxu0 %v497
    %4260 = vmatpush1.msra.mxu0 %v496
    %4261 = vmatprep.subr.mxu0 %v501
    %4262 = vmatpush1.msra.mxu0 %v500
    %4263 = vmatprep.subr.mxu0 %v505
    %4264 = vmatpush1.msra.mxu0 %v504
    %4265 = vmatprep.subr.mxu0 %v509
    %4266 = vmatpush1.msra.mxu0 %v508
    %4267 = vmatprep.subr.mxu0 %v513
    %4268 = vmatpush1.msra.mxu0 %v512
    %4269 = vmatprep.subr.mxu0 %v517
    %4270 = vmatpush1.msra.mxu0 %v516
    %4271 = vmatprep.subr.mxu0 %v521
    %4272 = vmatpush1.msra.mxu0 %v520
    %4273 = vmatprep.subr.mxu0 %v525
    %4274 = vmatpush1.msra.mxu0 %v524
    %4275 = vmatprep.subr.mxu0 %v529
    %4276 = vmatpush1.msra.mxu0 %v528
    %4277 = vmatprep.subr.mxu0 %v533
    %4278 = vmatpush1.msra.mxu0 %v532
    %4279 = vmatprep.subr.mxu0 %v537
    %4280 = vmatpush1.msra.mxu0 %v536
    %4281 = vmatprep.subr.mxu0 %v541
    %4282 = vmatpush1.msra.mxu0 %v540
    %4283 = vmatprep.mubr.f32.mxu0 %v3884
    %4284 = vmatmul.mubr.f32.gmra.mrb[0].mxu0 %v4218
    %v4285 = vpop.f32.mrb[0].mxu0
    %v4286 = vadd.f32 %v550, %v4285
    %v4287 = vpop.f32.mrb[0].mxu0
    %v4288 = vadd.f32 %v554, %v4287
    %4289 = vdwg.mxu0
    %4290 = vmatprep.subr.mxu0 %v419
    %4291 = vmatpush1.msra.mxu0 %v418
    %4292 = vmatprep.subr.mxu0 %v423
    %4293 = vmatpush1.msra.mxu0 %v422
    %4294 = vmatprep.subr.mxu0 %v427
    %4295 = vmatpush1.msra.mxu0 %v426
    %4296 = vmatprep.subr.mxu0 %v431
    %4297 = vmatpush1.msra.mxu0 %v430
    %4298 = vmatprep.subr.mxu0 %v435
    %4299 = vmatpush1.msra.mxu0 %v434
    %4300 = vmatprep.subr.mxu0 %v439
    %4301 = vmatpush1.msra.mxu0 %v438
    %4302 = vmatprep.subr.mxu0 %v443
    %4303 = vmatpush1.msra.mxu0 %v442
    %4304 = vmatprep.subr.mxu0 %v447
    %4305 = vmatpush1.msra.mxu0 %v446
    %4306 = vmatprep.subr.mxu0 %v451
    %4307 = vmatpush1.msra.mxu0 %v450
    %4308 = vmatprep.subr.mxu0 %v455
    %4309 = vmatpush1.msra.mxu0 %v454
    %4310 = vmatprep.subr.mxu0 %v459
    %4311 = vmatpush1.msra.mxu0 %v458
    %4312 = vmatprep.subr.mxu0 %v463
    %4313 = vmatpush1.msra.mxu0 %v462
    %4314 = vmatprep.subr.mxu0 %v467
    %4315 = vmatpush1.msra.mxu0 %v466
    %4316 = vmatprep.subr.mxu0 %v471
    %4317 = vmatpush1.msra.mxu0 %v470
    %4318 = vmatprep.subr.mxu0 %v475
    %4319 = vmatpush1.msra.mxu0 %v474
    %4320 = vmatprep.subr.mxu0 %v479
    %4321 = vmatpush1.msra.mxu0 %v478
    %4322 = vmatprep.subr.mxu0 %v483
    %4323 = vmatpush1.msra.mxu0 %v482
    %4324 = vmatprep.subr.mxu0 %v487
    %4325 = vmatpush1.msra.mxu0 %v486
    %4326 = vmatprep.subr.mxu0 %v491
    %4327 = vmatpush1.msra.mxu0 %v490
    %4328 = vmatprep.subr.mxu0 %v495
    %4329 = vmatpush1.msra.mxu0 %v494
    %4330 = vmatprep.subr.mxu0 %v499
    %4331 = vmatpush1.msra.mxu0 %v498
    %4332 = vmatprep.subr.mxu0 %v503
    %4333 = vmatpush1.msra.mxu0 %v502
    %4334 = vmatprep.subr.mxu0 %v507
    %4335 = vmatpush1.msra.mxu0 %v506
    %4336 = vmatprep.subr.mxu0 %v511
    %4337 = vmatpush1.msra.mxu0 %v510
    %4338 = vmatprep.subr.mxu0 %v515
    %4339 = vmatpush1.msra.mxu0 %v514
    %4340 = vmatprep.subr.mxu0 %v519
    %4341 = vmatpush1.msra.mxu0 %v518
    %4342 = vmatprep.subr.mxu0 %v523
    %4343 = vmatpush1.msra.mxu0 %v522
    %4344 = vmatprep.subr.mxu0 %v527
    %4345 = vmatpush1.msra.mxu0 %v526
    %4346 = vmatprep.subr.mxu0 %v531
    %4347 = vmatpush1.msra.mxu0 %v530
    %4348 = vmatprep.subr.mxu0 %v535
    %4349 = vmatpush1.msra.mxu0 %v534
    %4350 = vmatprep.subr.mxu0 %v539
    %4351 = vmatpush1.msra.mxu0 %v538
    %4352 = vmatprep.subr.mxu0 %v543
    %4353 = vmatpush1.msra.mxu0 %v542
    %4354 = vmatprep.mubr.f32.mxu0 %v3884
    %4355 = vmatmul.mubr.f32.gmra.mrb[0].mxu0 %v4218
    %v4356 = vpop.f32.mrb[0].mxu0
    %v4357 = vadd.f32 %v558, %v4356
    %v4358 = vpop.f32.mrb[0].mxu0
    %v4359 = vadd.f32 %v562, %v4358
    %4360 = vdwg.mxu0
    %v4361 = vxor.u32 %v4286, 2147483648
    %v4362 = vmul.f32 %v4361, 1.442695
    %v4363 = vpow.pop %v4362
    %v4364 = vadd.f32 %v4363, 1.0
    %v4365 = vrcp.pop %v4364
    %v4366 = vmul.f32 1.0, %v4365
    %v4367 = vxor.u32 %v4288, 2147483648
    %v4368 = vmul.f32 %v4367, 1.442695
    %v4369 = vpow.pop %v4368
    %v4370 = vadd.f32 %v4369, 1.0
    %v4371 = vrcp.pop %v4370
    %v4372 = vmul.f32 1.0, %v4371
    %v4373 = vtanh.pop %v4357
    %v4374 = vxor.u32 %v4359, 2147483648
    %v4375 = vmul.f32 %v4374, 1.442695
    %v4376 = vpow.pop %v4375
    %v4377 = vadd.f32 %v4376, 1.0
    %v4378 = vrcp.pop %v4377
    %v4379 = vmul.f32 1.0, %v4378
    %v4380 = vmul.f32 %v4372, %v3882
    %v4381 = vmul.f32 %v4366, %v4373
    %v4382 = vadd.f32 %v4380, %v4381
    %v4383 = vtanh.pop %v4382
    %v4384 = vmul.f32 %v4379, %v4383
    %4385 = vmatprep.subr.mxu0 %v735
    %4386 = vmatpush1.msra.mxu0 %v734
    %4387 = vmatprep.subr.mxu0 %v739
    %4388 = vmatpush1.msra.mxu0 %v738
    %4389 = vmatprep.subr.mxu0 %v743
    %4390 = vmatpush1.msra.mxu0 %v742
    %4391 = vmatprep.subr.mxu0 %v747
    %4392 = vmatpush1.msra.mxu0 %v746
    %4393 = vmatprep.subr.mxu0 %v751
    %4394 = vmatpush1.msra.mxu0 %v750
    %4395 = vmatprep.subr.mxu0 %v755
    %4396 = vmatpush1.msra.mxu0 %v754
    %4397 = vmatprep.subr.mxu0 %v759
    %4398 = vmatpush1.msra.mxu0 %v758
    %4399 = vmatprep.subr.mxu0 %v763
    %4400 = vmatpush1.msra.mxu0 %v762
    %4401 = vmatprep.subr.mxu0 %v767
    %4402 = vmatpush1.msra.mxu0 %v766
    %4403 = vmatprep.subr.mxu0 %v771
    %4404 = vmatpush1.msra.mxu0 %v770
    %4405 = vmatprep.subr.mxu0 %v775
    %4406 = vmatpush1.msra.mxu0 %v774
    %4407 = vmatprep.subr.mxu0 %v779
    %4408 = vmatpush1.msra.mxu0 %v778
    %4409 = vmatprep.subr.mxu0 %v783
    %4410 = vmatpush1.msra.mxu0 %v782
    %4411 = vmatprep.subr.mxu0 %v787
    %4412 = vmatpush1.msra.mxu0 %v786
    %4413 = vmatprep.subr.mxu0 %v791
    %4414 = vmatpush1.msra.mxu0 %v790
    %4415 = vmatprep.subr.mxu0 %v795
    %4416 = vmatpush1.msra.mxu0 %v794
    %4417 = vmatprep.subr.mxu0 %v799
    %4418 = vmatpush1.msra.mxu0 %v798
    %4419 = vmatprep.subr.mxu0 %v803
    %4420 = vmatpush1.msra.mxu0 %v802
    %4421 = vmatprep.subr.mxu0 %v807
    %4422 = vmatpush1.msra.mxu0 %v806
    %4423 = vmatprep.subr.mxu0 %v811
    %4424 = vmatpush1.msra.mxu0 %v810
    %4425 = vmatprep.subr.mxu0 %v815
    %4426 = vmatpush1.msra.mxu0 %v814
    %4427 = vmatprep.subr.mxu0 %v819
    %4428 = vmatpush1.msra.mxu0 %v818
    %4429 = vmatprep.subr.mxu0 %v823
    %4430 = vmatpush1.msra.mxu0 %v822
    %4431 = vmatprep.subr.mxu0 %v827
    %4432 = vmatpush1.msra.mxu0 %v826
    %4433 = vmatprep.subr.mxu0 %v831
    %4434 = vmatpush1.msra.mxu0 %v830
    %4435 = vmatprep.subr.mxu0 %v835
    %4436 = vmatpush1.msra.mxu0 %v834
    %4437 = vmatprep.subr.mxu0 %v839
    %4438 = vmatpush1.msra.mxu0 %v838
    %4439 = vmatprep.subr.mxu0 %v843
    %4440 = vmatpush1.msra.mxu0 %v842
    %4441 = vmatprep.subr.mxu0 %v847
    %4442 = vmatpush1.msra.mxu0 %v846
    %4443 = vmatprep.subr.mxu0 %v851
    %4444 = vmatpush1.msra.mxu0 %v850
    %4445 = vmatprep.subr.mxu0 %v855
    %4446 = vmatpush1.msra.mxu0 %v854
    %4447 = vmatprep.subr.mxu0 %v859
    %4448 = vmatpush1.msra.mxu0 %v858
    %4449 = vmatprep.mubr.f32.mxu0 %v4050
    %4450 = vmatmul.mubr.f32.gmra.mrb[0].mxu0 %v4384
    %v4451 = vpop.f32.mrb[0].mxu0
    %v4452 = vadd.f32 %v868, %v4451
    %v4453 = vpop.f32.mrb[0].mxu0
    %v4454 = vadd.f32 %v872, %v4453
    %4455 = vdwg.mxu0
    %4456 = vmatprep.subr.mxu0 %v737
    %4457 = vmatpush1.msra.mxu0 %v736
    %4458 = vmatprep.subr.mxu0 %v741
    %4459 = vmatpush1.msra.mxu0 %v740
    %4460 = vmatprep.subr.mxu0 %v745
    %4461 = vmatpush1.msra.mxu0 %v744
    %4462 = vmatprep.subr.mxu0 %v749
    %4463 = vmatpush1.msra.mxu0 %v748
    %4464 = vmatprep.subr.mxu0 %v753
    %4465 = vmatpush1.msra.mxu0 %v752
    %4466 = vmatprep.subr.mxu0 %v757
    %4467 = vmatpush1.msra.mxu0 %v756
    %4468 = vmatprep.subr.mxu0 %v761
    %4469 = vmatpush1.msra.mxu0 %v760
    %4470 = vmatprep.subr.mxu0 %v765
    %4471 = vmatpush1.msra.mxu0 %v764
    %4472 = vmatprep.subr.mxu0 %v769
    %4473 = vmatpush1.msra.mxu0 %v768
    %4474 = vmatprep.subr.mxu0 %v773
    %4475 = vmatpush1.msra.mxu0 %v772
    %4476 = vmatprep.subr.mxu0 %v777
    %4477 = vmatpush1.msra.mxu0 %v776
    %4478 = vmatprep.subr.mxu0 %v781
    %4479 = vmatpush1.msra.mxu0 %v780
    %4480 = vmatprep.subr.mxu0 %v785
    %4481 = vmatpush1.msra.mxu0 %v784
    %4482 = vmatprep.subr.mxu0 %v789
    %4483 = vmatpush1.msra.mxu0 %v788
    %4484 = vmatprep.subr.mxu0 %v793
    %4485 = vmatpush1.msra.mxu0 %v792
    %4486 = vmatprep.subr.mxu0 %v797
    %4487 = vmatpush1.msra.mxu0 %v796
    %4488 = vmatprep.subr.mxu0 %v801
    %4489 = vmatpush1.msra.mxu0 %v800
    %4490 = vmatprep.subr.mxu0 %v805
    %4491 = vmatpush1.msra.mxu0 %v804
    %4492 = vmatprep.subr.mxu0 %v809
    %4493 = vmatpush1.msra.mxu0 %v808
    %4494 = vmatprep.subr.mxu0 %v813
    %4495 = vmatpush1.msra.mxu0 %v812
    %4496 = vmatprep.subr.mxu0 %v817
    %4497 = vmatpush1.msra.mxu0 %v816
    %4498 = vmatprep.subr.mxu0 %v821
    %4499 = vmatpush1.msra.mxu0 %v820
    %4500 = vmatprep.subr.mxu0 %v825
    %4501 = vmatpush1.msra.mxu0 %v824
    %4502 = vmatprep.subr.mxu0 %v829
    %4503 = vmatpush1.msra.mxu0 %v828
    %4504 = vmatprep.subr.mxu0 %v833
    %4505 = vmatpush1.msra.mxu0 %v832
    %4506 = vmatprep.subr.mxu0 %v837
    %4507 = vmatpush1.msra.mxu0 %v836
    %4508 = vmatprep.subr.mxu0 %v841
    %4509 = vmatpush1.msra.mxu0 %v840
    %4510 = vmatprep.subr.mxu0 %v845
    %4511 = vmatpush1.msra.mxu0 %v844
    %4512 = vmatprep.subr.mxu0 %v849
    %4513 = vmatpush1.msra.mxu0 %v848
    %4514 = vmatprep.subr.mxu0 %v853
    %4515 = vmatpush1.msra.mxu0 %v852
    %4516 = vmatprep.subr.mxu0 %v857
    %4517 = vmatpush1.msra.mxu0 %v856
    %4518 = vmatprep.subr.mxu0 %v861
    %4519 = vmatpush1.msra.mxu0 %v860
    %4520 = vmatprep.mubr.f32.mxu0 %v4050
    %4521 = vmatmul.mubr.f32.gmra.mrb[0].mxu0 %v4384
    %v4522 = vpop.f32.mrb[0].mxu0
    %v4523 = vadd.f32 %v876, %v4522
    %v4524 = vpop.f32.mrb[0].mxu0
    %v4525 = vadd.f32 %v880, %v4524
    %4526 = vdwg.mxu0
    %v4527 = vxor.u32 %v4452, 2147483648
    %v4528 = vmul.f32 %v4527, 1.442695
    %v4529 = vpow.pop %v4528
    %v4530 = vadd.f32 %v4529, 1.0
    %v4531 = vrcp.pop %v4530
    %v4532 = vmul.f32 1.0, %v4531
    %v4533 = vxor.u32 %v4454, 2147483648
    %v4534 = vmul.f32 %v4533, 1.442695
    %v4535 = vpow.pop %v4534
    %v4536 = vadd.f32 %v4535, 1.0
    %v4537 = vrcp.pop %v4536
    %v4538 = vmul.f32 1.0, %v4537
    %v4539 = vtanh.pop %v4523
    %v4540 = vxor.u32 %v4525, 2147483648
    %v4541 = vmul.f32 %v4540, 1.442695
    %v4542 = vpow.pop %v4541
    %v4543 = vadd.f32 %v4542, 1.0
    %v4544 = vrcp.pop %v4543
    %v4545 = vmul.f32 1.0, %v4544
    %v4546 = vmul.f32 %v4538, %v4048
    %v4547 = vmul.f32 %v4532, %v4539
    %v4548 = vadd.f32 %v4546, %v4547
    %v4549 = vtanh.pop %v4548
    %v4550 = vmul.f32 %v4545, %v4549
    %v4551 = vld [vmem:[%s3] sm:$0xff]
    %v4552 = vld [vmem:[%s3 + $0x8] sm:$0xff]
    %v4553 = vld [vmem:[%s3 + $0x10] sm:$0xff]
    %v4554 = vld [vmem:[%s3 + $0x18] sm:$0xff]
    %v4555 = vld [vmem:[%s3 + $0x20] sm:$0xff]
    %v4556 = vld [vmem:[%s3 + $0x28] sm:$0xff]
    %v4557 = vld [vmem:[%s3 + $0x30] sm:$0xff]
    %v4558 = vld [vmem:[%s3 + $0x38] sm:$0xff]
    %v4559 = vld [vmem:[%s3 + $0x40] sm:$0xff]
    %v4560 = vld [vmem:[%s3 + $0x48] sm:$0xff]
    %v4561 = vld [vmem:[%s3 + $0x50] sm:$0xff]
    %v4562 = vld [vmem:[%s3 + $0x58] sm:$0xff]
    %v4563 = vld [vmem:[%s3 + $0x60] sm:$0xff]
    %v4564 = vld [vmem:[%s3 + $0x68] sm:$0xff]
    %v4565 = vld [vmem:[%s3 + $0x70] sm:$0xff]
    %v4566 = vld [vmem:[%s3 + $0x78] sm:$0xff]
    %v4567 = vld [vmem:[#allocation8] sm:$0x1]
    %v4569 = vlaneseq
    %v4570 = vshrl.u32 %v4569, 7
    %v4571 = vsub.s32 0, %v4570
    %v4572 = vrot.slane %v4567, %v4571
    %4574 = vmatprep.subr.mxu0 0.0
    %4575 = vmatpush1.msra.mxu0 %v4551
    %4576 = vmatprep.subr.mxu0 0.0
    %4577 = vmatpush1.msra.mxu0 %v4552
    %4578 = vmatprep.subr.mxu0 0.0
    %4579 = vmatpush1.msra.mxu0 %v4553
    %4580 = vmatprep.subr.mxu0 0.0
    %4581 = vmatpush1.msra.mxu0 %v4554
    %4582 = vmatprep.subr.mxu0 0.0
    %4583 = vmatpush1.msra.mxu0 %v4555
    %4584 = vmatprep.subr.mxu0 0.0
    %4585 = vmatpush1.msra.mxu0 %v4556
    %4586 = vmatprep.subr.mxu0 0.0
    %4587 = vmatpush1.msra.mxu0 %v4557
    %4588 = vmatprep.subr.mxu0 0.0
    %4589 = vmatpush1.msra.mxu0 %v4558
    %4590 = vmatprep.subr.mxu0 0.0
    %4591 = vmatpush1.msra.mxu0 %v4559
    %4592 = vmatprep.subr.mxu0 0.0
    %4593 = vmatpush1.msra.mxu0 %v4560
    %4594 = vmatprep.subr.mxu0 0.0
    %4595 = vmatpush1.msra.mxu0 %v4561
    %4596 = vmatprep.subr.mxu0 0.0
    %4597 = vmatpush1.msra.mxu0 %v4562
    %4598 = vmatprep.subr.mxu0 0.0
    %4599 = vmatpush1.msra.mxu0 %v4563
    %4600 = vmatprep.subr.mxu0 0.0
    %4601 = vmatpush1.msra.mxu0 %v4564
    %4602 = vmatprep.subr.mxu0 0.0
    %4603 = vmatpush1.msra.mxu0 %v4565
    %4604 = vmatprep.subr.mxu0 0.0
    %4605 = vmatpush1.msra.mxu0 %v4566
    %4606 = vmatprep.subr.mxu0 0.0
    %4607 = vmatpush1.msra.mxu0 0.0
    %4608 = vmatprep.subr.mxu0 0.0
    %4609 = vmatpush1.msra.mxu0 0.0
    %4610 = vmatprep.subr.mxu0 0.0
    %4611 = vmatpush1.msra.mxu0 0.0
    %4612 = vmatprep.subr.mxu0 0.0
    %4613 = vmatpush1.msra.mxu0 0.0
    %4614 = vmatprep.subr.mxu0 0.0
    %4615 = vmatpush1.msra.mxu0 0.0
    %4616 = vmatprep.subr.mxu0 0.0
    %4617 = vmatpush1.msra.mxu0 0.0
    %4618 = vmatprep.subr.mxu0 0.0
    %4619 = vmatpush1.msra.mxu0 0.0
    %4620 = vmatprep.subr.mxu0 0.0
    %4621 = vmatpush1.msra.mxu0 0.0
    %4622 = vmatprep.subr.mxu0 0.0
    %4623 = vmatpush1.msra.mxu0 0.0
    %4624 = vmatprep.subr.mxu0 0.0
    %4625 = vmatpush1.msra.mxu0 0.0
    %4626 = vmatprep.subr.mxu0 0.0
    %4627 = vmatpush1.msra.mxu0 0.0
    %4628 = vmatprep.subr.mxu0 0.0
    %4629 = vmatpush1.msra.mxu0 0.0
    %4630 = vmatprep.subr.mxu0 0.0
    %4631 = vmatpush1.msra.mxu0 0.0
    %4632 = vmatprep.subr.mxu0 0.0
    %4633 = vmatpush1.msra.mxu0 0.0
    %4634 = vmatprep.subr.mxu0 0.0
    %4635 = vmatpush1.msra.mxu0 0.0
    %4636 = vmatprep.subr.mxu0 0.0
    %4637 = vmatpush1.msra.mxu0 0.0
    %4638 = vmatprep.mubr.f32.mxu0 0.0
    %4639 = vmatmul.mubr.f32.gmra.mrb[0].mxu0 %v4550
    %v4640 = vpop.f32.mrb[0].mxu0
    %v4641 = vadd.f32 %v4572, %v4640
    %v4642 = vpop.f32.mrb[0].mxu0
    %4643 = vdwg.mxu0
    %v4644 = vmax.f32 %v4641, 0.0
    %v4645 = vld [vmem:[%s5] sm:$0xff]
    %v4646 = vld [vmem:[%s5 + $0x8] sm:$0xff]
    %v4647 = vld [vmem:[%s5 + $0x10] sm:$0xff]
    %v4648 = vld [vmem:[%s5 + $0x18] sm:$0xff]
    %v4649 = vld [vmem:[%s5 + $0x20] sm:$0xff]
    %v4650 = vld [vmem:[%s5 + $0x28] sm:$0xff]
    %v4651 = vld [vmem:[%s5 + $0x30] sm:$0xff]
    %v4652 = vld [vmem:[%s5 + $0x38] sm:$0xff]
    %v4653 = vld [vmem:[#allocation10] sm:$0x1]
    %v4655 = vlaneseq
    %v4656 = vshrl.u32 %v4655, 7
    %v4657 = vsub.s32 0, %v4656
    %v4658 = vrot.slane %v4653, %v4657
    %vm4660 = vcmask 523264
    %v4662 = vsel %vm4660, %v4644, 0
    %4664 = vmatprep.subr.mxu0 0.0
    %4665 = vmatpush1.msra.mxu0 %v4645
    %4666 = vmatprep.subr.mxu0 0.0
    %4667 = vmatpush1.msra.mxu0 %v4646
    %4668 = vmatprep.subr.mxu0 0.0
    %4669 = vmatpush1.msra.mxu0 %v4647
    %4670 = vmatprep.subr.mxu0 0.0
    %4671 = vmatpush1.msra.mxu0 %v4648
    %4672 = vmatprep.subr.mxu0 0.0
    %4673 = vmatpush1.msra.mxu0 %v4649
    %4674 = vmatprep.subr.mxu0 0.0
    %4675 = vmatpush1.msra.mxu0 %v4650
    %4676 = vmatprep.subr.mxu0 0.0
    %4677 = vmatpush1.msra.mxu0 %v4651
    %4678 = vmatprep.subr.mxu0 0.0
    %4679 = vmatpush1.msra.mxu0 %v4652
    %4680 = vmatprep.subr.mxu0 0.0
    %4681 = vmatpush1.msra.mxu0 0.0
    %4682 = vmatprep.subr.mxu0 0.0
    %4683 = vmatpush1.msra.mxu0 0.0
    %4684 = vmatprep.subr.mxu0 0.0
    %4685 = vmatpush1.msra.mxu0 0.0
    %4686 = vmatprep.subr.mxu0 0.0
    %4687 = vmatpush1.msra.mxu0 0.0
    %4688 = vmatprep.subr.mxu0 0.0
    %4689 = vmatpush1.msra.mxu0 0.0
    %4690 = vmatprep.subr.mxu0 0.0
    %4691 = vmatpush1.msra.mxu0 0.0
    %4692 = vmatprep.subr.mxu0 0.0
    %4693 = vmatpush1.msra.mxu0 0.0
    %4694 = vmatprep.subr.mxu0 0.0
    %4695 = vmatpush1.msra.mxu0 0.0
    %4696 = vmatprep.subr.mxu0 0.0
    %4697 = vmatpush1.msra.mxu0 0.0
    %4698 = vmatprep.subr.mxu0 0.0
    %4699 = vmatpush1.msra.mxu0 0.0
    %4700 = vmatprep.subr.mxu0 0.0
    %4701 = vmatpush1.msra.mxu0 0.0
    %4702 = vmatprep.subr.mxu0 0.0
    %4703 = vmatpush1.msra.mxu0 0.0
    %4704 = vmatprep.subr.mxu0 0.0
    %4705 = vmatpush1.msra.mxu0 0.0
    %4706 = vmatprep.subr.mxu0 0.0
    %4707 = vmatpush1.msra.mxu0 0.0
    %4708 = vmatprep.subr.mxu0 0.0
    %4709 = vmatpush1.msra.mxu0 0.0
    %4710 = vmatprep.subr.mxu0 0.0
    %4711 = vmatpush1.msra.mxu0 0.0
    %4712 = vmatprep.subr.mxu0 0.0
    %4713 = vmatpush1.msra.mxu0 0.0
    %4714 = vmatprep.subr.mxu0 0.0
    %4715 = vmatpush1.msra.mxu0 0.0
    %4716 = vmatprep.subr.mxu0 0.0
    %4717 = vmatpush1.msra.mxu0 0.0
    %4718 = vmatprep.subr.mxu0 0.0
    %4719 = vmatpush1.msra.mxu0 0.0
    %4720 = vmatprep.subr.mxu0 0.0
    %4721 = vmatpush1.msra.mxu0 0.0
    %4722 = vmatprep.subr.mxu0 0.0
    %4723 = vmatpush1.msra.mxu0 0.0
    %4724 = vmatprep.subr.mxu0 0.0
    %4725 = vmatpush1.msra.mxu0 0.0
    %4726 = vmatprep.subr.mxu0 0.0
    %4727 = vmatpush1.msra.mxu0 0.0
    %4728 = vmatprep.mubr.f32.mxu0 0.0
    %4729 = vmatmul.mubr.f32.gmra.mrb[0].mxu0 %v4662
    %v4730 = vpop.f32.mrb[0].mxu0
    %v4731 = vadd.f32 %v4658, %v4730
    %v4732 = vpop.f32.mrb[0].mxu0
    %4733 = vdwg.mxu0
    %v4734 = vmax.f32 %v4731, 0.0
    %v4735 = vld [vmem:[%s7] sm:$0xff]
    %v4736 = vld [vmem:[%s7 + $0x8] sm:$0xff]
    %v4737 = vld [vmem:[%s7 + $0x10] sm:$0xff]
    %v4738 = vld [vmem:[%s7 + $0x18] sm:$0xff]
    %v4739 = vld [vmem:[#allocation2] sm:$0x1]
    %v4741 = vlaneseq
    %v4742 = vshrl.u32 %v4741, 7
    %v4743 = vsub.s32 0, %v4742
    %v4744 = vrot.slane %v4739, %v4743
    %vm4746 = vcmask 261120
    %v4748 = vsel %vm4746, %v4734, 0
    %4750 = vmatprep.subr.mxu0 0.0
    %4751 = vmatpush1.msra.mxu0 %v4735
    %4752 = vmatprep.subr.mxu0 0.0
    %4753 = vmatpush1.msra.mxu0 %v4736
    %4754 = vmatprep.subr.mxu0 0.0
    %4755 = vmatpush1.msra.mxu0 %v4737
    %4756 = vmatprep.subr.mxu0 0.0
    %4757 = vmatpush1.msra.mxu0 %v4738
    %4758 = vmatprep.subr.mxu0 0.0
    %4759 = vmatpush1.msra.mxu0 0.0
    %4760 = vmatprep.subr.mxu0 0.0
    %4761 = vmatpush1.msra.mxu0 0.0
    %4762 = vmatprep.subr.mxu0 0.0
    %4763 = vmatpush1.msra.mxu0 0.0
    %4764 = vmatprep.subr.mxu0 0.0
    %4765 = vmatpush1.msra.mxu0 0.0
    %4766 = vmatprep.subr.mxu0 0.0
    %4767 = vmatpush1.msra.mxu0 0.0
    %4768 = vmatprep.subr.mxu0 0.0
    %4769 = vmatpush1.msra.mxu0 0.0
    %4770 = vmatprep.subr.mxu0 0.0
    %4771 = vmatpush1.msra.mxu0 0.0
    %4772 = vmatprep.subr.mxu0 0.0
    %4773 = vmatpush1.msra.mxu0 0.0
    %4774 = vmatprep.subr.mxu0 0.0
    %4775 = vmatpush1.msra.mxu0 0.0
    %4776 = vmatprep.subr.mxu0 0.0
    %4777 = vmatpush1.msra.mxu0 0.0
    %4778 = vmatprep.subr.mxu0 0.0
    %4779 = vmatpush1.msra.mxu0 0.0
    %4780 = vmatprep.subr.mxu0 0.0
    %4781 = vmatpush1.msra.mxu0 0.0
    %4782 = vmatprep.subr.mxu0 0.0
    %4783 = vmatpush1.msra.mxu0 0.0
    %4784 = vmatprep.subr.mxu0 0.0
    %4785 = vmatpush1.msra.mxu0 0.0
    %4786 = vmatprep.subr.mxu0 0.0
    %4787 = vmatpush1.msra.mxu0 0.0
    %4788 = vmatprep.subr.mxu0 0.0
    %4789 = vmatpush1.msra.mxu0 0.0
    %4790 = vmatprep.subr.mxu0 0.0
    %4791 = vmatpush1.msra.mxu0 0.0
    %4792 = vmatprep.subr.mxu0 0.0
    %4793 = vmatpush1.msra.mxu0 0.0
    %4794 = vmatprep.subr.mxu0 0.0
    %4795 = vmatpush1.msra.mxu0 0.0
    %4796 = vmatprep.subr.mxu0 0.0
    %4797 = vmatpush1.msra.mxu0 0.0
    %4798 = vmatprep.subr.mxu0 0.0
    %4799 = vmatpush1.msra.mxu0 0.0
    %4800 = vmatprep.subr.mxu0 0.0
    %4801 = vmatpush1.msra.mxu0 0.0
    %4802 = vmatprep.subr.mxu0 0.0
    %4803 = vmatpush1.msra.mxu0 0.0
    %4804 = vmatprep.subr.mxu0 0.0
    %4805 = vmatpush1.msra.mxu0 0.0
    %4806 = vmatprep.subr.mxu0 0.0
    %4807 = vmatpush1.msra.mxu0 0.0
    %4808 = vmatprep.subr.mxu0 0.0
    %4809 = vmatpush1.msra.mxu0 0.0
    %4810 = vmatprep.subr.mxu0 0.0
    %4811 = vmatpush1.msra.mxu0 0.0
    %4812 = vmatprep.subr.mxu0 0.0
    %4813 = vmatpush1.msra.mxu0 0.0
    %4814 = vmatprep.mubr.f32.mxu0 0.0
    %4815 = vmatmul.mubr.f32.gmra.mrb[0].mxu0 %v4748
    %v4816 = vpop.f32.mrb[0].mxu0
    %v4817 = vadd.f32 %v4744, %v4816
    %v4818 = vpop.f32.mrb[0].mxu0
    %4819 = vdwg.mxu0
    %v4820 = vtanh.pop %v4817
    %vm4821 = vcmask 7168
    %4822 = vst.msk [vmem:[%s9] sm:$0xff] %vm4821, %v4820
    // Predicated region
    $region58: #{tpu_custom_call.1} parent=1 // pred_check
      _
    $region59: #{tpu_custom_call.1} parent=1 // pred_check_branch
      %4824 = sbr.rel (0) target = $region61
    $region60: #{tpu_custom_call.1} parent=1 // pred_region
      _
    $region61: #{tpu_custom_call.1} parent=1 // pred_fallthru
      _
    // Predicated region
    $region62: #{tpu_custom_call.1} parent=1 // pred_check
      _
    $region63: #{tpu_custom_call.1} parent=1 // pred_check_branch
      %4826 = sbr.rel (0) target = $region65
    $region64: #{tpu_custom_call.1} parent=1 // pred_region
      _
    $region65: #{tpu_custom_call.1} parent=1 // pred_fallthru
      _
    %4827 = vsyncpa [#allocation4], 1
    %4828 = vsyncpa [#allocation6], 1
    %4829 = vsyncpa [#allocation9], 1

</llo_original>
